<compile_context>
chip_gen: v7x
topology: tpu7x:2x2x1
jax: 0.10.0
libtpu: 0.0.40
codegen_flags: <defaults>
</compile_context>

<pallas_src>
import jax
import jax.numpy as jnp
from jax import lax
from jax.experimental import pallas as pl
from jax.experimental.pallas import tpu as pltpu


def lstm_classifier_forward(text, params, *, t_chunk=32,
                            matmul_dtype=jnp.float32):
    """text: (B, T) int32 token ids. Returns (B, output_dim) float32 logits."""
    emb_table = params["embedding"]                        # (V, E)
    B, T = text.shape
    E = emb_table.shape[1]
    H = params["whh_f"].shape[0]
    O = params["wfc"].shape[1]
    H4 = 4 * H

    # Batch padded to a multiple of 8 (full f32 sublane tiles; 2Bp is a
    # multiple of 16 for bf16 operands).  Padded rows use token id 0 and are
    # sliced off at the end.
    Bp = ((B + 7) // 8) * 8
    # Sequence chunking: pad T up to a multiple of Tc; padded timesteps are
    # masked out of the recurrence so they never update h/c.
    Tc = max(1, min(t_chunk, T))
    Tp = ((T + Tc - 1) // Tc) * Tc
    G = Tp // Tc
    pad_T = Tp - T

    text_p = text
    if Bp != B or pad_T:
        text_p = jnp.pad(text, ((0, Bp - B), (0, pad_T)))

    # Time-major gather straight from ids (no HBM transpose of activations).
    ids_tm = jnp.transpose(text_p).reshape(Tp * Bp)        # row = t*Bp + b
    x2d = jnp.take(emb_table, ids_tm, axis=0).astype(matmul_dtype)  # (Tp*Bp,E)
    # TODO(synk): dropout is identity (eval mode); training-mode masks not
    # implemented.

    # Host-side gate-column permutation [i|f|g|o] -> [i|f|o|g] so the kernel
    # applies one sigmoid over the first 3H columns and one tanh over the
    # last H columns.
    def perm(w):
        return jnp.concatenate(
            [w[..., :2 * H], w[..., 3 * H:4 * H], w[..., 2 * H:3 * H]],
            axis=-1)

    cast = lambda a: a.astype(matmul_dtype)
    wih_f = cast(perm(params["wih_f"]))
    wih_b = cast(perm(params["wih_b"]))
    whh_f = cast(perm(params["whh_f"]))
    whh_b = cast(perm(params["whh_b"]))
    b_f = perm(params["b_f"]).astype(jnp.float32)
    b_b = perm(params["b_b"]).astype(jnp.float32)
    wfc = cast(params["wfc"])
    bfc = params["bfc"].astype(jnp.float32)

    gin_dtype = jnp.float32
    # TODO(synk): bf16 gin scratch would halve the largest VMEM scratch when
    # matmul_dtype is bf16 (matters most under v7x's 64 MiB VMEM).

    # ------------------------------------------------------------------ kernel
    def kernel(x_f_ref,    # (Tc*Bp, E)   chunk `step` (forward time order)
               x_b_ref,    # (Tc*Bp, E)   chunk G-1-step (reversed in-loop)
               wih_f_ref,  # (E, 4H)
               wih_b_ref,  # (E, 4H)
               b_f_ref,    # (1, 4H)      b_ih + b_hh, forward (permuted)
               b_b_ref,    # (1, 4H)      b_ih + b_hh, backward (permuted)
               whh_f_ref,  # (H, 4H)
               whh_b_ref,  # (H, 4H)
               wfc_ref,    # (2H, O)
               bfc_ref,    # (1, O)
               out_ref,    # (Bp, O)
               gin_f_ref,  # VMEM (2, Tc*Bp, 4H)  double-buffered fwd pre-acts
               gin_b_ref,  # VMEM (2, Tc*Bp, 4H)  double-buffered bwd pre-acts
               h_ref,      # VMEM (2Bp, H) f32    [h_fwd; h_bwd], persistent
               c_ref):     # VMEM (2Bp, H) f32    [c_fwd; c_bwd], persistent
        step = pl.program_id(0)

        def project(slot):
            # Hoisted input projection for this chunk (off the serial path;
            # one MXU matmul per direction per chunk).
            gin_f_ref[slot] = (
                jnp.dot(x_f_ref[...], wih_f_ref[...],
                        preferred_element_type=jnp.float32)
                + b_f_ref[...]).astype(gin_dtype)
            gin_b_ref[slot] = (
                jnp.dot(x_b_ref[...], wih_b_ref[...],
                        preferred_element_type=jnp.float32)
                + b_b_ref[...]).astype(gin_dtype)

        def recur(j):
            # Recurrence over chunk j (projections live in gin slot j & 1).
            rslot = j & 1
            whh_f_m = whh_f_ref[...]
            whh_b_m = whh_b_ref[...]
            rdt = whh_f_m.dtype
            base_f = j * Tc                 # global fwd time of local t=0
            base_b = (G - 1 - j) * Tc       # global time base of bwd chunk

            def cell(t, carry):
                h_f, c_f, h_b, c_b = carry                      # (Bp, H) f32
                # Direction-specific recurrent dots (no stacked 8H dot, no
                # mask/select, no per-step concatenate).
                rec_f = jnp.dot(h_f.astype(rdt), whh_f_m,
                                preferred_element_type=jnp.float32)
                rec_b = jnp.dot(h_b.astype(rdt), whh_b_m,
                                preferred_element_type=jnp.float32)
                sf = pl.multiple_of(t * Bp, Bp)
                sb = pl.multiple_of((Tc - 1 - t) * Bp, Bp)
                g_f = gin_f_ref[rslot, pl.ds(sf, Bp), :].astype(
                    jnp.float32) + rec_f
                g_b = gin_b_ref[rslot, pl.ds(sb, Bp), :].astype(
                    jnp.float32) + rec_b

                def update(g, c_prev):
                    # Permuted gate order [i|f|o|g]: one wide sigmoid + one
                    # tanh per direction per step.
                    sig = jax.nn.sigmoid(g[:, :3 * H])
                    g_g = jnp.tanh(g[:, 3 * H:])
                    i_g = sig[:, 0 * H:1 * H]
                    f_g = sig[:, 1 * H:2 * H]
                    o_g = sig[:, 2 * H:3 * H]
                    c_new = f_g * c_prev + i_g * g_g
                    return o_g * jnp.tanh(c_new), c_new

                h_f_n, c_f_n = update(g_f, c_f)
                h_b_n, c_b_n = update(g_b, c_b)
                if pad_T:   # static: only emitted when T was padded
                    v_f = (base_f + t) < T
                    v_b = (base_b + (Tc - 1 - t)) < T
                    h_f_n = jnp.where(v_f, h_f_n, h_f)
                    c_f_n = jnp.where(v_f, c_f_n, c_f)
                    h_b_n = jnp.where(v_b, h_b_n, h_b)
                    c_b_n = jnp.where(v_b, c_b_n, c_b)
                return h_f_n, c_f_n, h_b_n, c_b_n

            init = (h_ref[:Bp, :], c_ref[:Bp, :],
                    h_ref[Bp:, :], c_ref[Bp:, :])
            h_f, c_f, h_b, c_b = lax.fori_loop(0, Tc, cell, init, unroll=True)
            h_ref[:Bp, :] = h_f
            c_ref[:Bp, :] = c_f
            h_ref[Bp:, :] = h_b
            c_ref[Bp:, :] = c_b
            return h_f, h_b

        # Prologue: zero carries, project chunk 0 (nothing to recur over yet).
        @pl.when(step == 0)
        def _prologue():
            h_ref[...] = jnp.zeros_like(h_ref)
            c_ref[...] = jnp.zeros_like(c_ref)
            project(0)

        # Steady state: projection of chunk `step` and recurrence over chunk
        # `step-1` live in the SAME region so the scheduler can hide the
        # projection MXU work under the recurrence's EUP/VPU chain.
        @pl.when(jnp.logical_and(step > 0, step < G))
        def _steady():
            project(step & 1)
            recur(step - 1)

        # Epilogue: last recurrence (static chunk index) + final Linear.
        @pl.when(step == G)
        def _epilogue():
            h_f, h_b = recur(G - 1)
            hidden = jnp.concatenate([h_f, h_b], axis=1)   # (Bp, 2H)
            out_ref[...] = (
                jnp.dot(hidden.astype(wfc_ref.dtype), wfc_ref[...],
                        preferred_element_type=jnp.float32)
                + bfc_ref[...]).astype(out_ref.dtype)

    # -------------------------------------------------------------- vmem plan
    itm = jnp.dtype(matmul_dtype).itemsize
    gin_itm = jnp.dtype(gin_dtype).itemsize
    resident = (
        2 * 2 * Tc * Bp * E * itm                           # 2 x streams x 2 bufs
        + 2 * (2 * E * H4 + 2 * H * H4 + 2 * H * O) * itm   # weights (2 bufs)
        + 2 * (2 * H4 + O) * 4                              # biases (f32)
        + 2 * Bp * O * 4                                    # output block
        + 2 * 2 * Tc * Bp * H4 * gin_itm                    # gin double buffers
        + 2 * 2 * Bp * H * 4)                               # h / c carries
    vmem_limit = int(max(resident + (2 << 20), 16 << 20))
    cap = 56 << 20   # conservative default: fits v7x's 64 MiB per-core VMEM
    try:
        cap = max(cap, int(pltpu.get_tpu_info().vmem_capacity_bytes) - (8 << 20))
    except Exception:
        pass
    vmem_limit = int(min(vmem_limit, max(cap, resident + (1 << 20))))

    # -------------------------------------------------------------- grid spec
    # Grid has G+1 steps (1-step skew between projection and recurrence); the
    # x index maps are clamped so the epilogue step fetches no new chunk.
    grid_spec = pltpu.PrefetchScalarGridSpec(
        num_scalar_prefetch=0,
        grid=(G + 1,),
        in_specs=[
            pl.BlockSpec((Tc * Bp, E),
                         lambda i: (jnp.minimum(i, G - 1), 0)),          # x fwd
            pl.BlockSpec((Tc * Bp, E),
                         lambda i: (G - 1 - jnp.minimum(i, G - 1), 0)),  # x bwd
            pl.BlockSpec((E, H4), lambda i: (0, 0)),
            pl.BlockSpec((E, H4), lambda i: (0, 0)),
            pl.BlockSpec((1, H4), lambda i: (0, 0)),
            pl.BlockSpec((1, H4), lambda i: (0, 0)),
            pl.BlockSpec((H, H4), lambda i: (0, 0)),
            pl.BlockSpec((H, H4), lambda i: (0, 0)),
            pl.BlockSpec((2 * H, O), lambda i: (0, 0)),
            pl.BlockSpec((1, O), lambda i: (0, 0)),
        ],
        out_specs=pl.BlockSpec((Bp, O), lambda i: (0, 0)),
        scratch_shapes=[
            pltpu.VMEM((2, Tc * Bp, H4), gin_dtype),   # gin forward (2 slots)
            pltpu.VMEM((2, Tc * Bp, H4), gin_dtype),   # gin backward (2 slots)
            pltpu.VMEM((2 * Bp, H), jnp.float32),      # stacked h carry
            pltpu.VMEM((2 * Bp, H), jnp.float32),      # stacked c carry
        ],
    )

    out = pl.pallas_call(
        kernel,
        out_shape=jax.ShapeDtypeStruct((Bp, O), jnp.float32),
        grid_spec=grid_spec,
        compiler_params=pltpu.CompilerParams(
            dimension_semantics=("arbitrary",),
            vmem_limit_bytes=vmem_limit,
        ),
    )(x2d, x2d, wih_f, wih_b, b_f, b_b, whh_f, whh_b, wfc, bfc)
    return out[:B]


def init_params(key, vocab_size, embedding_dim, hidden_dim, output_dim):
    """Deterministic parameter init matching the PyTorch module's shapes."""
    ks = jax.random.split(key, 12)
    H, E, O = hidden_dim, embedding_dim, output_dim
    s = 1.0 / jnp.sqrt(jnp.float32(H))

    def u(k, shape):
        return jax.random.uniform(k, shape, jnp.float32, -s, s)

    return {
        "embedding": jax.random.normal(ks[0], (vocab_size, E), jnp.float32),
        # nn.LSTM stores weight_ih as (4H, E) and weight_hh as (4H, H);
        # kept pre-transposed here for row-major x @ W, PyTorch gate order.
        "wih_f": u(ks[1], (E, 4 * H)),
        "whh_f": u(ks[2], (H, 4 * H)),
        "b_f":   u(ks[3], (1, 4 * H)) + u(ks[4], (1, 4 * H)),   # b_ih + b_hh
        "wih_b": u(ks[5], (E, 4 * H)),
        "whh_b": u(ks[6], (H, 4 * H)),
        "b_b":   u(ks[7], (1, 4 * H)) + u(ks[8], (1, 4 * H)),   # b_ih + b_hh
        "wfc":   u(ks[9], (2 * H, O)),
        "bfc":   u(ks[10], (1, O)),
    }


def reference_forward(text, params):
    """Pure-JAX f32 reference with identical math, for correctness checking."""
    emb = jnp.take(params["embedding"], text, axis=0)      # (B, T, E)
    B, T, _ = emb.shape
    H = params["whh_f"].shape[0]

    def cell(x_t, h, c, wih, whh, b):
        g = x_t @ wih + h @ whh + b
        i = jax.nn.sigmoid(g[:, 0 * H:1 * H])
        f = jax.nn.sigmoid(g[:, 1 * H:2 * H])
        gg = jnp.tanh(g[:, 2 * H:3 * H])
        o = jax.nn.sigmoid(g[:, 3 * H:4 * H])
        c = f * c + i * gg
        return o * jnp.tanh(c), c

    h_f = c_f = h_b = c_b = jnp.zeros((B, H), jnp.float32)
    for t in range(T):
        h_f, c_f = cell(emb[:, t], h_f, c_f,
                        params["wih_f"], params["whh_f"], params["b_f"])
        h_b, c_b = cell(emb[:, T - 1 - t], h_b, c_b,
                        params["wih_b"], params["whh_b"], params["b_b"])
    hidden = jnp.concatenate([h_f, h_b], axis=1)
    return hidden @ params["wfc"] + params["bfc"]


if __name__ == "__main__":
    # Config consistent with the module's constructor:
    # n_layers=1, bidirectional=True, dropout -> identity (eval mode).
    vocab_size, embedding_dim, hidden_dim, output_dim = 50, 16, 32, 4
    batch, seq_len = 2, 8

    key = jax.random.PRNGKey(0)
    k_param, k_text = jax.random.split(key)
    params = init_params(k_param, vocab_size, embedding_dim, hidden_dim,
                         output_dim)
    text = jax.random.randint(k_text, (batch, seq_len), 0, vocab_size,
                              dtype=jnp.int32)

    ref = reference_forward(text, params)

    # f32 matmuls, T divisible by the chunk: tight check.
    logits = jax.block_until_ready(
        lstm_classifier_forward(text, params, t_chunk=4,
                                matmul_dtype=jnp.float32))
    assert logits.shape == (batch, output_dim)
    assert jnp.allclose(logits, ref, atol=1e-4, rtol=1e-4), "f32 mismatch"

    # T NOT divisible by the chunk (Tc=5 -> Tp=10): exercises the padded-
    # timestep masking path.
    logits_pad = jax.block_until_ready(
        lstm_classifier_forward(text, params, t_chunk=5,
                                matmul_dtype=jnp.float32))
    assert jnp.allclose(logits_pad, ref, atol=1e-4, rtol=1e-4), "pad mismatch"

    # bf16 matmul operands (f32 accumulation / f32 cell state): loose check.
    logits_bf16 = jax.block_until_ready(
        lstm_classifier_forward(text, params, t_chunk=4,
                                matmul_dtype=jnp.bfloat16))
    assert jnp.allclose(logits_bf16, ref, atol=1e-1, rtol=1e-1), "bf16 mismatch"

    print("KERNEL_OK")
</pallas_src>

<mosaic_0001>
module attributes {stable_mosaic.version = 11 : i64} {
  func.func @kernel(%arg0: i32, %arg1: memref<32x16xf32, #tpu.memory_space<vmem>>, %arg2: memref<32x16xf32, #tpu.memory_space<vmem>>, %arg3: memref<16x128xf32, #tpu.memory_space<vmem>>, %arg4: memref<16x128xf32, #tpu.memory_space<vmem>>, %arg5: memref<1x128xf32, #tpu.memory_space<vmem>>, %arg6: memref<1x128xf32, #tpu.memory_space<vmem>>, %arg7: memref<32x128xf32, #tpu.memory_space<vmem>>, %arg8: memref<32x128xf32, #tpu.memory_space<vmem>>, %arg9: memref<64x4xf32, #tpu.memory_space<vmem>>, %arg10: memref<1x4xf32, #tpu.memory_space<vmem>>, %arg11: memref<8x4xf32, #tpu.memory_space<vmem>>, %arg12: memref<2x32x128xf32, #tpu.memory_space<vmem>>, %arg13: memref<2x32x128xf32, #tpu.memory_space<vmem>>, %arg14: memref<16x32xf32, #tpu.memory_space<vmem>>, %arg15: memref<16x32xf32, #tpu.memory_space<vmem>>) attributes {dimension_semantics = [#tpu.dimension_semantics<arbitrary>], iteration_bounds = array<i64: 3>, scalar_prefetch = 0 : i64, scratch_operands = 4 : i64, tpu.core_type = #tpu.core_type<tc>, window_params = [{transform_indices = @transform_0, window_bounds = array<i64: 32, 16>}, {transform_indices = @transform_1, window_bounds = array<i64: 32, 16>}, {pipeline_mode = #tpu.pipeline_mode<synchronous>, transform_indices = @transform_2, window_bounds = array<i64: 16, 128>}, {pipeline_mode = #tpu.pipeline_mode<synchronous>, transform_indices = @transform_3, window_bounds = array<i64: 16, 128>}, {pipeline_mode = #tpu.pipeline_mode<synchronous>, transform_indices = @transform_4, window_bounds = array<i64: 1, 128>}, {pipeline_mode = #tpu.pipeline_mode<synchronous>, transform_indices = @transform_5, window_bounds = array<i64: 1, 128>}, {pipeline_mode = #tpu.pipeline_mode<synchronous>, transform_indices = @transform_6, window_bounds = array<i64: 32, 128>}, {pipeline_mode = #tpu.pipeline_mode<synchronous>, transform_indices = @transform_7, window_bounds = array<i64: 32, 128>}, {pipeline_mode = #tpu.pipeline_mode<synchronous>, transform_indices = @transform_8, window_bounds = array<i64: 64, 4>}, {pipeline_mode = #tpu.pipeline_mode<synchronous>, transform_indices = @transform_9, window_bounds = array<i64: 1, 4>}, {pipeline_mode = #tpu.pipeline_mode<synchronous>, transform_indices = @transform_10, window_bounds = array<i64: 8, 4>}]} {
    %c0_i32 = arith.constant 0 : i32
    %0 = arith.cmpi eq, %arg0, %c0_i32 : i32
    %1 = arith.extui %0 : i1 to i32
    %c0_i32_0 = arith.constant 0 : i32
    %2 = arith.cmpi ne, %1, %c0_i32_0 : i32
    scf.if %2 {
      %cst = arith.constant 0.000000e+00 : f32
      %11 = vector.broadcast %cst : f32 to vector<16x32xf32>
      %c0 = arith.constant 0 : index
      %c0_5 = arith.constant 0 : index
      %12 = vector.load %arg14[%c0, %c0_5] : memref<16x32xf32, #tpu.memory_space<vmem>>, vector<16x32xf32>
      tpu.vector_store %arg14[%c0, %c0_5], %11 {strides = array<i32>} : memref<16x32xf32, #tpu.memory_space<vmem>>, vector<16x32xf32>,
      %cst_6 = arith.constant 0.000000e+00 : f32
      %13 = vector.broadcast %cst_6 : f32 to vector<16x32xf32>
      %c0_7 = arith.constant 0 : index
      %c0_8 = arith.constant 0 : index
      %14 = vector.load %arg15[%c0_7, %c0_8] : memref<16x32xf32, #tpu.memory_space<vmem>>, vector<16x32xf32>
      tpu.vector_store %arg15[%c0_7, %c0_8], %13 {strides = array<i32>} : memref<16x32xf32, #tpu.memory_space<vmem>>, vector<16x32xf32>,
      %c0_9 = arith.constant 0 : index
      %c0_10 = arith.constant 0 : index
      %15 = vector.load %arg1[%c0_9, %c0_10] : memref<32x16xf32, #tpu.memory_space<vmem>>, vector<32x16xf32>
      %c0_11 = arith.constant 0 : index
      %c0_12 = arith.constant 0 : index
      %16 = vector.load %arg3[%c0_11, %c0_12] : memref<16x128xf32, #tpu.memory_space<vmem>>, vector<16x128xf32>
      %cst_13 = arith.constant dense<0.000000e+00> : vector<32x128xf32>
      %17 = tpu.matmul %15, %16, %cst_13 {dimension_numbers = #tpu.dot_dimension_numbers<[1], [0], [0], [1], [0, 0, 1, 1], [], []>} : vector<32x16xf32>, vector<16x128xf32>, vector<32x128xf32> -> vector<32x128xf32>
      %c0_14 = arith.constant 0 : index
      %c0_15 = arith.constant 0 : index
      %18 = vector.load %arg5[%c0_14, %c0_15] : memref<1x128xf32, #tpu.memory_space<vmem>>, vector<1x128xf32>
      %19 = vector.broadcast %18 : vector<1x128xf32> to vector<32x128xf32>
      %20 = arith.addf %17, %19 : vector<32x128xf32>
      %c0_16 = arith.constant 0 : index
      %c0_17 = arith.constant 0 : index
      %c0_18 = arith.constant 0 : index
      %21 = vector.load %arg12[%c0_16, %c0_17, %c0_18] : memref<2x32x128xf32, #tpu.memory_space<vmem>>, vector<1x32x128xf32>
      %22 = vector.shape_cast %21 : vector<1x32x128xf32> to vector<32x128xf32>
      %23 = vector.shape_cast %20 : vector<32x128xf32> to vector<1x32x128xf32>
      tpu.vector_store %arg12[%c0_16, %c0_17, %c0_18], %23 {strides = array<i32>} : memref<2x32x128xf32, #tpu.memory_space<vmem>>, vector<1x32x128xf32>,
      %c0_19 = arith.constant 0 : index
      %c0_20 = arith.constant 0 : index
      %24 = vector.load %arg2[%c0_19, %c0_20] : memref<32x16xf32, #tpu.memory_space<vmem>>, vector<32x16xf32>
      %c0_21 = arith.constant 0 : index
      %c0_22 = arith.constant 0 : index
      %25 = vector.load %arg4[%c0_21, %c0_22] : memref<16x128xf32, #tpu.memory_space<vmem>>, vector<16x128xf32>
      %cst_23 = arith.constant dense<0.000000e+00> : vector<32x128xf32>
      %26 = tpu.matmul %24, %25, %cst_23 {dimension_numbers = #tpu.dot_dimension_numbers<[1], [0], [0], [1], [0, 0, 1, 1], [], []>} : vector<32x16xf32>, vector<16x128xf32>, vector<32x128xf32> -> vector<32x128xf32>
      %c0_24 = arith.constant 0 : index
      %c0_25 = arith.constant 0 : index
      %27 = vector.load %arg6[%c0_24, %c0_25] : memref<1x128xf32, #tpu.memory_space<vmem>>, vector<1x128xf32>
      %28 = vector.broadcast %27 : vector<1x128xf32> to vector<32x128xf32>
      %29 = arith.addf %26, %28 : vector<32x128xf32>
      %c0_26 = arith.constant 0 : index
      %c0_27 = arith.constant 0 : index
      %c0_28 = arith.constant 0 : index
      %30 = vector.load %arg13[%c0_26, %c0_27, %c0_28] : memref<2x32x128xf32, #tpu.memory_space<vmem>>, vector<1x32x128xf32>
      %31 = vector.shape_cast %30 : vector<1x32x128xf32> to vector<32x128xf32>
      %32 = vector.shape_cast %29 : vector<32x128xf32> to vector<1x32x128xf32>
      tpu.vector_store %arg13[%c0_26, %c0_27, %c0_28], %32 {strides = array<i32>} : memref<2x32x128xf32, #tpu.memory_space<vmem>>, vector<1x32x128xf32>,
    } else {
    }
    %c0_i32_1 = arith.constant 0 : i32
    %3 = arith.cmpi sgt, %arg0, %c0_i32_1 : i32
    %c2_i32 = arith.constant 2 : i32
    %4 = arith.cmpi slt, %arg0, %c2_i32 : i32
    %5 = arith.andi %3, %4 : i1
    %6 = arith.extui %5 : i1 to i32
    %c0_i32_2 = arith.constant 0 : i32
    %7 = arith.cmpi ne, %6, %c0_i32_2 : i32
    scf.if %7 {
      %c1_i32 = arith.constant 1 : i32
      %11 = arith.andi %arg0, %c1_i32 : i32
      %c0 = arith.constant 0 : index
      %c0_5 = arith.constant 0 : index
      %12 = vector.load %arg1[%c0, %c0_5] : memref<32x16xf32, #tpu.memory_space<vmem>>, vector<32x16xf32>
      %c0_6 = arith.constant 0 : index
      %c0_7 = arith.constant 0 : index
      %13 = vector.load %arg3[%c0_6, %c0_7] : memref<16x128xf32, #tpu.memory_space<vmem>>, vector<16x128xf32>
      %cst = arith.constant dense<0.000000e+00> : vector<32x128xf32>
      %14 = tpu.matmul %12, %13, %cst {dimension_numbers = #tpu.dot_dimension_numbers<[1], [0], [0], [1], [0, 0, 1, 1], [], []>} : vector<32x16xf32>, vector<16x128xf32>, vector<32x128xf32> -> vector<32x128xf32>
      %c0_8 = arith.constant 0 : index
      %c0_9 = arith.constant 0 : index
      %15 = vector.load %arg5[%c0_8, %c0_9] : memref<1x128xf32, #tpu.memory_space<vmem>>, vector<1x128xf32>
      %16 = vector.broadcast %15 : vector<1x128xf32> to vector<32x128xf32>
      %17 = arith.addf %14, %16 : vector<32x128xf32>
      %18 = arith.index_cast %11 : i32 to index
      %c0_10 = arith.constant 0 : index
      %c0_11 = arith.constant 0 : index
      %19 = vector.load %arg12[%18, %c0_10, %c0_11] : memref<2x32x128xf32, #tpu.memory_space<vmem>>, vector<1x32x128xf32>
      %20 = vector.shape_cast %19 : vector<1x32x128xf32> to vector<32x128xf32>
      %21 = vector.shape_cast %17 : vector<32x128xf32> to vector<1x32x128xf32>
      tpu.vector_store %arg12[%18, %c0_10, %c0_11], %21 {strides = array<i32>} : memref<2x32x128xf32, #tpu.memory_space<vmem>>, vector<1x32x128xf32>,
      %c0_12 = arith.constant 0 : index
      %c0_13 = arith.constant 0 : index
      %22 = vector.load %arg2[%c0_12, %c0_13] : memref<32x16xf32, #tpu.memory_space<vmem>>, vector<32x16xf32>
      %c0_14 = arith.constant 0 : index
      %c0_15 = arith.constant 0 : index
      %23 = vector.load %arg4[%c0_14, %c0_15] : memref<16x128xf32, #tpu.memory_space<vmem>>, vector<16x128xf32>
      %cst_16 = arith.constant dense<0.000000e+00> : vector<32x128xf32>
      %24 = tpu.matmul %22, %23, %cst_16 {dimension_numbers = #tpu.dot_dimension_numbers<[1], [0], [0], [1], [0, 0, 1, 1], [], []>} : vector<32x16xf32>, vector<16x128xf32>, vector<32x128xf32> -> vector<32x128xf32>
      %c0_17 = arith.constant 0 : index
      %c0_18 = arith.constant 0 : index
      %25 = vector.load %arg6[%c0_17, %c0_18] : memref<1x128xf32, #tpu.memory_space<vmem>>, vector<1x128xf32>
      %26 = vector.broadcast %25 : vector<1x128xf32> to vector<32x128xf32>
      %27 = arith.addf %24, %26 : vector<32x128xf32>
      %28 = arith.index_cast %11 : i32 to index
      %c0_19 = arith.constant 0 : index
      %c0_20 = arith.constant 0 : index
      %29 = vector.load %arg13[%28, %c0_19, %c0_20] : memref<2x32x128xf32, #tpu.memory_space<vmem>>, vector<1x32x128xf32>
      %30 = vector.shape_cast %29 : vector<1x32x128xf32> to vector<32x128xf32>
      %31 = vector.shape_cast %27 : vector<32x128xf32> to vector<1x32x128xf32>
      tpu.vector_store %arg13[%28, %c0_19, %c0_20], %31 {strides = array<i32>} : memref<2x32x128xf32, #tpu.memory_space<vmem>>, vector<1x32x128xf32>,
      %c1_i32_21 = arith.constant 1 : i32
      %32 = arith.subi %arg0, %c1_i32_21 : i32
      %c1_i32_22 = arith.constant 1 : i32
      %33 = arith.andi %32, %c1_i32_22 : i32
      %c0_23 = arith.constant 0 : index
      %c0_24 = arith.constant 0 : index
      %34 = vector.load %arg7[%c0_23, %c0_24] : memref<32x128xf32, #tpu.memory_space<vmem>>, vector<32x128xf32>
      %c0_25 = arith.constant 0 : index
      %c0_26 = arith.constant 0 : index
      %35 = vector.load %arg8[%c0_25, %c0_26] : memref<32x128xf32, #tpu.memory_space<vmem>>, vector<32x128xf32>
      %c0_27 = arith.constant 0 : index
      %c0_28 = arith.constant 0 : index
      %36 = vector.load %arg14[%c0_27, %c0_28] : memref<16x32xf32, #tpu.memory_space<vmem>>, vector<8x32xf32>
      %c0_29 = arith.constant 0 : index
      %c0_30 = arith.constant 0 : index
      %37 = vector.load %arg15[%c0_29, %c0_30] : memref<16x32xf32, #tpu.memory_space<vmem>>, vector<8x32xf32>
      %c8 = arith.constant 8 : index
      %c0_31 = arith.constant 0 : index
      %38 = vector.load %arg14[%c8, %c0_31] : memref<16x32xf32, #tpu.memory_space<vmem>>, vector<8x32xf32>
      %c8_32 = arith.constant 8 : index
      %c0_33 = arith.constant 0 : index
      %39 = vector.load %arg15[%c8_32, %c0_33] : memref<16x32xf32, #tpu.memory_space<vmem>>, vector<8x32xf32>
      %c0_i32_34 = arith.constant 0 : i32
      %cst_35 = arith.constant dense<0.000000e+00> : vector<8x128xf32>
      %40 = tpu.matmul %36, %34, %cst_35 {dimension_numbers = #tpu.dot_dimension_numbers<[1], [0], [0], [1], [0, 0, 1, 1], [], []>} : vector<8x32xf32>, vector<32x128xf32>, vector<8x128xf32> -> vector<8x128xf32>
      %cst_36 = arith.constant dense<0.000000e+00> : vector<8x128xf32>
      %41 = tpu.matmul %38, %35, %cst_36 {dimension_numbers = #tpu.dot_dimension_numbers<[1], [0], [0], [1], [0, 0, 1, 1], [], []>} : vector<8x32xf32>, vector<32x128xf32>, vector<8x128xf32> -> vector<8x128xf32>
      %c8_i32 = arith.constant 8 : i32
      %42 = arith.muli %c0_i32_34, %c8_i32 : i32
      %43 = tpu.assume_multiple %42, 8 : i32
      %c3_i32 = arith.constant 3 : i32
      %44 = arith.subi %c3_i32, %c0_i32_34 : i32
      %c8_i32_37 = arith.constant 8 : i32
      %45 = arith.muli %44, %c8_i32_37 : i32
      %46 = tpu.assume_multiple %45, 8 : i32
      %47 = arith.index_cast %33 : i32 to index
      %48 = arith.index_cast %43 : i32 to index
      %c0_38 = arith.constant 0 : index
      %49 = vector.load %arg12[%47, %48, %c0_38] : memref<2x32x128xf32, #tpu.memory_space<vmem>>, vector<1x8x128xf32>
      %50 = vector.shape_cast %49 : vector<1x8x128xf32> to vector<8x128xf32>
      %51 = arith.addf %50, %40 : vector<8x128xf32>
      %52 = arith.index_cast %33 : i32 to index
      %53 = arith.index_cast %46 : i32 to index
      %c0_39 = arith.constant 0 : index
      %54 = vector.load %arg13[%52, %53, %c0_39] : memref<2x32x128xf32, #tpu.memory_space<vmem>>, vector<1x8x128xf32>
      %55 = vector.shape_cast %54 : vector<1x8x128xf32> to vector<8x128xf32>
      %56 = arith.addf %55, %41 : vector<8x128xf32>
      %57 = vector.extract_strided_slice %51 {offsets = [0, 0], sizes = [8, 96], strides = [1, 1]} : vector<8x128xf32> to vector<8x96xf32>
      %58 = arith.negf %57 : vector<8x96xf32>
      %59 = math.exp %58 : vector<8x96xf32>
      %cst_40 = arith.constant 1.000000e+00 : f32
      %60 = vector.broadcast %cst_40 : f32 to vector<8x96xf32>
      %61 = arith.addf %60, %59 : vector<8x96xf32>
      %62 = arith.divf %60, %61 : vector<8x96xf32>
      %63 = vector.extract_strided_slice %51 {offsets = [0, 96], sizes = [8, 32], strides = [1, 1]} : vector<8x128xf32> to vector<8x32xf32>
      %64 = math.tanh %63 : vector<8x32xf32>
      %65 = vector.extract_strided_slice %62 {offsets = [0, 0], sizes = [8, 32], strides = [1, 1]} : vector<8x96xf32> to vector<8x32xf32>
      %66 = vector.extract_strided_slice %62 {offsets = [0, 32], sizes = [8, 32], strides = [1, 1]} : vector<8x96xf32> to vector<8x32xf32>
      %67 = vector.extract_strided_slice %62 {offsets = [0, 64], sizes = [8, 32], strides = [1, 1]} : vector<8x96xf32> to vector<8x32xf32>
      %68 = arith.mulf %66, %37 : vector<8x32xf32>
      %69 = arith.mulf %65, %64 : vector<8x32xf32>
      %70 = arith.addf %68, %69 : vector<8x32xf32>
      %71 = math.tanh %70 : vector<8x32xf32>
      %72 = arith.mulf %67, %71 : vector<8x32xf32>
      %73 = vector.extract_strided_slice %56 {offsets = [0, 0], sizes = [8, 96], strides = [1, 1]} : vector<8x128xf32> to vector<8x96xf32>
      %74 = arith.negf %73 : vector<8x96xf32>
      %75 = math.exp %74 : vector<8x96xf32>
      %cst_41 = arith.constant 1.000000e+00 : f32
      %76 = vector.broadcast %cst_41 : f32 to vector<8x96xf32>
      %77 = arith.addf %76, %75 : vector<8x96xf32>
      %78 = arith.divf %76, %77 : vector<8x96xf32>
      %79 = vector.extract_strided_slice %56 {offsets = [0, 96], sizes = [8, 32], strides = [1, 1]} : vector<8x128xf32> to vector<8x32xf32>
      %80 = math.tanh %79 : vector<8x32xf32>
      %81 = vector.extract_strided_slice %78 {offsets = [0, 0], sizes = [8, 32], strides = [1, 1]} : vector<8x96xf32> to vector<8x32xf32>
      %82 = vector.extract_strided_slice %78 {offsets = [0, 32], sizes = [8, 32], strides = [1, 1]} : vector<8x96xf32> to vector<8x32xf32>
      %83 = vector.extract_strided_slice %78 {offsets = [0, 64], sizes = [8, 32], strides = [1, 1]} : vector<8x96xf32> to vector<8x32xf32>
      %84 = arith.mulf %82, %39 : vector<8x32xf32>
      %85 = arith.mulf %81, %80 : vector<8x32xf32>
      %86 = arith.addf %84, %85 : vector<8x32xf32>
      %87 = math.tanh %86 : vector<8x32xf32>
      %88 = arith.mulf %83, %87 : vector<8x32xf32>
      %c1_i32_42 = arith.constant 1 : i32
      %cst_43 = arith.constant dense<0.000000e+00> : vector<8x128xf32>
      %89 = tpu.matmul %72, %34, %cst_43 {dimension_numbers = #tpu.dot_dimension_numbers<[1], [0], [0], [1], [0, 0, 1, 1], [], []>} : vector<8x32xf32>, vector<32x128xf32>, vector<8x128xf32> -> vector<8x128xf32>
      %cst_44 = arith.constant dense<0.000000e+00> : vector<8x128xf32>
      %90 = tpu.matmul %88, %35, %cst_44 {dimension_numbers = #tpu.dot_dimension_numbers<[1], [0], [0], [1], [0, 0, 1, 1], [], []>} : vector<8x32xf32>, vector<32x128xf32>, vector<8x128xf32> -> vector<8x128xf32>
      %c8_i32_45 = arith.constant 8 : i32
      %91 = arith.muli %c1_i32_42, %c8_i32_45 : i32
      %92 = tpu.assume_multiple %91, 8 : i32
      %c3_i32_46 = arith.constant 3 : i32
      %93 = arith.subi %c3_i32_46, %c1_i32_42 : i32
      %c8_i32_47 = arith.constant 8 : i32
      %94 = arith.muli %93, %c8_i32_47 : i32
      %95 = tpu.assume_multiple %94, 8 : i32
      %96 = arith.index_cast %33 : i32 to index
      %97 = arith.index_cast %92 : i32 to index
      %c0_48 = arith.constant 0 : index
      %98 = vector.load %arg12[%96, %97, %c0_48] : memref<2x32x128xf32, #tpu.memory_space<vmem>>, vector<1x8x128xf32>
      %99 = vector.shape_cast %98 : vector<1x8x128xf32> to vector<8x128xf32>
      %100 = arith.addf %99, %89 : vector<8x128xf32>
      %101 = arith.index_cast %33 : i32 to index
      %102 = arith.index_cast %95 : i32 to index
      %c0_49 = arith.constant 0 : index
      %103 = vector.load %arg13[%101, %102, %c0_49] : memref<2x32x128xf32, #tpu.memory_space<vmem>>, vector<1x8x128xf32>
      %104 = vector.shape_cast %103 : vector<1x8x128xf32> to vector<8x128xf32>
      %105 = arith.addf %104, %90 : vector<8x128xf32>
      %106 = vector.extract_strided_slice %100 {offsets = [0, 0], sizes = [8, 96], strides = [1, 1]} : vector<8x128xf32> to vector<8x96xf32>
      %107 = arith.negf %106 : vector<8x96xf32>
      %108 = math.exp %107 : vector<8x96xf32>
      %cst_50 = arith.constant 1.000000e+00 : f32
      %109 = vector.broadcast %cst_50 : f32 to vector<8x96xf32>
      %110 = arith.addf %109, %108 : vector<8x96xf32>
      %111 = arith.divf %109, %110 : vector<8x96xf32>
      %112 = vector.extract_strided_slice %100 {offsets = [0, 96], sizes = [8, 32], strides = [1, 1]} : vector<8x128xf32> to vector<8x32xf32>
      %113 = math.tanh %112 : vector<8x32xf32>
      %114 = vector.extract_strided_slice %111 {offsets = [0, 0], sizes = [8, 32], strides = [1, 1]} : vector<8x96xf32> to vector<8x32xf32>
      %115 = vector.extract_strided_slice %111 {offsets = [0, 32], sizes = [8, 32], strides = [1, 1]} : vector<8x96xf32> to vector<8x32xf32>
      %116 = vector.extract_strided_slice %111 {offsets = [0, 64], sizes = [8, 32], strides = [1, 1]} : vector<8x96xf32> to vector<8x32xf32>
      %117 = arith.mulf %115, %70 : vector<8x32xf32>
      %118 = arith.mulf %114, %113 : vector<8x32xf32>
      %119 = arith.addf %117, %118 : vector<8x32xf32>
      %120 = math.tanh %119 : vector<8x32xf32>
      %121 = arith.mulf %116, %120 : vector<8x32xf32>
      %122 = vector.extract_strided_slice %105 {offsets = [0, 0], sizes = [8, 96], strides = [1, 1]} : vector<8x128xf32> to vector<8x96xf32>
      %123 = arith.negf %122 : vector<8x96xf32>
      %124 = math.exp %123 : vector<8x96xf32>
      %cst_51 = arith.constant 1.000000e+00 : f32
      %125 = vector.broadcast %cst_51 : f32 to vector<8x96xf32>
      %126 = arith.addf %125, %124 : vector<8x96xf32>
      %127 = arith.divf %125, %126 : vector<8x96xf32>
      %128 = vector.extract_strided_slice %105 {offsets = [0, 96], sizes = [8, 32], strides = [1, 1]} : vector<8x128xf32> to vector<8x32xf32>
      %129 = math.tanh %128 : vector<8x32xf32>
      %130 = vector.extract_strided_slice %127 {offsets = [0, 0], sizes = [8, 32], strides = [1, 1]} : vector<8x96xf32> to vector<8x32xf32>
      %131 = vector.extract_strided_slice %127 {offsets = [0, 32], sizes = [8, 32], strides = [1, 1]} : vector<8x96xf32> to vector<8x32xf32>
      %132 = vector.extract_strided_slice %127 {offsets = [0, 64], sizes = [8, 32], strides = [1, 1]} : vector<8x96xf32> to vector<8x32xf32>
      %133 = arith.mulf %131, %86 : vector<8x32xf32>
      %134 = arith.mulf %130, %129 : vector<8x32xf32>
      %135 = arith.addf %133, %134 : vector<8x32xf32>
      %136 = math.tanh %135 : vector<8x32xf32>
      %137 = arith.mulf %132, %136 : vector<8x32xf32>
      %c2_i32_52 = arith.constant 2 : i32
      %cst_53 = arith.constant dense<0.000000e+00> : vector<8x128xf32>
      %138 = tpu.matmul %121, %34, %cst_53 {dimension_numbers = #tpu.dot_dimension_numbers<[1], [0], [0], [1], [0, 0, 1, 1], [], []>} : vector<8x32xf32>, vector<32x128xf32>, vector<8x128xf32> -> vector<8x128xf32>
      %cst_54 = arith.constant dense<0.000000e+00> : vector<8x128xf32>
      %139 = tpu.matmul %137, %35, %cst_54 {dimension_numbers = #tpu.dot_dimension_numbers<[1], [0], [0], [1], [0, 0, 1, 1], [], []>} : vector<8x32xf32>, vector<32x128xf32>, vector<8x128xf32> -> vector<8x128xf32>
      %c8_i32_55 = arith.constant 8 : i32
      %140 = arith.muli %c2_i32_52, %c8_i32_55 : i32
      %141 = tpu.assume_multiple %140, 8 : i32
      %c3_i32_56 = arith.constant 3 : i32
      %142 = arith.subi %c3_i32_56, %c2_i32_52 : i32
      %c8_i32_57 = arith.constant 8 : i32
      %143 = arith.muli %142, %c8_i32_57 : i32
      %144 = tpu.assume_multiple %143, 8 : i32
      %145 = arith.index_cast %33 : i32 to index
      %146 = arith.index_cast %141 : i32 to index
      %c0_58 = arith.constant 0 : index
      %147 = vector.load %arg12[%145, %146, %c0_58] : memref<2x32x128xf32, #tpu.memory_space<vmem>>, vector<1x8x128xf32>
      %148 = vector.shape_cast %147 : vector<1x8x128xf32> to vector<8x128xf32>
      %149 = arith.addf %148, %138 : vector<8x128xf32>
      %150 = arith.index_cast %33 : i32 to index
      %151 = arith.index_cast %144 : i32 to index
      %c0_59 = arith.constant 0 : index
      %152 = vector.load %arg13[%150, %151, %c0_59] : memref<2x32x128xf32, #tpu.memory_space<vmem>>, vector<1x8x128xf32>
      %153 = vector.shape_cast %152 : vector<1x8x128xf32> to vector<8x128xf32>
      %154 = arith.addf %153, %139 : vector<8x128xf32>
      %155 = vector.extract_strided_slice %149 {offsets = [0, 0], sizes = [8, 96], strides = [1, 1]} : vector<8x128xf32> to vector<8x96xf32>
      %156 = arith.negf %155 : vector<8x96xf32>
      %157 = math.exp %156 : vector<8x96xf32>
      %cst_60 = arith.constant 1.000000e+00 : f32
      %158 = vector.broadcast %cst_60 : f32 to vector<8x96xf32>
      %159 = arith.addf %158, %157 : vector<8x96xf32>
      %160 = arith.divf %158, %159 : vector<8x96xf32>
      %161 = vector.extract_strided_slice %149 {offsets = [0, 96], sizes = [8, 32], strides = [1, 1]} : vector<8x128xf32> to vector<8x32xf32>
      %162 = math.tanh %161 : vector<8x32xf32>
      %163 = vector.extract_strided_slice %160 {offsets = [0, 0], sizes = [8, 32], strides = [1, 1]} : vector<8x96xf32> to vector<8x32xf32>
      %164 = vector.extract_strided_slice %160 {offsets = [0, 32], sizes = [8, 32], strides = [1, 1]} : vector<8x96xf32> to vector<8x32xf32>
      %165 = vector.extract_strided_slice %160 {offsets = [0, 64], sizes = [8, 32], strides = [1, 1]} : vector<8x96xf32> to vector<8x32xf32>
      %166 = arith.mulf %164, %119 : vector<8x32xf32>
      %167 = arith.mulf %163, %162 : vector<8x32xf32>
      %168 = arith.addf %166, %167 : vector<8x32xf32>
      %169 = math.tanh %168 : vector<8x32xf32>
      %170 = arith.mulf %165, %169 : vector<8x32xf32>
      %171 = vector.extract_strided_slice %154 {offsets = [0, 0], sizes = [8, 96], strides = [1, 1]} : vector<8x128xf32> to vector<8x96xf32>
      %172 = arith.negf %171 : vector<8x96xf32>
      %173 = math.exp %172 : vector<8x96xf32>
      %cst_61 = arith.constant 1.000000e+00 : f32
      %174 = vector.broadcast %cst_61 : f32 to vector<8x96xf32>
      %175 = arith.addf %174, %173 : vector<8x96xf32>
      %176 = arith.divf %174, %175 : vector<8x96xf32>
      %177 = vector.extract_strided_slice %154 {offsets = [0, 96], sizes = [8, 32], strides = [1, 1]} : vector<8x128xf32> to vector<8x32xf32>
      %178 = math.tanh %177 : vector<8x32xf32>
      %179 = vector.extract_strided_slice %176 {offsets = [0, 0], sizes = [8, 32], strides = [1, 1]} : vector<8x96xf32> to vector<8x32xf32>
      %180 = vector.extract_strided_slice %176 {offsets = [0, 32], sizes = [8, 32], strides = [1, 1]} : vector<8x96xf32> to vector<8x32xf32>
      %181 = vector.extract_strided_slice %176 {offsets = [0, 64], sizes = [8, 32], strides = [1, 1]} : vector<8x96xf32> to vector<8x32xf32>
      %182 = arith.mulf %180, %135 : vector<8x32xf32>
      %183 = arith.mulf %179, %178 : vector<8x32xf32>
      %184 = arith.addf %182, %183 : vector<8x32xf32>
      %185 = math.tanh %184 : vector<8x32xf32>
      %186 = arith.mulf %181, %185 : vector<8x32xf32>
      %c3_i32_62 = arith.constant 3 : i32
      %cst_63 = arith.constant dense<0.000000e+00> : vector<8x128xf32>
      %187 = tpu.matmul %170, %34, %cst_63 {dimension_numbers = #tpu.dot_dimension_numbers<[1], [0], [0], [1], [0, 0, 1, 1], [], []>} : vector<8x32xf32>, vector<32x128xf32>, vector<8x128xf32> -> vector<8x128xf32>
      %cst_64 = arith.constant dense<0.000000e+00> : vector<8x128xf32>
      %188 = tpu.matmul %186, %35, %cst_64 {dimension_numbers = #tpu.dot_dimension_numbers<[1], [0], [0], [1], [0, 0, 1, 1], [], []>} : vector<8x32xf32>, vector<32x128xf32>, vector<8x128xf32> -> vector<8x128xf32>
      %c8_i32_65 = arith.constant 8 : i32
      %189 = arith.muli %c3_i32_62, %c8_i32_65 : i32
      %190 = tpu.assume_multiple %189, 8 : i32
      %c3_i32_66 = arith.constant 3 : i32
      %191 = arith.subi %c3_i32_66, %c3_i32_62 : i32
      %c8_i32_67 = arith.constant 8 : i32
      %192 = arith.muli %191, %c8_i32_67 : i32
      %193 = tpu.assume_multiple %192, 8 : i32
      %194 = arith.index_cast %33 : i32 to index
      %195 = arith.index_cast %190 : i32 to index
      %c0_68 = arith.constant 0 : index
      %196 = vector.load %arg12[%194, %195, %c0_68] : memref<2x32x128xf32, #tpu.memory_space<vmem>>, vector<1x8x128xf32>
      %197 = vector.shape_cast %196 : vector<1x8x128xf32> to vector<8x128xf32>
      %198 = arith.addf %197, %187 : vector<8x128xf32>
      %199 = arith.index_cast %33 : i32 to index
      %200 = arith.index_cast %193 : i32 to index
      %c0_69 = arith.constant 0 : index
      %201 = vector.load %arg13[%199, %200, %c0_69] : memref<2x32x128xf32, #tpu.memory_space<vmem>>, vector<1x8x128xf32>
      %202 = vector.shape_cast %201 : vector<1x8x128xf32> to vector<8x128xf32>
      %203 = arith.addf %202, %188 : vector<8x128xf32>
      %204 = vector.extract_strided_slice %198 {offsets = [0, 0], sizes = [8, 96], strides = [1, 1]} : vector<8x128xf32> to vector<8x96xf32>
      %205 = arith.negf %204 : vector<8x96xf32>
      %206 = math.exp %205 : vector<8x96xf32>
      %cst_70 = arith.constant 1.000000e+00 : f32
      %207 = vector.broadcast %cst_70 : f32 to vector<8x96xf32>
      %208 = arith.addf %207, %206 : vector<8x96xf32>
      %209 = arith.divf %207, %208 : vector<8x96xf32>
      %210 = vector.extract_strided_slice %198 {offsets = [0, 96], sizes = [8, 32], strides = [1, 1]} : vector<8x128xf32> to vector<8x32xf32>
      %211 = math.tanh %210 : vector<8x32xf32>
      %212 = vector.extract_strided_slice %209 {offsets = [0, 0], sizes = [8, 32], strides = [1, 1]} : vector<8x96xf32> to vector<8x32xf32>
      %213 = vector.extract_strided_slice %209 {offsets = [0, 32], sizes = [8, 32], strides = [1, 1]} : vector<8x96xf32> to vector<8x32xf32>
      %214 = vector.extract_strided_slice %209 {offsets = [0, 64], sizes = [8, 32], strides = [1, 1]} : vector<8x96xf32> to vector<8x32xf32>
      %215 = arith.mulf %213, %168 : vector<8x32xf32>
      %216 = arith.mulf %212, %211 : vector<8x32xf32>
      %217 = arith.addf %215, %216 : vector<8x32xf32>
      %218 = math.tanh %217 : vector<8x32xf32>
      %219 = arith.mulf %214, %218 : vector<8x32xf32>
      %220 = vector.extract_strided_slice %203 {offsets = [0, 0], sizes = [8, 96], strides = [1, 1]} : vector<8x128xf32> to vector<8x96xf32>
      %221 = arith.negf %220 : vector<8x96xf32>
      %222 = math.exp %221 : vector<8x96xf32>
      %cst_71 = arith.constant 1.000000e+00 : f32
      %223 = vector.broadcast %cst_71 : f32 to vector<8x96xf32>
      %224 = arith.addf %223, %222 : vector<8x96xf32>
      %225 = arith.divf %223, %224 : vector<8x96xf32>
      %226 = vector.extract_strided_slice %203 {offsets = [0, 96], sizes = [8, 32], strides = [1, 1]} : vector<8x128xf32> to vector<8x32xf32>
      %227 = math.tanh %226 : vector<8x32xf32>
      %228 = vector.extract_strided_slice %225 {offsets = [0, 0], sizes = [8, 32], strides = [1, 1]} : vector<8x96xf32> to vector<8x32xf32>
      %229 = vector.extract_strided_slice %225 {offsets = [0, 32], sizes = [8, 32], strides = [1, 1]} : vector<8x96xf32> to vector<8x32xf32>
      %230 = vector.extract_strided_slice %225 {offsets = [0, 64], sizes = [8, 32], strides = [1, 1]} : vector<8x96xf32> to vector<8x32xf32>
      %231 = arith.mulf %229, %184 : vector<8x32xf32>
      %232 = arith.mulf %228, %227 : vector<8x32xf32>
      %233 = arith.addf %231, %232 : vector<8x32xf32>
      %234 = math.tanh %233 : vector<8x32xf32>
      %235 = arith.mulf %230, %234 : vector<8x32xf32>
      %c4_i32 = arith.constant 4 : i32
      %c0_72 = arith.constant 0 : index
      %c0_73 = arith.constant 0 : index
      %236 = vector.load %arg14[%c0_72, %c0_73] : memref<16x32xf32, #tpu.memory_space<vmem>>, vector<8x32xf32>
      tpu.vector_store %arg14[%c0_72, %c0_73], %219 {strides = array<i32>} : memref<16x32xf32, #tpu.memory_space<vmem>>, vector<8x32xf32>,
      %c0_74 = arith.constant 0 : index
      %c0_75 = arith.constant 0 : index
      %237 = vector.load %arg15[%c0_74, %c0_75] : memref<16x32xf32, #tpu.memory_space<vmem>>, vector<8x32xf32>
      tpu.vector_store %arg15[%c0_74, %c0_75], %217 {strides = array<i32>} : memref<16x32xf32, #tpu.memory_space<vmem>>, vector<8x32xf32>,
      %c8_76 = arith.constant 8 : index
      %c0_77 = arith.constant 0 : index
      %238 = vector.load %arg14[%c8_76, %c0_77] : memref<16x32xf32, #tpu.memory_space<vmem>>, vector<8x32xf32>
      tpu.vector_store %arg14[%c8_76, %c0_77], %235 {strides = array<i32>} : memref<16x32xf32, #tpu.memory_space<vmem>>, vector<8x32xf32>,
      %c8_78 = arith.constant 8 : index
      %c0_79 = arith.constant 0 : index
      %239 = vector.load %arg15[%c8_78, %c0_79] : memref<16x32xf32, #tpu.memory_space<vmem>>, vector<8x32xf32>
      tpu.vector_store %arg15[%c8_78, %c0_79], %233 {strides = array<i32>} : memref<16x32xf32, #tpu.memory_space<vmem>>, vector<8x32xf32>,
    } else {
    }
    %c2_i32_3 = arith.constant 2 : i32
    %8 = arith.cmpi eq, %arg0, %c2_i32_3 : i32
    %9 = arith.extui %8 : i1 to i32
    %c0_i32_4 = arith.constant 0 : i32
    %10 = arith.cmpi ne, %9, %c0_i32_4 : i32
    scf.if %10 {
      %c0 = arith.constant 0 : index
      %c0_5 = arith.constant 0 : index
      %11 = vector.load %arg7[%c0, %c0_5] : memref<32x128xf32, #tpu.memory_space<vmem>>, vector<32x128xf32>
      %c0_6 = arith.constant 0 : index
      %c0_7 = arith.constant 0 : index
      %12 = vector.load %arg8[%c0_6, %c0_7] : memref<32x128xf32, #tpu.memory_space<vmem>>, vector<32x128xf32>
      %c0_8 = arith.constant 0 : index
      %c0_9 = arith.constant 0 : index
      %13 = vector.load %arg14[%c0_8, %c0_9] : memref<16x32xf32, #tpu.memory_space<vmem>>, vector<8x32xf32>
      %c0_10 = arith.constant 0 : index
      %c0_11 = arith.constant 0 : index
      %14 = vector.load %arg15[%c0_10, %c0_11] : memref<16x32xf32, #tpu.memory_space<vmem>>, vector<8x32xf32>
      %c8 = arith.constant 8 : index
      %c0_12 = arith.constant 0 : index
      %15 = vector.load %arg14[%c8, %c0_12] : memref<16x32xf32, #tpu.memory_space<vmem>>, vector<8x32xf32>
      %c8_13 = arith.constant 8 : index
      %c0_14 = arith.constant 0 : index
      %16 = vector.load %arg15[%c8_13, %c0_14] : memref<16x32xf32, #tpu.memory_space<vmem>>, vector<8x32xf32>
      %c0_i32_15 = arith.constant 0 : i32
      %cst = arith.constant dense<0.000000e+00> : vector<8x128xf32>
      %17 = tpu.matmul %13, %11, %cst {dimension_numbers = #tpu.dot_dimension_numbers<[1], [0], [0], [1], [0, 0, 1, 1], [], []>} : vector<8x32xf32>, vector<32x128xf32>, vector<8x128xf32> -> vector<8x128xf32>
      %cst_16 = arith.constant dense<0.000000e+00> : vector<8x128xf32>
      %18 = tpu.matmul %15, %12, %cst_16 {dimension_numbers = #tpu.dot_dimension_numbers<[1], [0], [0], [1], [0, 0, 1, 1], [], []>} : vector<8x32xf32>, vector<32x128xf32>, vector<8x128xf32> -> vector<8x128xf32>
      %c8_i32 = arith.constant 8 : i32
      %19 = arith.muli %c0_i32_15, %c8_i32 : i32
      %20 = tpu.assume_multiple %19, 8 : i32
      %c3_i32 = arith.constant 3 : i32
      %21 = arith.subi %c3_i32, %c0_i32_15 : i32
      %c8_i32_17 = arith.constant 8 : i32
      %22 = arith.muli %21, %c8_i32_17 : i32
      %23 = tpu.assume_multiple %22, 8 : i32
      %c1 = arith.constant 1 : index
      %24 = arith.index_cast %20 : i32 to index
      %c0_18 = arith.constant 0 : index
      %25 = vector.load %arg12[%c1, %24, %c0_18] : memref<2x32x128xf32, #tpu.memory_space<vmem>>, vector<1x8x128xf32>
      %26 = vector.shape_cast %25 : vector<1x8x128xf32> to vector<8x128xf32>
      %27 = arith.addf %26, %17 : vector<8x128xf32>
      %c1_19 = arith.constant 1 : index
      %28 = arith.index_cast %23 : i32 to index
      %c0_20 = arith.constant 0 : index
      %29 = vector.load %arg13[%c1_19, %28, %c0_20] : memref<2x32x128xf32, #tpu.memory_space<vmem>>, vector<1x8x128xf32>
      %30 = vector.shape_cast %29 : vector<1x8x128xf32> to vector<8x128xf32>
      %31 = arith.addf %30, %18 : vector<8x128xf32>
      %32 = vector.extract_strided_slice %27 {offsets = [0, 0], sizes = [8, 96], strides = [1, 1]} : vector<8x128xf32> to vector<8x96xf32>
      %33 = arith.negf %32 : vector<8x96xf32>
      %34 = math.exp %33 : vector<8x96xf32>
      %cst_21 = arith.constant 1.000000e+00 : f32
      %35 = vector.broadcast %cst_21 : f32 to vector<8x96xf32>
      %36 = arith.addf %35, %34 : vector<8x96xf32>
      %37 = arith.divf %35, %36 : vector<8x96xf32>
      %38 = vector.extract_strided_slice %27 {offsets = [0, 96], sizes = [8, 32], strides = [1, 1]} : vector<8x128xf32> to vector<8x32xf32>
      %39 = math.tanh %38 : vector<8x32xf32>
      %40 = vector.extract_strided_slice %37 {offsets = [0, 0], sizes = [8, 32], strides = [1, 1]} : vector<8x96xf32> to vector<8x32xf32>
      %41 = vector.extract_strided_slice %37 {offsets = [0, 32], sizes = [8, 32], strides = [1, 1]} : vector<8x96xf32> to vector<8x32xf32>
      %42 = vector.extract_strided_slice %37 {offsets = [0, 64], sizes = [8, 32], strides = [1, 1]} : vector<8x96xf32> to vector<8x32xf32>
      %43 = arith.mulf %41, %14 : vector<8x32xf32>
      %44 = arith.mulf %40, %39 : vector<8x32xf32>
      %45 = arith.addf %43, %44 : vector<8x32xf32>
      %46 = math.tanh %45 : vector<8x32xf32>
      %47 = arith.mulf %42, %46 : vector<8x32xf32>
      %48 = vector.extract_strided_slice %31 {offsets = [0, 0], sizes = [8, 96], strides = [1, 1]} : vector<8x128xf32> to vector<8x96xf32>
      %49 = arith.negf %48 : vector<8x96xf32>
      %50 = math.exp %49 : vector<8x96xf32>
      %cst_22 = arith.constant 1.000000e+00 : f32
      %51 = vector.broadcast %cst_22 : f32 to vector<8x96xf32>
      %52 = arith.addf %51, %50 : vector<8x96xf32>
      %53 = arith.divf %51, %52 : vector<8x96xf32>
      %54 = vector.extract_strided_slice %31 {offsets = [0, 96], sizes = [8, 32], strides = [1, 1]} : vector<8x128xf32> to vector<8x32xf32>
      %55 = math.tanh %54 : vector<8x32xf32>
      %56 = vector.extract_strided_slice %53 {offsets = [0, 0], sizes = [8, 32], strides = [1, 1]} : vector<8x96xf32> to vector<8x32xf32>
      %57 = vector.extract_strided_slice %53 {offsets = [0, 32], sizes = [8, 32], strides = [1, 1]} : vector<8x96xf32> to vector<8x32xf32>
      %58 = vector.extract_strided_slice %53 {offsets = [0, 64], sizes = [8, 32], strides = [1, 1]} : vector<8x96xf32> to vector<8x32xf32>
      %59 = arith.mulf %57, %16 : vector<8x32xf32>
      %60 = arith.mulf %56, %55 : vector<8x32xf32>
      %61 = arith.addf %59, %60 : vector<8x32xf32>
      %62 = math.tanh %61 : vector<8x32xf32>
      %63 = arith.mulf %58, %62 : vector<8x32xf32>
      %c1_i32 = arith.constant 1 : i32
      %cst_23 = arith.constant dense<0.000000e+00> : vector<8x128xf32>
      %64 = tpu.matmul %47, %11, %cst_23 {dimension_numbers = #tpu.dot_dimension_numbers<[1], [0], [0], [1], [0, 0, 1, 1], [], []>} : vector<8x32xf32>, vector<32x128xf32>, vector<8x128xf32> -> vector<8x128xf32>
      %cst_24 = arith.constant dense<0.000000e+00> : vector<8x128xf32>
      %65 = tpu.matmul %63, %12, %cst_24 {dimension_numbers = #tpu.dot_dimension_numbers<[1], [0], [0], [1], [0, 0, 1, 1], [], []>} : vector<8x32xf32>, vector<32x128xf32>, vector<8x128xf32> -> vector<8x128xf32>
      %c8_i32_25 = arith.constant 8 : i32
      %66 = arith.muli %c1_i32, %c8_i32_25 : i32
      %67 = tpu.assume_multiple %66, 8 : i32
      %c3_i32_26 = arith.constant 3 : i32
      %68 = arith.subi %c3_i32_26, %c1_i32 : i32
      %c8_i32_27 = arith.constant 8 : i32
      %69 = arith.muli %68, %c8_i32_27 : i32
      %70 = tpu.assume_multiple %69, 8 : i32
      %c1_28 = arith.constant 1 : index
      %71 = arith.index_cast %67 : i32 to index
      %c0_29 = arith.constant 0 : index
      %72 = vector.load %arg12[%c1_28, %71, %c0_29] : memref<2x32x128xf32, #tpu.memory_space<vmem>>, vector<1x8x128xf32>
      %73 = vector.shape_cast %72 : vector<1x8x128xf32> to vector<8x128xf32>
      %74 = arith.addf %73, %64 : vector<8x128xf32>
      %c1_30 = arith.constant 1 : index
      %75 = arith.index_cast %70 : i32 to index
      %c0_31 = arith.constant 0 : index
      %76 = vector.load %arg13[%c1_30, %75, %c0_31] : memref<2x32x128xf32, #tpu.memory_space<vmem>>, vector<1x8x128xf32>
      %77 = vector.shape_cast %76 : vector<1x8x128xf32> to vector<8x128xf32>
      %78 = arith.addf %77, %65 : vector<8x128xf32>
      %79 = vector.extract_strided_slice %74 {offsets = [0, 0], sizes = [8, 96], strides = [1, 1]} : vector<8x128xf32> to vector<8x96xf32>
      %80 = arith.negf %79 : vector<8x96xf32>
      %81 = math.exp %80 : vector<8x96xf32>
      %cst_32 = arith.constant 1.000000e+00 : f32
      %82 = vector.broadcast %cst_32 : f32 to vector<8x96xf32>
      %83 = arith.addf %82, %81 : vector<8x96xf32>
      %84 = arith.divf %82, %83 : vector<8x96xf32>
      %85 = vector.extract_strided_slice %74 {offsets = [0, 96], sizes = [8, 32], strides = [1, 1]} : vector<8x128xf32> to vector<8x32xf32>
      %86 = math.tanh %85 : vector<8x32xf32>
      %87 = vector.extract_strided_slice %84 {offsets = [0, 0], sizes = [8, 32], strides = [1, 1]} : vector<8x96xf32> to vector<8x32xf32>
      %88 = vector.extract_strided_slice %84 {offsets = [0, 32], sizes = [8, 32], strides = [1, 1]} : vector<8x96xf32> to vector<8x32xf32>
      %89 = vector.extract_strided_slice %84 {offsets = [0, 64], sizes = [8, 32], strides = [1, 1]} : vector<8x96xf32> to vector<8x32xf32>
      %90 = arith.mulf %88, %45 : vector<8x32xf32>
      %91 = arith.mulf %87, %86 : vector<8x32xf32>
      %92 = arith.addf %90, %91 : vector<8x32xf32>
      %93 = math.tanh %92 : vector<8x32xf32>
      %94 = arith.mulf %89, %93 : vector<8x32xf32>
      %95 = vector.extract_strided_slice %78 {offsets = [0, 0], sizes = [8, 96], strides = [1, 1]} : vector<8x128xf32> to vector<8x96xf32>
      %96 = arith.negf %95 : vector<8x96xf32>
      %97 = math.exp %96 : vector<8x96xf32>
      %cst_33 = arith.constant 1.000000e+00 : f32
      %98 = vector.broadcast %cst_33 : f32 to vector<8x96xf32>
      %99 = arith.addf %98, %97 : vector<8x96xf32>
      %100 = arith.divf %98, %99 : vector<8x96xf32>
      %101 = vector.extract_strided_slice %78 {offsets = [0, 96], sizes = [8, 32], strides = [1, 1]} : vector<8x128xf32> to vector<8x32xf32>
      %102 = math.tanh %101 : vector<8x32xf32>
      %103 = vector.extract_strided_slice %100 {offsets = [0, 0], sizes = [8, 32], strides = [1, 1]} : vector<8x96xf32> to vector<8x32xf32>
      %104 = vector.extract_strided_slice %100 {offsets = [0, 32], sizes = [8, 32], strides = [1, 1]} : vector<8x96xf32> to vector<8x32xf32>
      %105 = vector.extract_strided_slice %100 {offsets = [0, 64], sizes = [8, 32], strides = [1, 1]} : vector<8x96xf32> to vector<8x32xf32>
      %106 = arith.mulf %104, %61 : vector<8x32xf32>
      %107 = arith.mulf %103, %102 : vector<8x32xf32>
      %108 = arith.addf %106, %107 : vector<8x32xf32>
      %109 = math.tanh %108 : vector<8x32xf32>
      %110 = arith.mulf %105, %109 : vector<8x32xf32>
      %c2_i32_34 = arith.constant 2 : i32
      %cst_35 = arith.constant dense<0.000000e+00> : vector<8x128xf32>
      %111 = tpu.matmul %94, %11, %cst_35 {dimension_numbers = #tpu.dot_dimension_numbers<[1], [0], [0], [1], [0, 0, 1, 1], [], []>} : vector<8x32xf32>, vector<32x128xf32>, vector<8x128xf32> -> vector<8x128xf32>
      %cst_36 = arith.constant dense<0.000000e+00> : vector<8x128xf32>
      %112 = tpu.matmul %110, %12, %cst_36 {dimension_numbers = #tpu.dot_dimension_numbers<[1], [0], [0], [1], [0, 0, 1, 1], [], []>} : vector<8x32xf32>, vector<32x128xf32>, vector<8x128xf32> -> vector<8x128xf32>
      %c8_i32_37 = arith.constant 8 : i32
      %113 = arith.muli %c2_i32_34, %c8_i32_37 : i32
      %114 = tpu.assume_multiple %113, 8 : i32
      %c3_i32_38 = arith.constant 3 : i32
      %115 = arith.subi %c3_i32_38, %c2_i32_34 : i32
      %c8_i32_39 = arith.constant 8 : i32
      %116 = arith.muli %115, %c8_i32_39 : i32
      %117 = tpu.assume_multiple %116, 8 : i32
      %c1_40 = arith.constant 1 : index
      %118 = arith.index_cast %114 : i32 to index
      %c0_41 = arith.constant 0 : index
      %119 = vector.load %arg12[%c1_40, %118, %c0_41] : memref<2x32x128xf32, #tpu.memory_space<vmem>>, vector<1x8x128xf32>
      %120 = vector.shape_cast %119 : vector<1x8x128xf32> to vector<8x128xf32>
      %121 = arith.addf %120, %111 : vector<8x128xf32>
      %c1_42 = arith.constant 1 : index
      %122 = arith.index_cast %117 : i32 to index
      %c0_43 = arith.constant 0 : index
      %123 = vector.load %arg13[%c1_42, %122, %c0_43] : memref<2x32x128xf32, #tpu.memory_space<vmem>>, vector<1x8x128xf32>
      %124 = vector.shape_cast %123 : vector<1x8x128xf32> to vector<8x128xf32>
      %125 = arith.addf %124, %112 : vector<8x128xf32>
      %126 = vector.extract_strided_slice %121 {offsets = [0, 0], sizes = [8, 96], strides = [1, 1]} : vector<8x128xf32> to vector<8x96xf32>
      %127 = arith.negf %126 : vector<8x96xf32>
      %128 = math.exp %127 : vector<8x96xf32>
      %cst_44 = arith.constant 1.000000e+00 : f32
      %129 = vector.broadcast %cst_44 : f32 to vector<8x96xf32>
      %130 = arith.addf %129, %128 : vector<8x96xf32>
      %131 = arith.divf %129, %130 : vector<8x96xf32>
      %132 = vector.extract_strided_slice %121 {offsets = [0, 96], sizes = [8, 32], strides = [1, 1]} : vector<8x128xf32> to vector<8x32xf32>
      %133 = math.tanh %132 : vector<8x32xf32>
      %134 = vector.extract_strided_slice %131 {offsets = [0, 0], sizes = [8, 32], strides = [1, 1]} : vector<8x96xf32> to vector<8x32xf32>
      %135 = vector.extract_strided_slice %131 {offsets = [0, 32], sizes = [8, 32], strides = [1, 1]} : vector<8x96xf32> to vector<8x32xf32>
      %136 = vector.extract_strided_slice %131 {offsets = [0, 64], sizes = [8, 32], strides = [1, 1]} : vector<8x96xf32> to vector<8x32xf32>
      %137 = arith.mulf %135, %92 : vector<8x32xf32>
      %138 = arith.mulf %134, %133 : vector<8x32xf32>
      %139 = arith.addf %137, %138 : vector<8x32xf32>
      %140 = math.tanh %139 : vector<8x32xf32>
      %141 = arith.mulf %136, %140 : vector<8x32xf32>
      %142 = vector.extract_strided_slice %125 {offsets = [0, 0], sizes = [8, 96], strides = [1, 1]} : vector<8x128xf32> to vector<8x96xf32>
      %143 = arith.negf %142 : vector<8x96xf32>
      %144 = math.exp %143 : vector<8x96xf32>
      %cst_45 = arith.constant 1.000000e+00 : f32
      %145 = vector.broadcast %cst_45 : f32 to vector<8x96xf32>
      %146 = arith.addf %145, %144 : vector<8x96xf32>
      %147 = arith.divf %145, %146 : vector<8x96xf32>
      %148 = vector.extract_strided_slice %125 {offsets = [0, 96], sizes = [8, 32], strides = [1, 1]} : vector<8x128xf32> to vector<8x32xf32>
      %149 = math.tanh %148 : vector<8x32xf32>
      %150 = vector.extract_strided_slice %147 {offsets = [0, 0], sizes = [8, 32], strides = [1, 1]} : vector<8x96xf32> to vector<8x32xf32>
      %151 = vector.extract_strided_slice %147 {offsets = [0, 32], sizes = [8, 32], strides = [1, 1]} : vector<8x96xf32> to vector<8x32xf32>
      %152 = vector.extract_strided_slice %147 {offsets = [0, 64], sizes = [8, 32], strides = [1, 1]} : vector<8x96xf32> to vector<8x32xf32>
      %153 = arith.mulf %151, %108 : vector<8x32xf32>
      %154 = arith.mulf %150, %149 : vector<8x32xf32>
      %155 = arith.addf %153, %154 : vector<8x32xf32>
      %156 = math.tanh %155 : vector<8x32xf32>
      %157 = arith.mulf %152, %156 : vector<8x32xf32>
      %c3_i32_46 = arith.constant 3 : i32
      %cst_47 = arith.constant dense<0.000000e+00> : vector<8x128xf32>
      %158 = tpu.matmul %141, %11, %cst_47 {dimension_numbers = #tpu.dot_dimension_numbers<[1], [0], [0], [1], [0, 0, 1, 1], [], []>} : vector<8x32xf32>, vector<32x128xf32>, vector<8x128xf32> -> vector<8x128xf32>
      %cst_48 = arith.constant dense<0.000000e+00> : vector<8x128xf32>
      %159 = tpu.matmul %157, %12, %cst_48 {dimension_numbers = #tpu.dot_dimension_numbers<[1], [0], [0], [1], [0, 0, 1, 1], [], []>} : vector<8x32xf32>, vector<32x128xf32>, vector<8x128xf32> -> vector<8x128xf32>
      %c8_i32_49 = arith.constant 8 : i32
      %160 = arith.muli %c3_i32_46, %c8_i32_49 : i32
      %161 = tpu.assume_multiple %160, 8 : i32
      %c3_i32_50 = arith.constant 3 : i32
      %162 = arith.subi %c3_i32_50, %c3_i32_46 : i32
      %c8_i32_51 = arith.constant 8 : i32
      %163 = arith.muli %162, %c8_i32_51 : i32
      %164 = tpu.assume_multiple %163, 8 : i32
      %c1_52 = arith.constant 1 : index
      %165 = arith.index_cast %161 : i32 to index
      %c0_53 = arith.constant 0 : index
      %166 = vector.load %arg12[%c1_52, %165, %c0_53] : memref<2x32x128xf32, #tpu.memory_space<vmem>>, vector<1x8x128xf32>
      %167 = vector.shape_cast %166 : vector<1x8x128xf32> to vector<8x128xf32>
      %168 = arith.addf %167, %158 : vector<8x128xf32>
      %c1_54 = arith.constant 1 : index
      %169 = arith.index_cast %164 : i32 to index
      %c0_55 = arith.constant 0 : index
      %170 = vector.load %arg13[%c1_54, %169, %c0_55] : memref<2x32x128xf32, #tpu.memory_space<vmem>>, vector<1x8x128xf32>
      %171 = vector.shape_cast %170 : vector<1x8x128xf32> to vector<8x128xf32>
      %172 = arith.addf %171, %159 : vector<8x128xf32>
      %173 = vector.extract_strided_slice %168 {offsets = [0, 0], sizes = [8, 96], strides = [1, 1]} : vector<8x128xf32> to vector<8x96xf32>
      %174 = arith.negf %173 : vector<8x96xf32>
      %175 = math.exp %174 : vector<8x96xf32>
      %cst_56 = arith.constant 1.000000e+00 : f32
      %176 = vector.broadcast %cst_56 : f32 to vector<8x96xf32>
      %177 = arith.addf %176, %175 : vector<8x96xf32>
      %178 = arith.divf %176, %177 : vector<8x96xf32>
      %179 = vector.extract_strided_slice %168 {offsets = [0, 96], sizes = [8, 32], strides = [1, 1]} : vector<8x128xf32> to vector<8x32xf32>
      %180 = math.tanh %179 : vector<8x32xf32>
      %181 = vector.extract_strided_slice %178 {offsets = [0, 0], sizes = [8, 32], strides = [1, 1]} : vector<8x96xf32> to vector<8x32xf32>
      %182 = vector.extract_strided_slice %178 {offsets = [0, 32], sizes = [8, 32], strides = [1, 1]} : vector<8x96xf32> to vector<8x32xf32>
      %183 = vector.extract_strided_slice %178 {offsets = [0, 64], sizes = [8, 32], strides = [1, 1]} : vector<8x96xf32> to vector<8x32xf32>
      %184 = arith.mulf %182, %139 : vector<8x32xf32>
      %185 = arith.mulf %181, %180 : vector<8x32xf32>
      %186 = arith.addf %184, %185 : vector<8x32xf32>
      %187 = math.tanh %186 : vector<8x32xf32>
      %188 = arith.mulf %183, %187 : vector<8x32xf32>
      %189 = vector.extract_strided_slice %172 {offsets = [0, 0], sizes = [8, 96], strides = [1, 1]} : vector<8x128xf32> to vector<8x96xf32>
      %190 = arith.negf %189 : vector<8x96xf32>
      %191 = math.exp %190 : vector<8x96xf32>
      %cst_57 = arith.constant 1.000000e+00 : f32
      %192 = vector.broadcast %cst_57 : f32 to vector<8x96xf32>
      %193 = arith.addf %192, %191 : vector<8x96xf32>
      %194 = arith.divf %192, %193 : vector<8x96xf32>
      %195 = vector.extract_strided_slice %172 {offsets = [0, 96], sizes = [8, 32], strides = [1, 1]} : vector<8x128xf32> to vector<8x32xf32>
      %196 = math.tanh %195 : vector<8x32xf32>
      %197 = vector.extract_strided_slice %194 {offsets = [0, 0], sizes = [8, 32], strides = [1, 1]} : vector<8x96xf32> to vector<8x32xf32>
      %198 = vector.extract_strided_slice %194 {offsets = [0, 32], sizes = [8, 32], strides = [1, 1]} : vector<8x96xf32> to vector<8x32xf32>
      %199 = vector.extract_strided_slice %194 {offsets = [0, 64], sizes = [8, 32], strides = [1, 1]} : vector<8x96xf32> to vector<8x32xf32>
      %200 = arith.mulf %198, %155 : vector<8x32xf32>
      %201 = arith.mulf %197, %196 : vector<8x32xf32>
      %202 = arith.addf %200, %201 : vector<8x32xf32>
      %203 = math.tanh %202 : vector<8x32xf32>
      %204 = arith.mulf %199, %203 : vector<8x32xf32>
      %c4_i32 = arith.constant 4 : i32
      %c0_58 = arith.constant 0 : index
      %c0_59 = arith.constant 0 : index
      %205 = vector.load %arg14[%c0_58, %c0_59] : memref<16x32xf32, #tpu.memory_space<vmem>>, vector<8x32xf32>
      tpu.vector_store %arg14[%c0_58, %c0_59], %188 {strides = array<i32>} : memref<16x32xf32, #tpu.memory_space<vmem>>, vector<8x32xf32>,
      %c0_60 = arith.constant 0 : index
      %c0_61 = arith.constant 0 : index
      %206 = vector.load %arg15[%c0_60, %c0_61] : memref<16x32xf32, #tpu.memory_space<vmem>>, vector<8x32xf32>
      tpu.vector_store %arg15[%c0_60, %c0_61], %186 {strides = array<i32>} : memref<16x32xf32, #tpu.memory_space<vmem>>, vector<8x32xf32>,
      %c8_62 = arith.constant 8 : index
      %c0_63 = arith.constant 0 : index
      %207 = vector.load %arg14[%c8_62, %c0_63] : memref<16x32xf32, #tpu.memory_space<vmem>>, vector<8x32xf32>
      tpu.vector_store %arg14[%c8_62, %c0_63], %204 {strides = array<i32>} : memref<16x32xf32, #tpu.memory_space<vmem>>, vector<8x32xf32>,
      %c8_64 = arith.constant 8 : index
      %c0_65 = arith.constant 0 : index
      %208 = vector.load %arg15[%c8_64, %c0_65] : memref<16x32xf32, #tpu.memory_space<vmem>>, vector<8x32xf32>
      tpu.vector_store %arg15[%c8_64, %c0_65], %202 {strides = array<i32>} : memref<16x32xf32, #tpu.memory_space<vmem>>, vector<8x32xf32>,
      %209 = tpu.concatenate %188, %204 in 1 : vector<8x32xf32>, vector<8x32xf32> -> vector<8x64xf32>
      %c0_66 = arith.constant 0 : index
      %c0_67 = arith.constant 0 : index
      %210 = vector.load %arg9[%c0_66, %c0_67] : memref<64x4xf32, #tpu.memory_space<vmem>>, vector<64x4xf32>
      %cst_68 = arith.constant dense<0.000000e+00> : vector<8x4xf32>
      %211 = tpu.matmul %209, %210, %cst_68 {dimension_numbers = #tpu.dot_dimension_numbers<[1], [0], [0], [1], [0, 0, 1, 1], [], []>} : vector<8x64xf32>, vector<64x4xf32>, vector<8x4xf32> -> vector<8x4xf32>
      %c0_69 = arith.constant 0 : index
      %c0_70 = arith.constant 0 : index
      %212 = vector.load %arg10[%c0_69, %c0_70] : memref<1x4xf32, #tpu.memory_space<vmem>>, vector<1x4xf32>
      %213 = vector.broadcast %212 : vector<1x4xf32> to vector<8x4xf32>
      %214 = arith.addf %211, %213 : vector<8x4xf32>
      %c0_71 = arith.constant 0 : index
      %c0_72 = arith.constant 0 : index
      %215 = vector.load %arg11[%c0_71, %c0_72] : memref<8x4xf32, #tpu.memory_space<vmem>>, vector<8x4xf32>
      tpu.vector_store %arg11[%c0_71, %c0_72], %214 {strides = array<i32>} : memref<8x4xf32, #tpu.memory_space<vmem>>, vector<8x4xf32>,
    } else {
    }
    return
  }
  func.func @transform_0(%arg0: i32) -> (i32, i32) {
    %c1_i32 = arith.constant 1 : i32
    %0 = arith.minsi %arg0, %c1_i32 : i32
    %c0_i32 = arith.constant 0 : i32
    %c0_i32_0 = arith.constant 0 : i32
    return %0, %c0_i32 : i32, i32
  }
  func.func @transform_1(%arg0: i32) -> (i32, i32) {
    %c1_i32 = arith.constant 1 : i32
    %0 = arith.minsi %arg0, %c1_i32 : i32
    %c1_i32_0 = arith.constant 1 : i32
    %1 = arith.subi %c1_i32_0, %0 : i32
    %c0_i32 = arith.constant 0 : i32
    %c0_i32_1 = arith.constant 0 : i32
    return %1, %c0_i32 : i32, i32
  }
  func.func @transform_2(%arg0: i32) -> (i32, i32) {
    %c0_i32 = arith.constant 0 : i32
    %c0_i32_0 = arith.constant 0 : i32
    %c0_i32_1 = arith.constant 0 : i32
    return %c0_i32, %c0_i32_0 : i32, i32
  }
  func.func @transform_3(%arg0: i32) -> (i32, i32) {
    %c0_i32 = arith.constant 0 : i32
    %c0_i32_0 = arith.constant 0 : i32
    %c0_i32_1 = arith.constant 0 : i32
    return %c0_i32, %c0_i32_0 : i32, i32
  }
  func.func @transform_4(%arg0: i32) -> (i32, i32) {
    %c0_i32 = arith.constant 0 : i32
    %c0_i32_0 = arith.constant 0 : i32
    %c0_i32_1 = arith.constant 0 : i32
    return %c0_i32, %c0_i32_0 : i32, i32
  }
  func.func @transform_5(%arg0: i32) -> (i32, i32) {
    %c0_i32 = arith.constant 0 : i32
    %c0_i32_0 = arith.constant 0 : i32
    %c0_i32_1 = arith.constant 0 : i32
    return %c0_i32, %c0_i32_0 : i32, i32
  }
  func.func @transform_6(%arg0: i32) -> (i32, i32) {
    %c0_i32 = arith.constant 0 : i32
    %c0_i32_0 = arith.constant 0 : i32
    %c0_i32_1 = arith.constant 0 : i32
    return %c0_i32, %c0_i32_0 : i32, i32
  }
  func.func @transform_7(%arg0: i32) -> (i32, i32) {
    %c0_i32 = arith.constant 0 : i32
    %c0_i32_0 = arith.constant 0 : i32
    %c0_i32_1 = arith.constant 0 : i32
    return %c0_i32, %c0_i32_0 : i32, i32
  }
  func.func @transform_8(%arg0: i32) -> (i32, i32) {
    %c0_i32 = arith.constant 0 : i32
    %c0_i32_0 = arith.constant 0 : i32
    %c0_i32_1 = arith.constant 0 : i32
    return %c0_i32, %c0_i32_0 : i32, i32
  }
  func.func @transform_9(%arg0: i32) -> (i32, i32) {
    %c0_i32 = arith.constant 0 : i32
    %c0_i32_0 = arith.constant 0 : i32
    %c0_i32_1 = arith.constant 0 : i32
    return %c0_i32, %c0_i32_0 : i32, i32
  }
  func.func @transform_10(%arg0: i32) -> (i32, i32) {
    %c0_i32 = arith.constant 0 : i32
    %c0_i32_0 = arith.constant 0 : i32
    %c0_i32_1 = arith.constant 0 : i32
    return %c0_i32, %c0_i32_0 : i32, i32
  }
}

</mosaic_0001>

<llo_original>
// kernel: tpu_custom_call.1
$region0: #{tpu_custom_call.1}
  #allocation0 [shape = 'u32[]', space=smem, size = 0x4, offset = 0x4, fixed_abs, tag = 'smem constant byte address 0x4 - core index']
  #allocation1 [shape = 'u32[144,128]{1,0:T(1,128)}', space=vmem, size = 0x12000, scoped, tag = 'internal scratch']
  #allocation2 [shape = 'f32[2,32,128]{2,1,0:T(8,128)}', space=vmem, size = 0x8000, scoped, tag = 'scratch operand']
  #allocation3 [shape = 'f32[2,32,128]{2,1,0:T(8,128)}', space=vmem, size = 0x8000, scoped, tag = 'scratch operand']
  #allocation4 [shape = 'f32[16,32]{1,0:T(8,128)}', space=vmem, size = 0x2000, scoped, tag = 'scratch operand']
  #allocation5 [shape = 'f32[16,32]{1,0:T(8,128)}', space=vmem, size = 0x2000, scoped, tag = 'scratch operand']
  %s0 = inlined_call_operand.vmem [shape: f32[64,16], index: 0, kind: input, shape index: {}]
  %s1 = inlined_call_operand.vmem [shape: f32[64,16], index: 1, kind: input, shape index: {}]
  %s2 = inlined_call_operand.vmem [shape: f32[16,128], index: 2, kind: input, shape index: {}]
  %s3 = inlined_call_operand.vmem [shape: f32[16,128], index: 3, kind: input, shape index: {}]
  %s4 = inlined_call_operand.vmem [shape: f32[1,128], index: 4, kind: input, shape index: {}]
  %s5 = inlined_call_operand.vmem [shape: f32[1,128], index: 5, kind: input, shape index: {}]
  %s6 = inlined_call_operand.vmem [shape: f32[32,128], index: 6, kind: input, shape index: {}]
  %s7 = inlined_call_operand.vmem [shape: f32[32,128], index: 7, kind: input, shape index: {}]
  %s8 = inlined_call_operand.vmem [shape: f32[64,4], index: 8, kind: input, shape index: {}]
  %s9 = inlined_call_operand.vmem [shape: f32[1,4], index: 9, kind: input, shape index: {}]
  %s10 = inlined_call_operand.vmem [shape: f32[8,4], index: 10, kind: output, shape index: {}]
  %s11 = sld [smem:[#allocation0]]
  $region85: #{tpu_custom_call.1} parent=0
    _
  %s13 = ssub.s32 1, %s11
  %s14 = scalar_select 0, %s13, %s11
  loop: start=0, step=1, limit=5
  $region2: #{tpu_custom_call.1} parent=0 // loop_pre_header
    _
  $region3: #{tpu_custom_call.1} parent=0 // loop_header
    %s16 = sphi 0, %s20
    %p17 = scmp.ge.s32.totalorder %s16, 5
    %s30 = sphi 0, %s32
    %s33 = sphi 0, %s30
    %s34 = sphi 0, %s33
    %s50 = sphi 0, %s34
    %s62 = sphi 0, %s64
    %s65 = sphi 0, %s62
    %s66 = sphi 0, %s65
    %s82 = sphi 0, %s66
    %s86 = sphi 0, %s86
    %s88 = sphi 0, %s86
    %s89 = sphi 0, %s88
    %s103 = sphi 0, %s89
    %s107 = sphi 0, %s107
    %s109 = sphi 0, %s107
    %s110 = sphi 0, %s109
    %s124 = sphi 0, %s110
    %s128 = sphi 0, %s128
    %s130 = sphi 0, %s128
    %s131 = sphi 0, %s130
    %s145 = sphi 0, %s131
    %s149 = sphi 0, %s149
    %s151 = sphi 0, %s149
    %s152 = sphi 0, %s151
    %s166 = sphi 0, %s152
    %s170 = sphi 0, %s170
    %s172 = sphi 0, %s170
    %s173 = sphi 0, %s172
    %s187 = sphi 0, %s173
    %s191 = sphi 0, %s191
    %s193 = sphi 0, %s191
    %s194 = sphi 0, %s193
    %s208 = sphi 0, %s194
    %s212 = sphi 0, %s212
    %s214 = sphi 0, %s212
    %s215 = sphi 0, %s214
    %s229 = sphi 0, %s215
    %s233 = sphi 0, %s233
    %s235 = sphi 0, %s233
    %s236 = sphi 0, %s235
    %s250 = sphi 0, %s236
    %s254 = sphi 0, %s254
    %s256 = sphi 0, %s254
    %s257 = sphi 0, %s256
    %s271 = sphi 0, %s257
  $region4: #{tpu_custom_call.1} parent=0 // loop_header_branch
    %19 = sbr.rel (%p17) target = $region8
  $region5: #{tpu_custom_call.1} parent=0 // loop_body
    %s21 = ssub.s32 %s16, 1
    %s22 = ssub.s32 %s16, 2
    %s23 = sadd.s32 %s16, 1
    %p24 = scmp.lt.s32.totalorder %s16, 1
    %s25 = scalar_select %p24, %s16, 1
    %p26 = scmp.lt.s32.totalorder %s23, 1
    %s27 = scalar_select %p26, %s23, 1
    %s28 = ssub.s32 %s25, %s27
    %p29 = scmp.eq.s32.totalorder %s28, 0
    %s31 = sadd.s32 %s30, 1
    %s32 = scalar_select %p29, %s30, %s31
    %p35 = pneg %p29
    %p36 = scmp.eq.s32.totalorder %s16, 2
    %p37 = por %p35, %p36
    %p38 = scmp.ne.s32.totalorder %s30, %s33
    %p39 = scmp.eq.s32.totalorder %s16, 0
    %p40 = por %p38, %p39
    %p41 = scmp.ne.s32.totalorder %s30, %s33
    %p42 = scmp.eq.s32.totalorder %s21, 2
    %p43 = por %p41, %p42
    %p44 = scmp.ne.s32.totalorder %s33, %s34
    %p45 = scmp.eq.s32.totalorder %s21, 0
    %p46 = por %p44, %p45
    %p47 = scmp.ne.s32.totalorder %s33, %s34
    %p48 = scmp.eq.s32.totalorder %s22, 2
    %p49 = por %p47, %p48
    %p51 = scmp.ne.s32.totalorder %s34, %s50
    %p52 = scmp.eq.s32.totalorder %s22, 0
    %p53 = por %p51, %p52
    %p54 = scmp.lt.s32.totalorder %s16, 1
    %s55 = scalar_select %p54, %s16, 1
    %s56 = ssub.s32 1, %s55
    %p57 = scmp.lt.s32.totalorder %s23, 1
    %s58 = scalar_select %p57, %s23, 1
    %s59 = ssub.s32 1, %s58
    %s60 = ssub.s32 %s56, %s59
    %p61 = scmp.eq.s32.totalorder %s60, 0
    %s63 = sadd.s32 %s62, 1
    %s64 = scalar_select %p61, %s62, %s63
    %p67 = pneg %p61
    %p68 = scmp.eq.s32.totalorder %s16, 2
    %p69 = por %p67, %p68
    %p70 = scmp.ne.s32.totalorder %s62, %s65
    %p71 = scmp.eq.s32.totalorder %s16, 0
    %p72 = por %p70, %p71
    %p73 = scmp.ne.s32.totalorder %s62, %s65
    %p74 = scmp.eq.s32.totalorder %s21, 2
    %p75 = por %p73, %p74
    %p76 = scmp.ne.s32.totalorder %s65, %s66
    %p77 = scmp.eq.s32.totalorder %s21, 0
    %p78 = por %p76, %p77
    %p79 = scmp.ne.s32.totalorder %s65, %s66
    %p80 = scmp.eq.s32.totalorder %s22, 2
    %p81 = por %p79, %p80
    %p83 = scmp.ne.s32.totalorder %s66, %s82
    %p84 = scmp.eq.s32.totalorder %s22, 0
    %p85 = por %p83, %p84
    %s87 = sadd.s32 %s86, 1
    %p90 = scmp.eq.s32.totalorder %s16, 2
    %p91 = scmp.ne.s32.totalorder %s86, %s88
    %p92 = scmp.eq.s32.totalorder %s16, 0
    %p93 = por %p91, %p92
    %p94 = scmp.ne.s32.totalorder %s86, %s88
    %p95 = scmp.eq.s32.totalorder %s21, 2
    %p96 = por %p94, %p95
    %p97 = scmp.ne.s32.totalorder %s88, %s89
    %p98 = scmp.eq.s32.totalorder %s21, 0
    %p99 = por %p97, %p98
    %p100 = scmp.ne.s32.totalorder %s88, %s89
    %p101 = scmp.eq.s32.totalorder %s22, 2
    %p102 = por %p100, %p101
    %p104 = scmp.ne.s32.totalorder %s89, %s103
    %p105 = scmp.eq.s32.totalorder %s22, 0
    %p106 = por %p104, %p105
    %s108 = sadd.s32 %s107, 1
    %p111 = scmp.eq.s32.totalorder %s16, 2
    %p112 = scmp.ne.s32.totalorder %s107, %s109
    %p113 = scmp.eq.s32.totalorder %s16, 0
    %p114 = por %p112, %p113
    %p115 = scmp.ne.s32.totalorder %s107, %s109
    %p116 = scmp.eq.s32.totalorder %s21, 2
    %p117 = por %p115, %p116
    %p118 = scmp.ne.s32.totalorder %s109, %s110
    %p119 = scmp.eq.s32.totalorder %s21, 0
    %p120 = por %p118, %p119
    %p121 = scmp.ne.s32.totalorder %s109, %s110
    %p122 = scmp.eq.s32.totalorder %s22, 2
    %p123 = por %p121, %p122
    %p125 = scmp.ne.s32.totalorder %s110, %s124
    %p126 = scmp.eq.s32.totalorder %s22, 0
    %p127 = por %p125, %p126
    %s129 = sadd.s32 %s128, 1
    %p132 = scmp.eq.s32.totalorder %s16, 2
    %p133 = scmp.ne.s32.totalorder %s128, %s130
    %p134 = scmp.eq.s32.totalorder %s16, 0
    %p135 = por %p133, %p134
    %p136 = scmp.ne.s32.totalorder %s128, %s130
    %p137 = scmp.eq.s32.totalorder %s21, 2
    %p138 = por %p136, %p137
    %p139 = scmp.ne.s32.totalorder %s130, %s131
    %p140 = scmp.eq.s32.totalorder %s21, 0
    %p141 = por %p139, %p140
    %p142 = scmp.ne.s32.totalorder %s130, %s131
    %p143 = scmp.eq.s32.totalorder %s22, 2
    %p144 = por %p142, %p143
    %p146 = scmp.ne.s32.totalorder %s131, %s145
    %p147 = scmp.eq.s32.totalorder %s22, 0
    %p148 = por %p146, %p147
    %s150 = sadd.s32 %s149, 1
    %p153 = scmp.eq.s32.totalorder %s16, 2
    %p154 = scmp.ne.s32.totalorder %s149, %s151
    %p155 = scmp.eq.s32.totalorder %s16, 0
    %p156 = por %p154, %p155
    %p157 = scmp.ne.s32.totalorder %s149, %s151
    %p158 = scmp.eq.s32.totalorder %s21, 2
    %p159 = por %p157, %p158
    %p160 = scmp.ne.s32.totalorder %s151, %s152
    %p161 = scmp.eq.s32.totalorder %s21, 0
    %p162 = por %p160, %p161
    %p163 = scmp.ne.s32.totalorder %s151, %s152
    %p164 = scmp.eq.s32.totalorder %s22, 2
    %p165 = por %p163, %p164
    %p167 = scmp.ne.s32.totalorder %s152, %s166
    %p168 = scmp.eq.s32.totalorder %s22, 0
    %p169 = por %p167, %p168
    %s171 = sadd.s32 %s170, 1
    %p174 = scmp.eq.s32.totalorder %s16, 2
    %p175 = scmp.ne.s32.totalorder %s170, %s172
    %p176 = scmp.eq.s32.totalorder %s16, 0
    %p177 = por %p175, %p176
    %p178 = scmp.ne.s32.totalorder %s170, %s172
    %p179 = scmp.eq.s32.totalorder %s21, 2
    %p180 = por %p178, %p179
    %p181 = scmp.ne.s32.totalorder %s172, %s173
    %p182 = scmp.eq.s32.totalorder %s21, 0
    %p183 = por %p181, %p182
    %p184 = scmp.ne.s32.totalorder %s172, %s173
    %p185 = scmp.eq.s32.totalorder %s22, 2
    %p186 = por %p184, %p185
    %p188 = scmp.ne.s32.totalorder %s173, %s187
    %p189 = scmp.eq.s32.totalorder %s22, 0
    %p190 = por %p188, %p189
    %s192 = sadd.s32 %s191, 1
    %p195 = scmp.eq.s32.totalorder %s16, 2
    %p196 = scmp.ne.s32.totalorder %s191, %s193
    %p197 = scmp.eq.s32.totalorder %s16, 0
    %p198 = por %p196, %p197
    %p199 = scmp.ne.s32.totalorder %s191, %s193
    %p200 = scmp.eq.s32.totalorder %s21, 2
    %p201 = por %p199, %p200
    %p202 = scmp.ne.s32.totalorder %s193, %s194
    %p203 = scmp.eq.s32.totalorder %s21, 0
    %p204 = por %p202, %p203
    %p205 = scmp.ne.s32.totalorder %s193, %s194
    %p206 = scmp.eq.s32.totalorder %s22, 2
    %p207 = por %p205, %p206
    %p209 = scmp.ne.s32.totalorder %s194, %s208
    %p210 = scmp.eq.s32.totalorder %s22, 0
    %p211 = por %p209, %p210
    %s213 = sadd.s32 %s212, 1
    %p216 = scmp.eq.s32.totalorder %s16, 2
    %p217 = scmp.ne.s32.totalorder %s212, %s214
    %p218 = scmp.eq.s32.totalorder %s16, 0
    %p219 = por %p217, %p218
    %p220 = scmp.ne.s32.totalorder %s212, %s214
    %p221 = scmp.eq.s32.totalorder %s21, 2
    %p222 = por %p220, %p221
    %p223 = scmp.ne.s32.totalorder %s214, %s215
    %p224 = scmp.eq.s32.totalorder %s21, 0
    %p225 = por %p223, %p224
    %p226 = scmp.ne.s32.totalorder %s214, %s215
    %p227 = scmp.eq.s32.totalorder %s22, 2
    %p228 = por %p226, %p227
    %p230 = scmp.ne.s32.totalorder %s215, %s229
    %p231 = scmp.eq.s32.totalorder %s22, 0
    %p232 = por %p230, %p231
    %s234 = sadd.s32 %s233, 1
    %p237 = scmp.eq.s32.totalorder %s16, 2
    %p238 = scmp.ne.s32.totalorder %s233, %s235
    %p239 = scmp.eq.s32.totalorder %s16, 0
    %p240 = por %p238, %p239
    %p241 = scmp.ne.s32.totalorder %s233, %s235
    %p242 = scmp.eq.s32.totalorder %s21, 2
    %p243 = por %p241, %p242
    %p244 = scmp.ne.s32.totalorder %s235, %s236
    %p245 = scmp.eq.s32.totalorder %s21, 0
    %p246 = por %p244, %p245
    %p247 = scmp.ne.s32.totalorder %s235, %s236
    %p248 = scmp.eq.s32.totalorder %s22, 2
    %p249 = por %p247, %p248
    %p251 = scmp.ne.s32.totalorder %s236, %s250
    %p252 = scmp.eq.s32.totalorder %s22, 0
    %p253 = por %p251, %p252
    %s255 = sadd.s32 %s254, 1
    %p258 = scmp.eq.s32.totalorder %s16, 2
    %p259 = scmp.ne.s32.totalorder %s254, %s256
    %p260 = scmp.eq.s32.totalorder %s16, 0
    %p261 = por %p259, %p260
    %p262 = scmp.ne.s32.totalorder %s254, %s256
    %p263 = scmp.eq.s32.totalorder %s21, 2
    %p264 = por %p262, %p263
    %p265 = scmp.ne.s32.totalorder %s256, %s257
    %p266 = scmp.eq.s32.totalorder %s21, 0
    %p267 = por %p265, %p266
    %p268 = scmp.ne.s32.totalorder %s256, %s257
    %p269 = scmp.eq.s32.totalorder %s22, 2
    %p270 = por %p268, %p269
    %p272 = scmp.ne.s32.totalorder %s257, %s271
    %p273 = scmp.eq.s32.totalorder %s22, 0
    %p274 = por %p272, %p273
    %p275 = scmp.le.s32.totalorder 1, %s16
    %p276 = scmp.lt.s32.totalorder %s16, 4
    %p277 = pnand %p275, %p276
    %p278 = pneg %p277
    // Predicated region
    $region9: #{tpu_custom_call.1} parent=5 // pred_check
      _
    $region10: #{tpu_custom_call.1} parent=5 // pred_check_branch
      %280 = sbr.rel (%p277) target = $region12
    $region11: #{tpu_custom_call.1} parent=5 // pred_region
      %s281 = ssub.s32 %s16, 1
      // Predicated region
      $region13: #{tpu_custom_call.1} parent=11 // pred_check
        %p282 = pneg %p99
      $region14: #{tpu_custom_call.1} parent=11 // pred_check_branch
        %284 = sbr.rel (%p282) target = $region16
      $region15: #{tpu_custom_call.1} parent=11 // pred_region
        _
      $region16: #{tpu_custom_call.1} parent=11 // pred_fallthru
        _
      // Predicated region
      $region17: #{tpu_custom_call.1} parent=11 // pred_check
        %p285 = pneg %p120
      $region18: #{tpu_custom_call.1} parent=11 // pred_check_branch
        %287 = sbr.rel (%p285) target = $region20
      $region19: #{tpu_custom_call.1} parent=11 // pred_region
        _
      $region20: #{tpu_custom_call.1} parent=11 // pred_fallthru
        _
      // Predicated region
      $region21: #{tpu_custom_call.1} parent=11 // pred_check
        %p288 = pneg %p141
      $region22: #{tpu_custom_call.1} parent=11 // pred_check_branch
        %290 = sbr.rel (%p288) target = $region24
      $region23: #{tpu_custom_call.1} parent=11 // pred_region
        _
      $region24: #{tpu_custom_call.1} parent=11 // pred_fallthru
        _
      // Predicated region
      $region25: #{tpu_custom_call.1} parent=11 // pred_check
        %p291 = pneg %p162
      $region26: #{tpu_custom_call.1} parent=11 // pred_check_branch
        %293 = sbr.rel (%p291) target = $region28
      $region27: #{tpu_custom_call.1} parent=11 // pred_region
        _
      $region28: #{tpu_custom_call.1} parent=11 // pred_fallthru
        _
      // Predicated region
      $region29: #{tpu_custom_call.1} parent=11 // pred_check
        %p294 = pneg %p183
      $region30: #{tpu_custom_call.1} parent=11 // pred_check_branch
        %296 = sbr.rel (%p294) target = $region32
      $region31: #{tpu_custom_call.1} parent=11 // pred_region
        _
      $region32: #{tpu_custom_call.1} parent=11 // pred_fallthru
        _
      // Predicated region
      $region33: #{tpu_custom_call.1} parent=11 // pred_check
        %p297 = pneg %p204
      $region34: #{tpu_custom_call.1} parent=11 // pred_check_branch
        %299 = sbr.rel (%p297) target = $region36
      $region35: #{tpu_custom_call.1} parent=11 // pred_region
        _
      $region36: #{tpu_custom_call.1} parent=11 // pred_fallthru
        _
      // Predicated region
      $region37: #{tpu_custom_call.1} parent=11 // pred_check
        %p300 = pneg %p225
      $region38: #{tpu_custom_call.1} parent=11 // pred_check_branch
        %302 = sbr.rel (%p300) target = $region40
      $region39: #{tpu_custom_call.1} parent=11 // pred_region
        _
      $region40: #{tpu_custom_call.1} parent=11 // pred_fallthru
        _
      // Predicated region
      $region41: #{tpu_custom_call.1} parent=11 // pred_check
        %p303 = pneg %p246
      $region42: #{tpu_custom_call.1} parent=11 // pred_check_branch
        %305 = sbr.rel (%p303) target = $region44
      $region43: #{tpu_custom_call.1} parent=11 // pred_region
        _
      $region44: #{tpu_custom_call.1} parent=11 // pred_fallthru
        _
    $region12: #{tpu_custom_call.1} parent=5 // pred_fallthru
      _
    %p306 = scmp.lt.s32.totalorder %s16, 3
    // Predicated region
    $region45: #{tpu_custom_call.1} parent=5 // pred_check
      %p307 = pneg %p306
    $region46: #{tpu_custom_call.1} parent=5 // pred_check_branch
      %309 = sbr.rel (%p307) target = $region48
    $region47: #{tpu_custom_call.1} parent=5 // pred_region
      // Predicated region
      $region49: #{tpu_custom_call.1} parent=47 // pred_check
        %p310 = pneg %p40
      $region50: #{tpu_custom_call.1} parent=47 // pred_check_branch
        %312 = sbr.rel (%p310) target = $region52
      $region51: #{tpu_custom_call.1} parent=47 // pred_region
        %p313 = scmp.lt.s32.totalorder %s16, 1
        %s314 = scalar_select %p313, %s16, 1
        %s315 = smul.u32 4, %s314
        %p316 = scmp.lt.s32.totalorder %s315, 7
        %s317 = scalar_select %p316, %s315, 7
        %s318 = smul.addr %s317, 8
        %s319 = scalar_lea.vmem %s0, %s318
        %p320 = scmp.lt.s32.totalorder %s16, 1
        %s321 = scalar_select %p320, %s16, 1
        %s322 = smul.u32 4, %s321
      $region52: #{tpu_custom_call.1} parent=47 // pred_fallthru
        _
      // Predicated region
      $region53: #{tpu_custom_call.1} parent=47 // pred_check
        %p323 = pneg %p72
      $region54: #{tpu_custom_call.1} parent=47 // pred_check_branch
        %325 = sbr.rel (%p323) target = $region56
      $region55: #{tpu_custom_call.1} parent=47 // pred_region
        %p326 = scmp.lt.s32.totalorder %s16, 1
        %s327 = scalar_select %p326, %s16, 1
        %s328 = ssub.s32 1, %s327
        %s329 = smul.u32 4, %s328
        %p330 = scmp.lt.s32.totalorder %s329, 7
        %s331 = scalar_select %p330, %s329, 7
        %s332 = smul.addr %s331, 8
        %s333 = scalar_lea.vmem %s1, %s332
        %p334 = scmp.lt.s32.totalorder %s16, 1
        %s335 = scalar_select %p334, %s16, 1
        %s336 = ssub.s32 1, %s335
        %s337 = smul.u32 4, %s336
      $region56: #{tpu_custom_call.1} parent=47 // pred_fallthru
        _
    $region48: #{tpu_custom_call.1} parent=5 // pred_fallthru
      _
    %p338 = scmp.le.s32.totalorder 1, %s16
    %p339 = scmp.lt.s32.totalorder %s16, 4
    %p340 = pnand %p338, %p339
    %p341 = pneg %p340
    // Predicated region
    $region57: #{tpu_custom_call.1} parent=5 // pred_check
      _
    $region58: #{tpu_custom_call.1} parent=5 // pred_check_branch
      %343 = sbr.rel (%p340) target = $region60
    $region59: #{tpu_custom_call.1} parent=5 // pred_region
      %s344 = ssub.s32 %s16, 1
      %p345 = scmp.lt.s32.totalorder %s21, 1
      %s346 = scalar_select %p345, %s21, 1
      %s347 = smul.u32 4, %s346
      %p348 = scmp.lt.s32.totalorder %s347, 7
      %s349 = scalar_select %p348, %s347, 7
      %s350 = smul.addr %s349, 8
      %s351 = scalar_lea.vmem %s0, %s350
      %p352 = pneg %p46
      %p353 = pneg %p43
      %p354 = scmp.lt.s32.totalorder %s21, 1
      %s355 = scalar_select %p354, %s21, 1
      %s356 = ssub.s32 1, %s355
      %s357 = smul.u32 4, %s356
      %p358 = scmp.lt.s32.totalorder %s357, 7
      %s359 = scalar_select %p358, %s357, 7
      %s360 = smul.addr %s359, 8
      %s361 = scalar_lea.vmem %s1, %s360
      %p362 = pneg %p78
      %p363 = pneg %p75
      %p364 = pneg %p99
      %p365 = pneg %p96
      %p366 = pneg %p120
      %p367 = pneg %p117
      %p368 = pneg %p141
      %p369 = pneg %p138
      %p370 = pneg %p162
      %p371 = pneg %p159
      %p372 = pneg %p183
      %p373 = pneg %p180
      %p374 = pneg %p204
      %p375 = pneg %p201
      %p376 = pneg %p225
      %p377 = pneg %p222
      %p378 = pneg %p246
      %p379 = pneg %p243
      %p380 = pneg %p267
      %p381 = pneg %p264
      %p382 = scmp.lt.s32.totalorder %s21, 1
      %s383 = scalar_select %p382, %s21, 1
      %s384 = smul.u32 4, %s383
      %p385 = scmp.lt.s32.totalorder %s384, 7
      %s386 = scalar_select %p385, %s384, 7
      %s387 = smul.addr %s386, 8
      %s388 = scalar_lea.vmem %s0, %s387
      %p389 = scmp.lt.s32.totalorder %s21, 1
      %s390 = scalar_select %p389, %s21, 1
      %s391 = smul.u32 4, %s390
      %p392 = scmp.lt.s32.totalorder %s21, 1
      %s393 = scalar_select %p392, %s21, 1
      %s394 = ssub.s32 1, %s393
      %s395 = smul.u32 4, %s394
      %p396 = scmp.lt.s32.totalorder %s395, 7
      %s397 = scalar_select %p396, %s395, 7
      %s398 = smul.addr %s397, 8
      %s399 = scalar_lea.vmem %s1, %s398
      %p400 = scmp.lt.s32.totalorder %s21, 1
      %s401 = scalar_select %p400, %s21, 1
      %s402 = ssub.s32 1, %s401
      %s403 = smul.u32 4, %s402
      %p404 = scmp.eq.s32.totalorder %s21, 0
      // Predicated region
      $region61: #{tpu_custom_call.1} parent=59 // pred_check
        %p405 = pneg %p404
      $region62: #{tpu_custom_call.1} parent=59 // pred_check_branch
        %407 = sbr.rel (%p405) target = $region64
      $region63: #{tpu_custom_call.1} parent=59 // pred_region
        %vm408 = vcmask 261120
        %409 = vst.msk [vmem:[#allocation4] sm:$0xff] %vm408, 0.0
        %410 = vst.msk [vmem:[#allocation4 + $0x8] sm:$0xff] %vm408, 0.0
        %411 = vst.msk [vmem:[#allocation5] sm:$0xff] %vm408, 0.0
        %412 = vst.msk [vmem:[#allocation5 + $0x8] sm:$0xff] %vm408, 0.0
        %v413 = vld [vmem:[%s388] sm:$0xff]
        %v414 = vld [vmem:[%s388 + $0x8] sm:$0xff]
        %v415 = vld [vmem:[%s388 + $0x10] sm:$0xff]
        %v416 = vld [vmem:[%s388 + $0x18] sm:$0xff]
        %v417 = vld [vmem:[%s2] sm:$0xff]
        %v418 = vld [vmem:[%s2 + $0x8] sm:$0xff]
        %v419 = vld [vmem:[%s4] sm:$0x1]
        %v421 = vlaneseq
        %v422 = vshrl.u32 %v421, 7
        %v423 = vsub.s32 0, %v422
        %v424 = vrot.slane %v419, %v423
        %vm426 = vcmask 130048
        %v428 = vsel %vm426, %v413, 0
        %v431 = vsel %vm426, %v414, 0
        %v434 = vsel %vm426, %v415, 0
        %v437 = vsel %vm426, %v416, 0
        %439 = vmatprep.subr.mxu0 0.0
        %440 = vmatpush1.msra.mxu0 %v417
        %441 = vmatprep.subr.mxu0 0.0
        %442 = vmatpush1.msra.mxu0 %v418
        %443 = vmatprep.subr.mxu0 0.0
        %444 = vmatpush1.msra.mxu0 0.0
        %445 = vmatprep.subr.mxu0 0.0
        %446 = vmatpush1.msra.mxu0 0.0
        %447 = vmatprep.subr.mxu0 0.0
        %448 = vmatpush1.msra.mxu0 0.0
        %449 = vmatprep.subr.mxu0 0.0
        %450 = vmatpush1.msra.mxu0 0.0
        %451 = vmatprep.subr.mxu0 0.0
        %452 = vmatpush1.msra.mxu0 0.0
        %453 = vmatprep.subr.mxu0 0.0
        %454 = vmatpush1.msra.mxu0 0.0
        %455 = vmatprep.subr.mxu0 0.0
        %456 = vmatpush1.msra.mxu0 0.0
        %457 = vmatprep.subr.mxu0 0.0
        %458 = vmatpush1.msra.mxu0 0.0
        %459 = vmatprep.subr.mxu0 0.0
        %460 = vmatpush1.msra.mxu0 0.0
        %461 = vmatprep.subr.mxu0 0.0
        %462 = vmatpush1.msra.mxu0 0.0
        %463 = vmatprep.subr.mxu0 0.0
        %464 = vmatpush1.msra.mxu0 0.0
        %465 = vmatprep.subr.mxu0 0.0
        %466 = vmatpush1.msra.mxu0 0.0
        %467 = vmatprep.subr.mxu0 0.0
        %468 = vmatpush1.msra.mxu0 0.0
        %469 = vmatprep.subr.mxu0 0.0
        %470 = vmatpush1.msra.mxu0 0.0
        %471 = vmatprep.subr.mxu0 0.0
        %472 = vmatpush1.msra.mxu0 0.0
        %473 = vmatprep.subr.mxu0 0.0
        %474 = vmatpush1.msra.mxu0 0.0
        %475 = vmatprep.subr.mxu0 0.0
        %476 = vmatpush1.msra.mxu0 0.0
        %477 = vmatprep.subr.mxu0 0.0
        %478 = vmatpush1.msra.mxu0 0.0
        %479 = vmatprep.subr.mxu0 0.0
        %480 = vmatpush1.msra.mxu0 0.0
        %481 = vmatprep.subr.mxu0 0.0
        %482 = vmatpush1.msra.mxu0 0.0
        %483 = vmatprep.subr.mxu0 0.0
        %484 = vmatpush1.msra.mxu0 0.0
        %485 = vmatprep.subr.mxu0 0.0
        %486 = vmatpush1.msra.mxu0 0.0
        %487 = vmatprep.subr.mxu0 0.0
        %488 = vmatpush1.msra.mxu0 0.0
        %489 = vmatprep.subr.mxu0 0.0
        %490 = vmatpush1.msra.mxu0 0.0
        %491 = vmatprep.subr.mxu0 0.0
        %492 = vmatpush1.msra.mxu0 0.0
        %493 = vmatprep.subr.mxu0 0.0
        %494 = vmatpush1.msra.mxu0 0.0
        %495 = vmatprep.subr.mxu0 0.0
        %496 = vmatpush1.msra.mxu0 0.0
        %497 = vmatprep.subr.mxu0 0.0
        %498 = vmatpush1.msra.mxu0 0.0
        %499 = vmatprep.subr.mxu0 0.0
        %500 = vmatpush1.msra.mxu0 0.0
        %501 = vmatprep.subr.mxu0 0.0
        %502 = vmatpush1.msra.mxu0 0.0
        %503 = vmatprep.mubr.f32.mxu0 0.0
        %504 = vmatmul.mubr.f32.gmra.mrb[0].mxu0 %v428
        %v505 = vpop.f32.mrb[0].mxu0
        %v506 = vadd.f32 %v424, %v505
        %v507 = vpop.f32.mrb[0].mxu0
        %508 = vmatprep.mubr.f32.mxu0 0.0
        %509 = vmatmul.mubr.f32.gmra.mrb[0].mxu0 %v431
        %v510 = vpop.f32.mrb[0].mxu0
        %v511 = vadd.f32 %v424, %v510
        %v512 = vpop.f32.mrb[0].mxu0
        %513 = vmatprep.mubr.f32.mxu0 0.0
        %514 = vmatmul.mubr.f32.gmra.mrb[0].mxu0 %v434
        %v515 = vpop.f32.mrb[0].mxu0
        %v516 = vadd.f32 %v424, %v515
        %v517 = vpop.f32.mrb[0].mxu0
        %518 = vmatprep.mubr.f32.mxu0 0.0
        %519 = vmatmul.mubr.f32.gmra.mrb[0].mxu0 %v437
        %v520 = vpop.f32.mrb[0].mxu0
        %v521 = vadd.f32 %v424, %v520
        %v522 = vpop.f32.mrb[0].mxu0
        %523 = vdwg.mxu0
        %524 = vst [vmem:[#allocation2] sm:$0xff] %v506
        %525 = vst [vmem:[#allocation2 + $0x8] sm:$0xff] %v511
        %526 = vst [vmem:[#allocation2 + $0x10] sm:$0xff] %v516
        %527 = vst [vmem:[#allocation2 + $0x18] sm:$0xff] %v521
        %v528 = vld [vmem:[%s399] sm:$0xff]
        %v529 = vld [vmem:[%s399 + $0x8] sm:$0xff]
        %v530 = vld [vmem:[%s399 + $0x10] sm:$0xff]
        %v531 = vld [vmem:[%s399 + $0x18] sm:$0xff]
        %v532 = vld [vmem:[%s3] sm:$0xff]
        %v533 = vld [vmem:[%s3 + $0x8] sm:$0xff]
        %v534 = vld [vmem:[%s5] sm:$0x1]
        %v536 = vlaneseq
        %v537 = vshrl.u32 %v536, 7
        %v538 = vsub.s32 0, %v537
        %v539 = vrot.slane %v534, %v538
        %v542 = vsel %vm426, %v528, 0
        %v545 = vsel %vm426, %v529, 0
        %v548 = vsel %vm426, %v530, 0
        %v551 = vsel %vm426, %v531, 0
        %553 = vmatprep.subr.mxu0 0.0
        %554 = vmatpush1.msra.mxu0 %v532
        %555 = vmatprep.subr.mxu0 0.0
        %556 = vmatpush1.msra.mxu0 %v533
        %557 = vmatprep.subr.mxu0 0.0
        %558 = vmatpush1.msra.mxu0 0.0
        %559 = vmatprep.subr.mxu0 0.0
        %560 = vmatpush1.msra.mxu0 0.0
        %561 = vmatprep.subr.mxu0 0.0
        %562 = vmatpush1.msra.mxu0 0.0
        %563 = vmatprep.subr.mxu0 0.0
        %564 = vmatpush1.msra.mxu0 0.0
        %565 = vmatprep.subr.mxu0 0.0
        %566 = vmatpush1.msra.mxu0 0.0
        %567 = vmatprep.subr.mxu0 0.0
        %568 = vmatpush1.msra.mxu0 0.0
        %569 = vmatprep.subr.mxu0 0.0
        %570 = vmatpush1.msra.mxu0 0.0
        %571 = vmatprep.subr.mxu0 0.0
        %572 = vmatpush1.msra.mxu0 0.0
        %573 = vmatprep.subr.mxu0 0.0
        %574 = vmatpush1.msra.mxu0 0.0
        %575 = vmatprep.subr.mxu0 0.0
        %576 = vmatpush1.msra.mxu0 0.0
        %577 = vmatprep.subr.mxu0 0.0
        %578 = vmatpush1.msra.mxu0 0.0
        %579 = vmatprep.subr.mxu0 0.0
        %580 = vmatpush1.msra.mxu0 0.0
        %581 = vmatprep.subr.mxu0 0.0
        %582 = vmatpush1.msra.mxu0 0.0
        %583 = vmatprep.subr.mxu0 0.0
        %584 = vmatpush1.msra.mxu0 0.0
        %585 = vmatprep.subr.mxu0 0.0
        %586 = vmatpush1.msra.mxu0 0.0
        %587 = vmatprep.subr.mxu0 0.0
        %588 = vmatpush1.msra.mxu0 0.0
        %589 = vmatprep.subr.mxu0 0.0
        %590 = vmatpush1.msra.mxu0 0.0
        %591 = vmatprep.subr.mxu0 0.0
        %592 = vmatpush1.msra.mxu0 0.0
        %593 = vmatprep.subr.mxu0 0.0
        %594 = vmatpush1.msra.mxu0 0.0
        %595 = vmatprep.subr.mxu0 0.0
        %596 = vmatpush1.msra.mxu0 0.0
        %597 = vmatprep.subr.mxu0 0.0
        %598 = vmatpush1.msra.mxu0 0.0
        %599 = vmatprep.subr.mxu0 0.0
        %600 = vmatpush1.msra.mxu0 0.0
        %601 = vmatprep.subr.mxu0 0.0
        %602 = vmatpush1.msra.mxu0 0.0
        %603 = vmatprep.subr.mxu0 0.0
        %604 = vmatpush1.msra.mxu0 0.0
        %605 = vmatprep.subr.mxu0 0.0
        %606 = vmatpush1.msra.mxu0 0.0
        %607 = vmatprep.subr.mxu0 0.0
        %608 = vmatpush1.msra.mxu0 0.0
        %609 = vmatprep.subr.mxu0 0.0
        %610 = vmatpush1.msra.mxu0 0.0
        %611 = vmatprep.subr.mxu0 0.0
        %612 = vmatpush1.msra.mxu0 0.0
        %613 = vmatprep.subr.mxu0 0.0
        %614 = vmatpush1.msra.mxu0 0.0
        %615 = vmatprep.subr.mxu0 0.0
        %616 = vmatpush1.msra.mxu0 0.0
        %617 = vmatprep.mubr.f32.mxu0 0.0
        %618 = vmatmul.mubr.f32.gmra.mrb[0].mxu0 %v542
        %v619 = vpop.f32.mrb[0].mxu0
        %v620 = vadd.f32 %v539, %v619
        %v621 = vpop.f32.mrb[0].mxu0
        %622 = vmatprep.mubr.f32.mxu0 0.0
        %623 = vmatmul.mubr.f32.gmra.mrb[0].mxu0 %v545
        %v624 = vpop.f32.mrb[0].mxu0
        %v625 = vadd.f32 %v539, %v624
        %v626 = vpop.f32.mrb[0].mxu0
        %627 = vmatprep.mubr.f32.mxu0 0.0
        %628 = vmatmul.mubr.f32.gmra.mrb[0].mxu0 %v548
        %v629 = vpop.f32.mrb[0].mxu0
        %v630 = vadd.f32 %v539, %v629
        %v631 = vpop.f32.mrb[0].mxu0
        %632 = vmatprep.mubr.f32.mxu0 0.0
        %633 = vmatmul.mubr.f32.gmra.mrb[0].mxu0 %v551
        %v634 = vpop.f32.mrb[0].mxu0
        %v635 = vadd.f32 %v539, %v634
        %v636 = vpop.f32.mrb[0].mxu0
        %637 = vdwg.mxu0
        %638 = vst [vmem:[#allocation3] sm:$0xff] %v620
        %639 = vst [vmem:[#allocation3 + $0x8] sm:$0xff] %v625
        %640 = vst [vmem:[#allocation3 + $0x10] sm:$0xff] %v630
        %641 = vst [vmem:[#allocation3 + $0x18] sm:$0xff] %v635
      $region64: #{tpu_custom_call.1} parent=59 // pred_fallthru
        _
      %p642 = scmp.gt.s32.totalorder %s21, 0
      %p643 = scmp.lt.s32.totalorder %s21, 2
      %p644 = pnand %p642, %p643
      %p645 = pneg %p644
      // Predicated region
      $region65: #{tpu_custom_call.1} parent=59 // pred_check
        _
      $region66: #{tpu_custom_call.1} parent=59 // pred_check_branch
        %647 = sbr.rel (%p644) target = $region68
      $region67: #{tpu_custom_call.1} parent=59 // pred_region
        %s648 = sand.u32 %s21, 1
        %v649 = vld [vmem:[%s388] sm:$0xff]
        %v650 = vld [vmem:[%s388 + $0x8] sm:$0xff]
        %v651 = vld [vmem:[%s388 + $0x10] sm:$0xff]
        %v652 = vld [vmem:[%s388 + $0x18] sm:$0xff]
        %v653 = vld [vmem:[%s2] sm:$0xff]
        %v654 = vld [vmem:[%s2 + $0x8] sm:$0xff]
        %v655 = vld [vmem:[%s4] sm:$0x1]
        %v657 = vlaneseq
        %v658 = vshrl.u32 %v657, 7
        %v659 = vsub.s32 0, %v658
        %v660 = vrot.slane %v655, %v659
        %vm662 = vcmask 130048
        %v664 = vsel %vm662, %v649, 0
        %v667 = vsel %vm662, %v650, 0
        %v670 = vsel %vm662, %v651, 0
        %v673 = vsel %vm662, %v652, 0
        %675 = vmatprep.subr.mxu0 0.0
        %676 = vmatpush1.msra.mxu0 %v653
        %677 = vmatprep.subr.mxu0 0.0
        %678 = vmatpush1.msra.mxu0 %v654
        %679 = vmatprep.subr.mxu0 0.0
        %680 = vmatpush1.msra.mxu0 0.0
        %681 = vmatprep.subr.mxu0 0.0
        %682 = vmatpush1.msra.mxu0 0.0
        %683 = vmatprep.subr.mxu0 0.0
        %684 = vmatpush1.msra.mxu0 0.0
        %685 = vmatprep.subr.mxu0 0.0
        %686 = vmatpush1.msra.mxu0 0.0
        %687 = vmatprep.subr.mxu0 0.0
        %688 = vmatpush1.msra.mxu0 0.0
        %689 = vmatprep.subr.mxu0 0.0
        %690 = vmatpush1.msra.mxu0 0.0
        %691 = vmatprep.subr.mxu0 0.0
        %692 = vmatpush1.msra.mxu0 0.0
        %693 = vmatprep.subr.mxu0 0.0
        %694 = vmatpush1.msra.mxu0 0.0
        %695 = vmatprep.subr.mxu0 0.0
        %696 = vmatpush1.msra.mxu0 0.0
        %697 = vmatprep.subr.mxu0 0.0
        %698 = vmatpush1.msra.mxu0 0.0
        %699 = vmatprep.subr.mxu0 0.0
        %700 = vmatpush1.msra.mxu0 0.0
        %701 = vmatprep.subr.mxu0 0.0
        %702 = vmatpush1.msra.mxu0 0.0
        %703 = vmatprep.subr.mxu0 0.0
        %704 = vmatpush1.msra.mxu0 0.0
        %705 = vmatprep.subr.mxu0 0.0
        %706 = vmatpush1.msra.mxu0 0.0
        %707 = vmatprep.subr.mxu0 0.0
        %708 = vmatpush1.msra.mxu0 0.0
        %709 = vmatprep.subr.mxu0 0.0
        %710 = vmatpush1.msra.mxu0 0.0
        %711 = vmatprep.subr.mxu0 0.0
        %712 = vmatpush1.msra.mxu0 0.0
        %713 = vmatprep.subr.mxu0 0.0
        %714 = vmatpush1.msra.mxu0 0.0
        %715 = vmatprep.subr.mxu0 0.0
        %716 = vmatpush1.msra.mxu0 0.0
        %717 = vmatprep.subr.mxu0 0.0
        %718 = vmatpush1.msra.mxu0 0.0
        %719 = vmatprep.subr.mxu0 0.0
        %720 = vmatpush1.msra.mxu0 0.0
        %721 = vmatprep.subr.mxu0 0.0
        %722 = vmatpush1.msra.mxu0 0.0
        %723 = vmatprep.subr.mxu0 0.0
        %724 = vmatpush1.msra.mxu0 0.0
        %725 = vmatprep.subr.mxu0 0.0
        %726 = vmatpush1.msra.mxu0 0.0
        %727 = vmatprep.subr.mxu0 0.0
        %728 = vmatpush1.msra.mxu0 0.0
        %729 = vmatprep.subr.mxu0 0.0
        %730 = vmatpush1.msra.mxu0 0.0
        %731 = vmatprep.subr.mxu0 0.0
        %732 = vmatpush1.msra.mxu0 0.0
        %733 = vmatprep.subr.mxu0 0.0
        %734 = vmatpush1.msra.mxu0 0.0
        %735 = vmatprep.subr.mxu0 0.0
        %736 = vmatpush1.msra.mxu0 0.0
        %737 = vmatprep.subr.mxu0 0.0
        %738 = vmatpush1.msra.mxu0 0.0
        %739 = vmatprep.mubr.f32.mxu0 0.0
        %740 = vmatmul.mubr.f32.gmra.mrb[0].mxu0 %v664
        %v741 = vpop.f32.mrb[0].mxu0
        %v742 = vadd.f32 %v660, %v741
        %v743 = vpop.f32.mrb[0].mxu0
        %744 = vmatprep.mubr.f32.mxu0 0.0
        %745 = vmatmul.mubr.f32.gmra.mrb[0].mxu0 %v667
        %v746 = vpop.f32.mrb[0].mxu0
        %v747 = vadd.f32 %v660, %v746
        %v748 = vpop.f32.mrb[0].mxu0
        %749 = vmatprep.mubr.f32.mxu0 0.0
        %750 = vmatmul.mubr.f32.gmra.mrb[0].mxu0 %v670
        %v751 = vpop.f32.mrb[0].mxu0
        %v752 = vadd.f32 %v660, %v751
        %v753 = vpop.f32.mrb[0].mxu0
        %754 = vmatprep.mubr.f32.mxu0 0.0
        %755 = vmatmul.mubr.f32.gmra.mrb[0].mxu0 %v673
        %v756 = vpop.f32.mrb[0].mxu0
        %v757 = vadd.f32 %v660, %v756
        %v758 = vpop.f32.mrb[0].mxu0
        %759 = vdwg.mxu0
        %s760 = smul.u32 %s648, 32
        %s761 = scalar_lea.vmem [#allocation2], %s760
        %762 = vst [vmem:[%s761] sm:$0xff] %v742
        %763 = vst [vmem:[%s761 + $0x8] sm:$0xff] %v747
        %764 = vst [vmem:[%s761 + $0x10] sm:$0xff] %v752
        %765 = vst [vmem:[%s761 + $0x18] sm:$0xff] %v757
        %v766 = vld [vmem:[%s399] sm:$0xff]
        %v767 = vld [vmem:[%s399 + $0x8] sm:$0xff]
        %v768 = vld [vmem:[%s399 + $0x10] sm:$0xff]
        %v769 = vld [vmem:[%s399 + $0x18] sm:$0xff]
        %v770 = vld [vmem:[%s3] sm:$0xff]
        %v771 = vld [vmem:[%s3 + $0x8] sm:$0xff]
        %v772 = vld [vmem:[%s5] sm:$0x1]
        %v774 = vlaneseq
        %v775 = vshrl.u32 %v774, 7
        %v776 = vsub.s32 0, %v775
        %v777 = vrot.slane %v772, %v776
        %v780 = vsel %vm662, %v766, 0
        %v783 = vsel %vm662, %v767, 0
        %v786 = vsel %vm662, %v768, 0
        %v789 = vsel %vm662, %v769, 0
        %791 = vmatprep.subr.mxu0 0.0
        %792 = vmatpush1.msra.mxu0 %v770
        %793 = vmatprep.subr.mxu0 0.0
        %794 = vmatpush1.msra.mxu0 %v771
        %795 = vmatprep.subr.mxu0 0.0
        %796 = vmatpush1.msra.mxu0 0.0
        %797 = vmatprep.subr.mxu0 0.0
        %798 = vmatpush1.msra.mxu0 0.0
        %799 = vmatprep.subr.mxu0 0.0
        %800 = vmatpush1.msra.mxu0 0.0
        %801 = vmatprep.subr.mxu0 0.0
        %802 = vmatpush1.msra.mxu0 0.0
        %803 = vmatprep.subr.mxu0 0.0
        %804 = vmatpush1.msra.mxu0 0.0
        %805 = vmatprep.subr.mxu0 0.0
        %806 = vmatpush1.msra.mxu0 0.0
        %807 = vmatprep.subr.mxu0 0.0
        %808 = vmatpush1.msra.mxu0 0.0
        %809 = vmatprep.subr.mxu0 0.0
        %810 = vmatpush1.msra.mxu0 0.0
        %811 = vmatprep.subr.mxu0 0.0
        %812 = vmatpush1.msra.mxu0 0.0
        %813 = vmatprep.subr.mxu0 0.0
        %814 = vmatpush1.msra.mxu0 0.0
        %815 = vmatprep.subr.mxu0 0.0
        %816 = vmatpush1.msra.mxu0 0.0
        %817 = vmatprep.subr.mxu0 0.0
        %818 = vmatpush1.msra.mxu0 0.0
        %819 = vmatprep.subr.mxu0 0.0
        %820 = vmatpush1.msra.mxu0 0.0
        %821 = vmatprep.subr.mxu0 0.0
        %822 = vmatpush1.msra.mxu0 0.0
        %823 = vmatprep.subr.mxu0 0.0
        %824 = vmatpush1.msra.mxu0 0.0
        %825 = vmatprep.subr.mxu0 0.0
        %826 = vmatpush1.msra.mxu0 0.0
        %827 = vmatprep.subr.mxu0 0.0
        %828 = vmatpush1.msra.mxu0 0.0
        %829 = vmatprep.subr.mxu0 0.0
        %830 = vmatpush1.msra.mxu0 0.0
        %831 = vmatprep.subr.mxu0 0.0
        %832 = vmatpush1.msra.mxu0 0.0
        %833 = vmatprep.subr.mxu0 0.0
        %834 = vmatpush1.msra.mxu0 0.0
        %835 = vmatprep.subr.mxu0 0.0
        %836 = vmatpush1.msra.mxu0 0.0
        %837 = vmatprep.subr.mxu0 0.0
        %838 = vmatpush1.msra.mxu0 0.0
        %839 = vmatprep.subr.mxu0 0.0
        %840 = vmatpush1.msra.mxu0 0.0
        %841 = vmatprep.subr.mxu0 0.0
        %842 = vmatpush1.msra.mxu0 0.0
        %843 = vmatprep.subr.mxu0 0.0
        %844 = vmatpush1.msra.mxu0 0.0
        %845 = vmatprep.subr.mxu0 0.0
        %846 = vmatpush1.msra.mxu0 0.0
        %847 = vmatprep.subr.mxu0 0.0
        %848 = vmatpush1.msra.mxu0 0.0
        %849 = vmatprep.subr.mxu0 0.0
        %850 = vmatpush1.msra.mxu0 0.0
        %851 = vmatprep.subr.mxu0 0.0
        %852 = vmatpush1.msra.mxu0 0.0
        %853 = vmatprep.subr.mxu0 0.0
        %854 = vmatpush1.msra.mxu0 0.0
        %855 = vmatprep.mubr.f32.mxu0 0.0
        %856 = vmatmul.mubr.f32.gmra.mrb[0].mxu0 %v780
        %v857 = vpop.f32.mrb[0].mxu0
        %v858 = vadd.f32 %v777, %v857
        %v859 = vpop.f32.mrb[0].mxu0
        %860 = vmatprep.mubr.f32.mxu0 0.0
        %861 = vmatmul.mubr.f32.gmra.mrb[0].mxu0 %v783
        %v862 = vpop.f32.mrb[0].mxu0
        %v863 = vadd.f32 %v777, %v862
        %v864 = vpop.f32.mrb[0].mxu0
        %865 = vmatprep.mubr.f32.mxu0 0.0
        %866 = vmatmul.mubr.f32.gmra.mrb[0].mxu0 %v786
        %v867 = vpop.f32.mrb[0].mxu0
        %v868 = vadd.f32 %v777, %v867
        %v869 = vpop.f32.mrb[0].mxu0
        %870 = vmatprep.mubr.f32.mxu0 0.0
        %871 = vmatmul.mubr.f32.gmra.mrb[0].mxu0 %v789
        %v872 = vpop.f32.mrb[0].mxu0
        %v873 = vadd.f32 %v777, %v872
        %v874 = vpop.f32.mrb[0].mxu0
        %875 = vdwg.mxu0
        %s876 = scalar_lea.vmem [#allocation3], %s760
        %877 = vst [vmem:[%s876] sm:$0xff] %v858
        %878 = vst [vmem:[%s876 + $0x8] sm:$0xff] %v863
        %879 = vst [vmem:[%s876 + $0x10] sm:$0xff] %v868
        %880 = vst [vmem:[%s876 + $0x18] sm:$0xff] %v873
        %s881 = ssub.s32 %s21, 1
        %s882 = sand.u32 %s881, 1
        %v883 = vld [vmem:[%s6] sm:$0xff]
        %v884 = vld [vmem:[%s6 + $0x8] sm:$0xff]
        %v885 = vld [vmem:[%s6 + $0x10] sm:$0xff]
        %v886 = vld [vmem:[%s6 + $0x18] sm:$0xff]
        %v887 = vld [vmem:[%s7] sm:$0xff]
        %v888 = vld [vmem:[%s7 + $0x8] sm:$0xff]
        %v889 = vld [vmem:[%s7 + $0x10] sm:$0xff]
        %v890 = vld [vmem:[%s7 + $0x18] sm:$0xff]
        %v891 = vld [vmem:[#allocation4] sm:$0xff]
        %v892 = vld [vmem:[#allocation5] sm:$0xff]
        %v893 = vld [vmem:[#allocation4 + $0x8] sm:$0xff]
        %v894 = vld [vmem:[#allocation5 + $0x8] sm:$0xff]
        %vm895 = vcmask 261120
        %v897 = vsel %vm895, %v891, 0
        %899 = vmatprep.subr.mxu0 0.0
        %900 = vmatpush1.msra.mxu0 %v883
        %901 = vmatprep.subr.mxu0 0.0
        %902 = vmatpush1.msra.mxu0 %v884
        %903 = vmatprep.subr.mxu0 0.0
        %904 = vmatpush1.msra.mxu0 %v885
        %905 = vmatprep.subr.mxu0 0.0
        %906 = vmatpush1.msra.mxu0 %v886
        %907 = vmatprep.subr.mxu0 0.0
        %908 = vmatpush1.msra.mxu0 0.0
        %909 = vmatprep.subr.mxu0 0.0
        %910 = vmatpush1.msra.mxu0 0.0
        %911 = vmatprep.subr.mxu0 0.0
        %912 = vmatpush1.msra.mxu0 0.0
        %913 = vmatprep.subr.mxu0 0.0
        %914 = vmatpush1.msra.mxu0 0.0
        %915 = vmatprep.subr.mxu0 0.0
        %916 = vmatpush1.msra.mxu0 0.0
        %917 = vmatprep.subr.mxu0 0.0
        %918 = vmatpush1.msra.mxu0 0.0
        %919 = vmatprep.subr.mxu0 0.0
        %920 = vmatpush1.msra.mxu0 0.0
        %921 = vmatprep.subr.mxu0 0.0
        %922 = vmatpush1.msra.mxu0 0.0
        %923 = vmatprep.subr.mxu0 0.0
        %924 = vmatpush1.msra.mxu0 0.0
        %925 = vmatprep.subr.mxu0 0.0
        %926 = vmatpush1.msra.mxu0 0.0
        %927 = vmatprep.subr.mxu0 0.0
        %928 = vmatpush1.msra.mxu0 0.0
        %929 = vmatprep.subr.mxu0 0.0
        %930 = vmatpush1.msra.mxu0 0.0
        %931 = vmatprep.subr.mxu0 0.0
        %932 = vmatpush1.msra.mxu0 0.0
        %933 = vmatprep.subr.mxu0 0.0
        %934 = vmatpush1.msra.mxu0 0.0
        %935 = vmatprep.subr.mxu0 0.0
        %936 = vmatpush1.msra.mxu0 0.0
        %937 = vmatprep.subr.mxu0 0.0
        %938 = vmatpush1.msra.mxu0 0.0
        %939 = vmatprep.subr.mxu0 0.0
        %940 = vmatpush1.msra.mxu0 0.0
        %941 = vmatprep.subr.mxu0 0.0
        %942 = vmatpush1.msra.mxu0 0.0
        %943 = vmatprep.subr.mxu0 0.0
        %944 = vmatpush1.msra.mxu0 0.0
        %945 = vmatprep.subr.mxu0 0.0
        %946 = vmatpush1.msra.mxu0 0.0
        %947 = vmatprep.subr.mxu0 0.0
        %948 = vmatpush1.msra.mxu0 0.0
        %949 = vmatprep.subr.mxu0 0.0
        %950 = vmatpush1.msra.mxu0 0.0
        %951 = vmatprep.subr.mxu0 0.0
        %952 = vmatpush1.msra.mxu0 0.0
        %953 = vmatprep.subr.mxu0 0.0
        %954 = vmatpush1.msra.mxu0 0.0
        %955 = vmatprep.subr.mxu0 0.0
        %956 = vmatpush1.msra.mxu0 0.0
        %957 = vmatprep.subr.mxu0 0.0
        %958 = vmatpush1.msra.mxu0 0.0
        %959 = vmatprep.subr.mxu0 0.0
        %960 = vmatpush1.msra.mxu0 0.0
        %961 = vmatprep.subr.mxu0 0.0
        %962 = vmatpush1.msra.mxu0 0.0
        %963 = vmatprep.mubr.f32.mxu0 0.0
        %964 = vmatmul.mubr.f32.gmra.mrb[0].mxu0 %v897
        %v965 = vpop.f32.mrb[0].mxu0
        %v966 = vadd.f32 0.0, %v965
        %v967 = vpop.f32.mrb[0].mxu0
        %968 = vdwg.mxu0
        %v970 = vsel %vm895, %v893, 0
        %972 = vmatprep.subr.mxu0 0.0
        %973 = vmatpush1.msra.mxu0 %v887
        %974 = vmatprep.subr.mxu0 0.0
        %975 = vmatpush1.msra.mxu0 %v888
        %976 = vmatprep.subr.mxu0 0.0
        %977 = vmatpush1.msra.mxu0 %v889
        %978 = vmatprep.subr.mxu0 0.0
        %979 = vmatpush1.msra.mxu0 %v890
        %980 = vmatprep.subr.mxu0 0.0
        %981 = vmatpush1.msra.mxu0 0.0
        %982 = vmatprep.subr.mxu0 0.0
        %983 = vmatpush1.msra.mxu0 0.0
        %984 = vmatprep.subr.mxu0 0.0
        %985 = vmatpush1.msra.mxu0 0.0
        %986 = vmatprep.subr.mxu0 0.0
        %987 = vmatpush1.msra.mxu0 0.0
        %988 = vmatprep.subr.mxu0 0.0
        %989 = vmatpush1.msra.mxu0 0.0
        %990 = vmatprep.subr.mxu0 0.0
        %991 = vmatpush1.msra.mxu0 0.0
        %992 = vmatprep.subr.mxu0 0.0
        %993 = vmatpush1.msra.mxu0 0.0
        %994 = vmatprep.subr.mxu0 0.0
        %995 = vmatpush1.msra.mxu0 0.0
        %996 = vmatprep.subr.mxu0 0.0
        %997 = vmatpush1.msra.mxu0 0.0
        %998 = vmatprep.subr.mxu0 0.0
        %999 = vmatpush1.msra.mxu0 0.0
        %1000 = vmatprep.subr.mxu0 0.0
        %1001 = vmatpush1.msra.mxu0 0.0
        %1002 = vmatprep.subr.mxu0 0.0
        %1003 = vmatpush1.msra.mxu0 0.0
        %1004 = vmatprep.subr.mxu0 0.0
        %1005 = vmatpush1.msra.mxu0 0.0
        %1006 = vmatprep.subr.mxu0 0.0
        %1007 = vmatpush1.msra.mxu0 0.0
        %1008 = vmatprep.subr.mxu0 0.0
        %1009 = vmatpush1.msra.mxu0 0.0
        %1010 = vmatprep.subr.mxu0 0.0
        %1011 = vmatpush1.msra.mxu0 0.0
        %1012 = vmatprep.subr.mxu0 0.0
        %1013 = vmatpush1.msra.mxu0 0.0
        %1014 = vmatprep.subr.mxu0 0.0
        %1015 = vmatpush1.msra.mxu0 0.0
        %1016 = vmatprep.subr.mxu0 0.0
        %1017 = vmatpush1.msra.mxu0 0.0
        %1018 = vmatprep.subr.mxu0 0.0
        %1019 = vmatpush1.msra.mxu0 0.0
        %1020 = vmatprep.subr.mxu0 0.0
        %1021 = vmatpush1.msra.mxu0 0.0
        %1022 = vmatprep.subr.mxu0 0.0
        %1023 = vmatpush1.msra.mxu0 0.0
        %1024 = vmatprep.subr.mxu0 0.0
        %1025 = vmatpush1.msra.mxu0 0.0
        %1026 = vmatprep.subr.mxu0 0.0
        %1027 = vmatpush1.msra.mxu0 0.0
        %1028 = vmatprep.subr.mxu0 0.0
        %1029 = vmatpush1.msra.mxu0 0.0
        %1030 = vmatprep.subr.mxu0 0.0
        %1031 = vmatpush1.msra.mxu0 0.0
        %1032 = vmatprep.subr.mxu0 0.0
        %1033 = vmatpush1.msra.mxu0 0.0
        %1034 = vmatprep.subr.mxu0 0.0
        %1035 = vmatpush1.msra.mxu0 0.0
        %1036 = vmatprep.mubr.f32.mxu0 0.0
        %1037 = vmatmul.mubr.f32.gmra.mrb[0].mxu0 %v970
        %v1038 = vpop.f32.mrb[0].mxu0
        %v1039 = vadd.f32 0.0, %v1038
        %v1040 = vpop.f32.mrb[0].mxu0
        %1041 = vdwg.mxu0
        %s1042 = smul.u32 %s882, 32
        %s1043 = sadd.s32 0, %s1042
        %s1044 = scalar_lea.vmem [#allocation2], %s1043
        %v1045 = vld [vmem:[%s1044] sm:$0xff]
        %v1046 = vadd.f32 %v1045, %v966
        %s1047 = sadd.s32 24, %s1042
        %s1048 = scalar_lea.vmem [#allocation3], %s1047
        %v1049 = vld [vmem:[%s1048] sm:$0xff]
        %v1050 = vadd.f32 %v1049, %v1039
        %v1051 = vxor.u32 %v1046, 2147483648
        %v1052 = vmul.f32 %v1051, 1.442695
        %v1053 = vpow.pop %v1052
        %v1054 = vadd.f32 %v1053, 1.0
        %v1055 = vrcp.pop %v1054
        %v1056 = vmul.f32 1.0, %v1055
        %v1057 = vtanh.pop %v1046
        %1059 = vrot.lane.b32.xlu0 %v892, 32
        %v1060 = vpop.permute.xlu0 %1059
        %v1062 = vmul.f32 %v1056, %v1060
        %1064 = vrot.lane.b32.xlu0 %v1057, 32
        %v1065 = vpop.permute.xlu0 %1064
        %v1067 = vmul.f32 %v1056, %v1065
        %1069 = vrot.lane.b32.xlu0 %v1067, 32
        %v1070 = vpop.permute.xlu0 %1069
        %v1072 = vadd.f32 %v1062, %v1070
        %v1073 = vtanh.pop %v1072
        %1075 = vrot.lane.b32.xlu0 %v1073, 32
        %v1076 = vpop.permute.xlu0 %1075
        %v1078 = vmul.f32 %v1056, %v1076
        %v1079 = vxor.u32 %v1050, 2147483648
        %v1080 = vmul.f32 %v1079, 1.442695
        %v1081 = vpow.pop %v1080
        %v1082 = vadd.f32 %v1081, 1.0
        %v1083 = vrcp.pop %v1082
        %v1084 = vmul.f32 1.0, %v1083
        %v1085 = vtanh.pop %v1050
        %1087 = vrot.lane.b32.xlu0 %v894, 32
        %v1088 = vpop.permute.xlu0 %1087
        %v1090 = vmul.f32 %v1084, %v1088
        %1092 = vrot.lane.b32.xlu0 %v1085, 32
        %v1093 = vpop.permute.xlu0 %1092
        %v1095 = vmul.f32 %v1084, %v1093
        %1097 = vrot.lane.b32.xlu0 %v1095, 32
        %v1098 = vpop.permute.xlu0 %1097
        %v1100 = vadd.f32 %v1090, %v1098
        %v1101 = vtanh.pop %v1100
        %1103 = vrot.lane.b32.xlu0 %v1101, 32
        %v1104 = vpop.permute.xlu0 %1103
        %v1106 = vmul.f32 %v1084, %v1104
        %1108 = vrot.lane.b32.xlu0 %v1078, 64
        %v1109 = vpop.permute.xlu0 %1108
        %v1110 = vsel %vm895, %v1109, 0
        %1112 = vmatprep.subr.mxu0 0.0
        %1113 = vmatpush1.msra.mxu0 %v883
        %1114 = vmatprep.subr.mxu0 0.0
        %1115 = vmatpush1.msra.mxu0 %v884
        %1116 = vmatprep.subr.mxu0 0.0
        %1117 = vmatpush1.msra.mxu0 %v885
        %1118 = vmatprep.subr.mxu0 0.0
        %1119 = vmatpush1.msra.mxu0 %v886
        %1120 = vmatprep.subr.mxu0 0.0
        %1121 = vmatpush1.msra.mxu0 0.0
        %1122 = vmatprep.subr.mxu0 0.0
        %1123 = vmatpush1.msra.mxu0 0.0
        %1124 = vmatprep.subr.mxu0 0.0
        %1125 = vmatpush1.msra.mxu0 0.0
        %1126 = vmatprep.subr.mxu0 0.0
        %1127 = vmatpush1.msra.mxu0 0.0
        %1128 = vmatprep.subr.mxu0 0.0
        %1129 = vmatpush1.msra.mxu0 0.0
        %1130 = vmatprep.subr.mxu0 0.0
        %1131 = vmatpush1.msra.mxu0 0.0
        %1132 = vmatprep.subr.mxu0 0.0
        %1133 = vmatpush1.msra.mxu0 0.0
        %1134 = vmatprep.subr.mxu0 0.0
        %1135 = vmatpush1.msra.mxu0 0.0
        %1136 = vmatprep.subr.mxu0 0.0
        %1137 = vmatpush1.msra.mxu0 0.0
        %1138 = vmatprep.subr.mxu0 0.0
        %1139 = vmatpush1.msra.mxu0 0.0
        %1140 = vmatprep.subr.mxu0 0.0
        %1141 = vmatpush1.msra.mxu0 0.0
        %1142 = vmatprep.subr.mxu0 0.0
        %1143 = vmatpush1.msra.mxu0 0.0
        %1144 = vmatprep.subr.mxu0 0.0
        %1145 = vmatpush1.msra.mxu0 0.0
        %1146 = vmatprep.subr.mxu0 0.0
        %1147 = vmatpush1.msra.mxu0 0.0
        %1148 = vmatprep.subr.mxu0 0.0
        %1149 = vmatpush1.msra.mxu0 0.0
        %1150 = vmatprep.subr.mxu0 0.0
        %1151 = vmatpush1.msra.mxu0 0.0
        %1152 = vmatprep.subr.mxu0 0.0
        %1153 = vmatpush1.msra.mxu0 0.0
        %1154 = vmatprep.subr.mxu0 0.0
        %1155 = vmatpush1.msra.mxu0 0.0
        %1156 = vmatprep.subr.mxu0 0.0
        %1157 = vmatpush1.msra.mxu0 0.0
        %1158 = vmatprep.subr.mxu0 0.0
        %1159 = vmatpush1.msra.mxu0 0.0
        %1160 = vmatprep.subr.mxu0 0.0
        %1161 = vmatpush1.msra.mxu0 0.0
        %1162 = vmatprep.subr.mxu0 0.0
        %1163 = vmatpush1.msra.mxu0 0.0
        %1164 = vmatprep.subr.mxu0 0.0
        %1165 = vmatpush1.msra.mxu0 0.0
        %1166 = vmatprep.subr.mxu0 0.0
        %1167 = vmatpush1.msra.mxu0 0.0
        %1168 = vmatprep.subr.mxu0 0.0
        %1169 = vmatpush1.msra.mxu0 0.0
        %1170 = vmatprep.subr.mxu0 0.0
        %1171 = vmatpush1.msra.mxu0 0.0
        %1172 = vmatprep.subr.mxu0 0.0
        %1173 = vmatpush1.msra.mxu0 0.0
        %1174 = vmatprep.subr.mxu0 0.0
        %1175 = vmatpush1.msra.mxu0 0.0
        %1176 = vmatprep.mubr.f32.mxu0 0.0
        %1177 = vmatmul.mubr.f32.gmra.mrb[0].mxu0 %v1110
        %v1178 = vpop.f32.mrb[0].mxu0
        %v1179 = vadd.f32 0.0, %v1178
        %v1180 = vpop.f32.mrb[0].mxu0
        %1181 = vdwg.mxu0
        %1183 = vrot.lane.b32.xlu0 %v1106, 64
        %v1184 = vpop.permute.xlu0 %1183
        %v1185 = vsel %vm895, %v1184, 0
        %1187 = vmatprep.subr.mxu0 0.0
        %1188 = vmatpush1.msra.mxu0 %v887
        %1189 = vmatprep.subr.mxu0 0.0
        %1190 = vmatpush1.msra.mxu0 %v888
        %1191 = vmatprep.subr.mxu0 0.0
        %1192 = vmatpush1.msra.mxu0 %v889
        %1193 = vmatprep.subr.mxu0 0.0
        %1194 = vmatpush1.msra.mxu0 %v890
        %1195 = vmatprep.subr.mxu0 0.0
        %1196 = vmatpush1.msra.mxu0 0.0
        %1197 = vmatprep.subr.mxu0 0.0
        %1198 = vmatpush1.msra.mxu0 0.0
        %1199 = vmatprep.subr.mxu0 0.0
        %1200 = vmatpush1.msra.mxu0 0.0
        %1201 = vmatprep.subr.mxu0 0.0
        %1202 = vmatpush1.msra.mxu0 0.0
        %1203 = vmatprep.subr.mxu0 0.0
        %1204 = vmatpush1.msra.mxu0 0.0
        %1205 = vmatprep.subr.mxu0 0.0
        %1206 = vmatpush1.msra.mxu0 0.0
        %1207 = vmatprep.subr.mxu0 0.0
        %1208 = vmatpush1.msra.mxu0 0.0
        %1209 = vmatprep.subr.mxu0 0.0
        %1210 = vmatpush1.msra.mxu0 0.0
        %1211 = vmatprep.subr.mxu0 0.0
        %1212 = vmatpush1.msra.mxu0 0.0
        %1213 = vmatprep.subr.mxu0 0.0
        %1214 = vmatpush1.msra.mxu0 0.0
        %1215 = vmatprep.subr.mxu0 0.0
        %1216 = vmatpush1.msra.mxu0 0.0
        %1217 = vmatprep.subr.mxu0 0.0
        %1218 = vmatpush1.msra.mxu0 0.0
        %1219 = vmatprep.subr.mxu0 0.0
        %1220 = vmatpush1.msra.mxu0 0.0
        %1221 = vmatprep.subr.mxu0 0.0
        %1222 = vmatpush1.msra.mxu0 0.0
        %1223 = vmatprep.subr.mxu0 0.0
        %1224 = vmatpush1.msra.mxu0 0.0
        %1225 = vmatprep.subr.mxu0 0.0
        %1226 = vmatpush1.msra.mxu0 0.0
        %1227 = vmatprep.subr.mxu0 0.0
        %1228 = vmatpush1.msra.mxu0 0.0
        %1229 = vmatprep.subr.mxu0 0.0
        %1230 = vmatpush1.msra.mxu0 0.0
        %1231 = vmatprep.subr.mxu0 0.0
        %1232 = vmatpush1.msra.mxu0 0.0
        %1233 = vmatprep.subr.mxu0 0.0
        %1234 = vmatpush1.msra.mxu0 0.0
        %1235 = vmatprep.subr.mxu0 0.0
        %1236 = vmatpush1.msra.mxu0 0.0
        %1237 = vmatprep.subr.mxu0 0.0
        %1238 = vmatpush1.msra.mxu0 0.0
        %1239 = vmatprep.subr.mxu0 0.0
        %1240 = vmatpush1.msra.mxu0 0.0
        %1241 = vmatprep.subr.mxu0 0.0
        %1242 = vmatpush1.msra.mxu0 0.0
        %1243 = vmatprep.subr.mxu0 0.0
        %1244 = vmatpush1.msra.mxu0 0.0
        %1245 = vmatprep.subr.mxu0 0.0
        %1246 = vmatpush1.msra.mxu0 0.0
        %1247 = vmatprep.subr.mxu0 0.0
        %1248 = vmatpush1.msra.mxu0 0.0
        %1249 = vmatprep.subr.mxu0 0.0
        %1250 = vmatpush1.msra.mxu0 0.0
        %1251 = vmatprep.mubr.f32.mxu0 0.0
        %1252 = vmatmul.mubr.f32.gmra.mrb[0].mxu0 %v1185
        %v1253 = vpop.f32.mrb[0].mxu0
        %v1254 = vadd.f32 0.0, %v1253
        %v1255 = vpop.f32.mrb[0].mxu0
        %1256 = vdwg.mxu0
        %s1257 = sadd.s32 8, %s1042
        %s1258 = scalar_lea.vmem [#allocation2], %s1257
        %v1259 = vld [vmem:[%s1258] sm:$0xff]
        %v1260 = vadd.f32 %v1259, %v1179
        %s1261 = sadd.s32 16, %s1042
        %s1262 = scalar_lea.vmem [#allocation3], %s1261
        %v1263 = vld [vmem:[%s1262] sm:$0xff]
        %v1264 = vadd.f32 %v1263, %v1254
        %v1265 = vxor.u32 %v1260, 2147483648
        %v1266 = vmul.f32 %v1265, 1.442695
        %v1267 = vpow.pop %v1266
        %v1268 = vadd.f32 %v1267, 1.0
        %v1269 = vrcp.pop %v1268
        %v1270 = vmul.f32 1.0, %v1269
        %v1271 = vtanh.pop %v1260
        %v1272 = vmul.f32 %v1270, %v1072
        %1274 = vrot.lane.b32.xlu0 %v1271, 32
        %v1275 = vpop.permute.xlu0 %1274
        %v1277 = vmul.f32 %v1270, %v1275
        %1279 = vrot.lane.b32.xlu0 %v1277, 32
        %v1280 = vpop.permute.xlu0 %1279
        %v1282 = vadd.f32 %v1272, %v1280
        %v1283 = vtanh.pop %v1282
        %1285 = vrot.lane.b32.xlu0 %v1283, 32
        %v1286 = vpop.permute.xlu0 %1285
        %v1288 = vmul.f32 %v1270, %v1286
        %v1289 = vxor.u32 %v1264, 2147483648
        %v1290 = vmul.f32 %v1289, 1.442695
        %v1291 = vpow.pop %v1290
        %v1292 = vadd.f32 %v1291, 1.0
        %v1293 = vrcp.pop %v1292
        %v1294 = vmul.f32 1.0, %v1293
        %v1295 = vtanh.pop %v1264
        %v1296 = vmul.f32 %v1294, %v1100
        %1298 = vrot.lane.b32.xlu0 %v1295, 32
        %v1299 = vpop.permute.xlu0 %1298
        %v1301 = vmul.f32 %v1294, %v1299
        %1303 = vrot.lane.b32.xlu0 %v1301, 32
        %v1304 = vpop.permute.xlu0 %1303
        %v1306 = vadd.f32 %v1296, %v1304
        %v1307 = vtanh.pop %v1306
        %1309 = vrot.lane.b32.xlu0 %v1307, 32
        %v1310 = vpop.permute.xlu0 %1309
        %v1312 = vmul.f32 %v1294, %v1310
        %1314 = vrot.lane.b32.xlu0 %v1288, 64
        %v1315 = vpop.permute.xlu0 %1314
        %v1316 = vsel %vm895, %v1315, 0
        %1318 = vmatprep.subr.mxu0 0.0
        %1319 = vmatpush1.msra.mxu0 %v883
        %1320 = vmatprep.subr.mxu0 0.0
        %1321 = vmatpush1.msra.mxu0 %v884
        %1322 = vmatprep.subr.mxu0 0.0
        %1323 = vmatpush1.msra.mxu0 %v885
        %1324 = vmatprep.subr.mxu0 0.0
        %1325 = vmatpush1.msra.mxu0 %v886
        %1326 = vmatprep.subr.mxu0 0.0
        %1327 = vmatpush1.msra.mxu0 0.0
        %1328 = vmatprep.subr.mxu0 0.0
        %1329 = vmatpush1.msra.mxu0 0.0
        %1330 = vmatprep.subr.mxu0 0.0
        %1331 = vmatpush1.msra.mxu0 0.0
        %1332 = vmatprep.subr.mxu0 0.0
        %1333 = vmatpush1.msra.mxu0 0.0
        %1334 = vmatprep.subr.mxu0 0.0
        %1335 = vmatpush1.msra.mxu0 0.0
        %1336 = vmatprep.subr.mxu0 0.0
        %1337 = vmatpush1.msra.mxu0 0.0
        %1338 = vmatprep.subr.mxu0 0.0
        %1339 = vmatpush1.msra.mxu0 0.0
        %1340 = vmatprep.subr.mxu0 0.0
        %1341 = vmatpush1.msra.mxu0 0.0
        %1342 = vmatprep.subr.mxu0 0.0
        %1343 = vmatpush1.msra.mxu0 0.0
        %1344 = vmatprep.subr.mxu0 0.0
        %1345 = vmatpush1.msra.mxu0 0.0
        %1346 = vmatprep.subr.mxu0 0.0
        %1347 = vmatpush1.msra.mxu0 0.0
        %1348 = vmatprep.subr.mxu0 0.0
        %1349 = vmatpush1.msra.mxu0 0.0
        %1350 = vmatprep.subr.mxu0 0.0
        %1351 = vmatpush1.msra.mxu0 0.0
        %1352 = vmatprep.subr.mxu0 0.0
        %1353 = vmatpush1.msra.mxu0 0.0
        %1354 = vmatprep.subr.mxu0 0.0
        %1355 = vmatpush1.msra.mxu0 0.0
        %1356 = vmatprep.subr.mxu0 0.0
        %1357 = vmatpush1.msra.mxu0 0.0
        %1358 = vmatprep.subr.mxu0 0.0
        %1359 = vmatpush1.msra.mxu0 0.0
        %1360 = vmatprep.subr.mxu0 0.0
        %1361 = vmatpush1.msra.mxu0 0.0
        %1362 = vmatprep.subr.mxu0 0.0
        %1363 = vmatpush1.msra.mxu0 0.0
        %1364 = vmatprep.subr.mxu0 0.0
        %1365 = vmatpush1.msra.mxu0 0.0
        %1366 = vmatprep.subr.mxu0 0.0
        %1367 = vmatpush1.msra.mxu0 0.0
        %1368 = vmatprep.subr.mxu0 0.0
        %1369 = vmatpush1.msra.mxu0 0.0
        %1370 = vmatprep.subr.mxu0 0.0
        %1371 = vmatpush1.msra.mxu0 0.0
        %1372 = vmatprep.subr.mxu0 0.0
        %1373 = vmatpush1.msra.mxu0 0.0
        %1374 = vmatprep.subr.mxu0 0.0
        %1375 = vmatpush1.msra.mxu0 0.0
        %1376 = vmatprep.subr.mxu0 0.0
        %1377 = vmatpush1.msra.mxu0 0.0
        %1378 = vmatprep.subr.mxu0 0.0
        %1379 = vmatpush1.msra.mxu0 0.0
        %1380 = vmatprep.subr.mxu0 0.0
        %1381 = vmatpush1.msra.mxu0 0.0
        %1382 = vmatprep.mubr.f32.mxu0 0.0
        %1383 = vmatmul.mubr.f32.gmra.mrb[0].mxu0 %v1316
        %v1384 = vpop.f32.mrb[0].mxu0
        %v1385 = vadd.f32 0.0, %v1384
        %v1386 = vpop.f32.mrb[0].mxu0
        %1387 = vdwg.mxu0
        %1389 = vrot.lane.b32.xlu0 %v1312, 64
        %v1390 = vpop.permute.xlu0 %1389
        %v1391 = vsel %vm895, %v1390, 0
        %1393 = vmatprep.subr.mxu0 0.0
        %1394 = vmatpush1.msra.mxu0 %v887
        %1395 = vmatprep.subr.mxu0 0.0
        %1396 = vmatpush1.msra.mxu0 %v888
        %1397 = vmatprep.subr.mxu0 0.0
        %1398 = vmatpush1.msra.mxu0 %v889
        %1399 = vmatprep.subr.mxu0 0.0
        %1400 = vmatpush1.msra.mxu0 %v890
        %1401 = vmatprep.subr.mxu0 0.0
        %1402 = vmatpush1.msra.mxu0 0.0
        %1403 = vmatprep.subr.mxu0 0.0
        %1404 = vmatpush1.msra.mxu0 0.0
        %1405 = vmatprep.subr.mxu0 0.0
        %1406 = vmatpush1.msra.mxu0 0.0
        %1407 = vmatprep.subr.mxu0 0.0
        %1408 = vmatpush1.msra.mxu0 0.0
        %1409 = vmatprep.subr.mxu0 0.0
        %1410 = vmatpush1.msra.mxu0 0.0
        %1411 = vmatprep.subr.mxu0 0.0
        %1412 = vmatpush1.msra.mxu0 0.0
        %1413 = vmatprep.subr.mxu0 0.0
        %1414 = vmatpush1.msra.mxu0 0.0
        %1415 = vmatprep.subr.mxu0 0.0
        %1416 = vmatpush1.msra.mxu0 0.0
        %1417 = vmatprep.subr.mxu0 0.0
        %1418 = vmatpush1.msra.mxu0 0.0
        %1419 = vmatprep.subr.mxu0 0.0
        %1420 = vmatpush1.msra.mxu0 0.0
        %1421 = vmatprep.subr.mxu0 0.0
        %1422 = vmatpush1.msra.mxu0 0.0
        %1423 = vmatprep.subr.mxu0 0.0
        %1424 = vmatpush1.msra.mxu0 0.0
        %1425 = vmatprep.subr.mxu0 0.0
        %1426 = vmatpush1.msra.mxu0 0.0
        %1427 = vmatprep.subr.mxu0 0.0
        %1428 = vmatpush1.msra.mxu0 0.0
        %1429 = vmatprep.subr.mxu0 0.0
        %1430 = vmatpush1.msra.mxu0 0.0
        %1431 = vmatprep.subr.mxu0 0.0
        %1432 = vmatpush1.msra.mxu0 0.0
        %1433 = vmatprep.subr.mxu0 0.0
        %1434 = vmatpush1.msra.mxu0 0.0
        %1435 = vmatprep.subr.mxu0 0.0
        %1436 = vmatpush1.msra.mxu0 0.0
        %1437 = vmatprep.subr.mxu0 0.0
        %1438 = vmatpush1.msra.mxu0 0.0
        %1439 = vmatprep.subr.mxu0 0.0
        %1440 = vmatpush1.msra.mxu0 0.0
        %1441 = vmatprep.subr.mxu0 0.0
        %1442 = vmatpush1.msra.mxu0 0.0
        %1443 = vmatprep.subr.mxu0 0.0
        %1444 = vmatpush1.msra.mxu0 0.0
        %1445 = vmatprep.subr.mxu0 0.0
        %1446 = vmatpush1.msra.mxu0 0.0
        %1447 = vmatprep.subr.mxu0 0.0
        %1448 = vmatpush1.msra.mxu0 0.0
        %1449 = vmatprep.subr.mxu0 0.0
        %1450 = vmatpush1.msra.mxu0 0.0
        %1451 = vmatprep.subr.mxu0 0.0
        %1452 = vmatpush1.msra.mxu0 0.0
        %1453 = vmatprep.subr.mxu0 0.0
        %1454 = vmatpush1.msra.mxu0 0.0
        %1455 = vmatprep.subr.mxu0 0.0
        %1456 = vmatpush1.msra.mxu0 0.0
        %1457 = vmatprep.mubr.f32.mxu0 0.0
        %1458 = vmatmul.mubr.f32.gmra.mrb[0].mxu0 %v1391
        %v1459 = vpop.f32.mrb[0].mxu0
        %v1460 = vadd.f32 0.0, %v1459
        %v1461 = vpop.f32.mrb[0].mxu0
        %1462 = vdwg.mxu0
        %s1463 = scalar_lea.vmem [#allocation2], %s1261
        %v1464 = vld [vmem:[%s1463] sm:$0xff]
        %v1465 = vadd.f32 %v1464, %v1385
        %s1466 = scalar_lea.vmem [#allocation3], %s1257
        %v1467 = vld [vmem:[%s1466] sm:$0xff]
        %v1468 = vadd.f32 %v1467, %v1460
        %v1469 = vxor.u32 %v1465, 2147483648
        %v1470 = vmul.f32 %v1469, 1.442695
        %v1471 = vpow.pop %v1470
        %v1472 = vadd.f32 %v1471, 1.0
        %v1473 = vrcp.pop %v1472
        %v1474 = vmul.f32 1.0, %v1473
        %v1475 = vtanh.pop %v1465
        %v1476 = vmul.f32 %v1474, %v1282
        %1478 = vrot.lane.b32.xlu0 %v1475, 32
        %v1479 = vpop.permute.xlu0 %1478
        %v1481 = vmul.f32 %v1474, %v1479
        %1483 = vrot.lane.b32.xlu0 %v1481, 32
        %v1484 = vpop.permute.xlu0 %1483
        %v1486 = vadd.f32 %v1476, %v1484
        %v1487 = vtanh.pop %v1486
        %1489 = vrot.lane.b32.xlu0 %v1487, 32
        %v1490 = vpop.permute.xlu0 %1489
        %v1492 = vmul.f32 %v1474, %v1490
        %v1493 = vxor.u32 %v1468, 2147483648
        %v1494 = vmul.f32 %v1493, 1.442695
        %v1495 = vpow.pop %v1494
        %v1496 = vadd.f32 %v1495, 1.0
        %v1497 = vrcp.pop %v1496
        %v1498 = vmul.f32 1.0, %v1497
        %v1499 = vtanh.pop %v1468
        %v1500 = vmul.f32 %v1498, %v1306
        %1502 = vrot.lane.b32.xlu0 %v1499, 32
        %v1503 = vpop.permute.xlu0 %1502
        %v1505 = vmul.f32 %v1498, %v1503
        %1507 = vrot.lane.b32.xlu0 %v1505, 32
        %v1508 = vpop.permute.xlu0 %1507
        %v1510 = vadd.f32 %v1500, %v1508
        %v1511 = vtanh.pop %v1510
        %1513 = vrot.lane.b32.xlu0 %v1511, 32
        %v1514 = vpop.permute.xlu0 %1513
        %v1516 = vmul.f32 %v1498, %v1514
        %1518 = vrot.lane.b32.xlu0 %v1492, 64
        %v1519 = vpop.permute.xlu0 %1518
        %v1520 = vsel %vm895, %v1519, 0
        %1522 = vmatprep.subr.mxu0 0.0
        %1523 = vmatpush1.msra.mxu0 %v883
        %1524 = vmatprep.subr.mxu0 0.0
        %1525 = vmatpush1.msra.mxu0 %v884
        %1526 = vmatprep.subr.mxu0 0.0
        %1527 = vmatpush1.msra.mxu0 %v885
        %1528 = vmatprep.subr.mxu0 0.0
        %1529 = vmatpush1.msra.mxu0 %v886
        %1530 = vmatprep.subr.mxu0 0.0
        %1531 = vmatpush1.msra.mxu0 0.0
        %1532 = vmatprep.subr.mxu0 0.0
        %1533 = vmatpush1.msra.mxu0 0.0
        %1534 = vmatprep.subr.mxu0 0.0
        %1535 = vmatpush1.msra.mxu0 0.0
        %1536 = vmatprep.subr.mxu0 0.0
        %1537 = vmatpush1.msra.mxu0 0.0
        %1538 = vmatprep.subr.mxu0 0.0
        %1539 = vmatpush1.msra.mxu0 0.0
        %1540 = vmatprep.subr.mxu0 0.0
        %1541 = vmatpush1.msra.mxu0 0.0
        %1542 = vmatprep.subr.mxu0 0.0
        %1543 = vmatpush1.msra.mxu0 0.0
        %1544 = vmatprep.subr.mxu0 0.0
        %1545 = vmatpush1.msra.mxu0 0.0
        %1546 = vmatprep.subr.mxu0 0.0
        %1547 = vmatpush1.msra.mxu0 0.0
        %1548 = vmatprep.subr.mxu0 0.0
        %1549 = vmatpush1.msra.mxu0 0.0
        %1550 = vmatprep.subr.mxu0 0.0
        %1551 = vmatpush1.msra.mxu0 0.0
        %1552 = vmatprep.subr.mxu0 0.0
        %1553 = vmatpush1.msra.mxu0 0.0
        %1554 = vmatprep.subr.mxu0 0.0
        %1555 = vmatpush1.msra.mxu0 0.0
        %1556 = vmatprep.subr.mxu0 0.0
        %1557 = vmatpush1.msra.mxu0 0.0
        %1558 = vmatprep.subr.mxu0 0.0
        %1559 = vmatpush1.msra.mxu0 0.0
        %1560 = vmatprep.subr.mxu0 0.0
        %1561 = vmatpush1.msra.mxu0 0.0
        %1562 = vmatprep.subr.mxu0 0.0
        %1563 = vmatpush1.msra.mxu0 0.0
        %1564 = vmatprep.subr.mxu0 0.0
        %1565 = vmatpush1.msra.mxu0 0.0
        %1566 = vmatprep.subr.mxu0 0.0
        %1567 = vmatpush1.msra.mxu0 0.0
        %1568 = vmatprep.subr.mxu0 0.0
        %1569 = vmatpush1.msra.mxu0 0.0
        %1570 = vmatprep.subr.mxu0 0.0
        %1571 = vmatpush1.msra.mxu0 0.0
        %1572 = vmatprep.subr.mxu0 0.0
        %1573 = vmatpush1.msra.mxu0 0.0
        %1574 = vmatprep.subr.mxu0 0.0
        %1575 = vmatpush1.msra.mxu0 0.0
        %1576 = vmatprep.subr.mxu0 0.0
        %1577 = vmatpush1.msra.mxu0 0.0
        %1578 = vmatprep.subr.mxu0 0.0
        %1579 = vmatpush1.msra.mxu0 0.0
        %1580 = vmatprep.subr.mxu0 0.0
        %1581 = vmatpush1.msra.mxu0 0.0
        %1582 = vmatprep.subr.mxu0 0.0
        %1583 = vmatpush1.msra.mxu0 0.0
        %1584 = vmatprep.subr.mxu0 0.0
        %1585 = vmatpush1.msra.mxu0 0.0
        %1586 = vmatprep.mubr.f32.mxu0 0.0
        %1587 = vmatmul.mubr.f32.gmra.mrb[0].mxu0 %v1520
        %v1588 = vpop.f32.mrb[0].mxu0
        %v1589 = vadd.f32 0.0, %v1588
        %v1590 = vpop.f32.mrb[0].mxu0
        %1591 = vdwg.mxu0
        %1593 = vrot.lane.b32.xlu0 %v1516, 64
        %v1594 = vpop.permute.xlu0 %1593
        %v1595 = vsel %vm895, %v1594, 0
        %1597 = vmatprep.subr.mxu0 0.0
        %1598 = vmatpush1.msra.mxu0 %v887
        %1599 = vmatprep.subr.mxu0 0.0
        %1600 = vmatpush1.msra.mxu0 %v888
        %1601 = vmatprep.subr.mxu0 0.0
        %1602 = vmatpush1.msra.mxu0 %v889
        %1603 = vmatprep.subr.mxu0 0.0
        %1604 = vmatpush1.msra.mxu0 %v890
        %1605 = vmatprep.subr.mxu0 0.0
        %1606 = vmatpush1.msra.mxu0 0.0
        %1607 = vmatprep.subr.mxu0 0.0
        %1608 = vmatpush1.msra.mxu0 0.0
        %1609 = vmatprep.subr.mxu0 0.0
        %1610 = vmatpush1.msra.mxu0 0.0
        %1611 = vmatprep.subr.mxu0 0.0
        %1612 = vmatpush1.msra.mxu0 0.0
        %1613 = vmatprep.subr.mxu0 0.0
        %1614 = vmatpush1.msra.mxu0 0.0
        %1615 = vmatprep.subr.mxu0 0.0
        %1616 = vmatpush1.msra.mxu0 0.0
        %1617 = vmatprep.subr.mxu0 0.0
        %1618 = vmatpush1.msra.mxu0 0.0
        %1619 = vmatprep.subr.mxu0 0.0
        %1620 = vmatpush1.msra.mxu0 0.0
        %1621 = vmatprep.subr.mxu0 0.0
        %1622 = vmatpush1.msra.mxu0 0.0
        %1623 = vmatprep.subr.mxu0 0.0
        %1624 = vmatpush1.msra.mxu0 0.0
        %1625 = vmatprep.subr.mxu0 0.0
        %1626 = vmatpush1.msra.mxu0 0.0
        %1627 = vmatprep.subr.mxu0 0.0
        %1628 = vmatpush1.msra.mxu0 0.0
        %1629 = vmatprep.subr.mxu0 0.0
        %1630 = vmatpush1.msra.mxu0 0.0
        %1631 = vmatprep.subr.mxu0 0.0
        %1632 = vmatpush1.msra.mxu0 0.0
        %1633 = vmatprep.subr.mxu0 0.0
        %1634 = vmatpush1.msra.mxu0 0.0
        %1635 = vmatprep.subr.mxu0 0.0
        %1636 = vmatpush1.msra.mxu0 0.0
        %1637 = vmatprep.subr.mxu0 0.0
        %1638 = vmatpush1.msra.mxu0 0.0
        %1639 = vmatprep.subr.mxu0 0.0
        %1640 = vmatpush1.msra.mxu0 0.0
        %1641 = vmatprep.subr.mxu0 0.0
        %1642 = vmatpush1.msra.mxu0 0.0
        %1643 = vmatprep.subr.mxu0 0.0
        %1644 = vmatpush1.msra.mxu0 0.0
        %1645 = vmatprep.subr.mxu0 0.0
        %1646 = vmatpush1.msra.mxu0 0.0
        %1647 = vmatprep.subr.mxu0 0.0
        %1648 = vmatpush1.msra.mxu0 0.0
        %1649 = vmatprep.subr.mxu0 0.0
        %1650 = vmatpush1.msra.mxu0 0.0
        %1651 = vmatprep.subr.mxu0 0.0
        %1652 = vmatpush1.msra.mxu0 0.0
        %1653 = vmatprep.subr.mxu0 0.0
        %1654 = vmatpush1.msra.mxu0 0.0
        %1655 = vmatprep.subr.mxu0 0.0
        %1656 = vmatpush1.msra.mxu0 0.0
        %1657 = vmatprep.subr.mxu0 0.0
        %1658 = vmatpush1.msra.mxu0 0.0
        %1659 = vmatprep.subr.mxu0 0.0
        %1660 = vmatpush1.msra.mxu0 0.0
        %1661 = vmatprep.mubr.f32.mxu0 0.0
        %1662 = vmatmul.mubr.f32.gmra.mrb[0].mxu0 %v1595
        %v1663 = vpop.f32.mrb[0].mxu0
        %v1664 = vadd.f32 0.0, %v1663
        %v1665 = vpop.f32.mrb[0].mxu0
        %1666 = vdwg.mxu0
        %s1667 = scalar_lea.vmem [#allocation2], %s1047
        %v1668 = vld [vmem:[%s1667] sm:$0xff]
        %v1669 = vadd.f32 %v1668, %v1589
        %s1670 = scalar_lea.vmem [#allocation3], %s1043
        %v1671 = vld [vmem:[%s1670] sm:$0xff]
        %v1672 = vadd.f32 %v1671, %v1664
        %v1673 = vxor.u32 %v1669, 2147483648
        %v1674 = vmul.f32 %v1673, 1.442695
        %v1675 = vpow.pop %v1674
        %v1676 = vadd.f32 %v1675, 1.0
        %v1677 = vrcp.pop %v1676
        %v1678 = vmul.f32 1.0, %v1677
        %v1679 = vtanh.pop %v1669
        %v1680 = vmul.f32 %v1678, %v1486
        %1682 = vrot.lane.b32.xlu0 %v1679, 32
        %v1683 = vpop.permute.xlu0 %1682
        %v1685 = vmul.f32 %v1678, %v1683
        %1687 = vrot.lane.b32.xlu0 %v1685, 32
        %v1688 = vpop.permute.xlu0 %1687
        %v1690 = vadd.f32 %v1680, %v1688
        %v1691 = vtanh.pop %v1690
        %1693 = vrot.lane.b32.xlu0 %v1691, 32
        %v1694 = vpop.permute.xlu0 %1693
        %v1696 = vmul.f32 %v1678, %v1694
        %v1697 = vxor.u32 %v1672, 2147483648
        %v1698 = vmul.f32 %v1697, 1.442695
        %v1699 = vpow.pop %v1698
        %v1700 = vadd.f32 %v1699, 1.0
        %v1701 = vrcp.pop %v1700
        %v1702 = vmul.f32 1.0, %v1701
        %v1703 = vtanh.pop %v1672
        %v1704 = vmul.f32 %v1702, %v1510
        %1706 = vrot.lane.b32.xlu0 %v1703, 32
        %v1707 = vpop.permute.xlu0 %1706
        %v1709 = vmul.f32 %v1702, %v1707
        %1711 = vrot.lane.b32.xlu0 %v1709, 32
        %v1712 = vpop.permute.xlu0 %1711
        %v1714 = vadd.f32 %v1704, %v1712
        %v1715 = vtanh.pop %v1714
        %1717 = vrot.lane.b32.xlu0 %v1715, 32
        %v1718 = vpop.permute.xlu0 %1717
        %v1720 = vmul.f32 %v1702, %v1718
        %1722 = vrot.lane.b32.xlu0 %v1696, 64
        %v1723 = vpop.permute.xlu0 %1722
        %1725 = vst.msk [vmem:[#allocation4] sm:$0xff] %vm895, %v1723
        %1727 = vrot.lane.b32.xlu0 %v1690, 96
        %v1728 = vpop.permute.xlu0 %1727
        %1730 = vst.msk [vmem:[#allocation5] sm:$0xff] %vm895, %v1728
        %1732 = vrot.lane.b32.xlu0 %v1720, 64
        %v1733 = vpop.permute.xlu0 %1732
        %1735 = vst.msk [vmem:[#allocation4 + $0x8] sm:$0xff] %vm895, %v1733
        %1737 = vrot.lane.b32.xlu0 %v1714, 96
        %v1738 = vpop.permute.xlu0 %1737
        %1740 = vst.msk [vmem:[#allocation5 + $0x8] sm:$0xff] %vm895, %v1738
      $region68: #{tpu_custom_call.1} parent=59 // pred_fallthru
        _
      %p1741 = scmp.eq.s32.totalorder %s21, 2
      // Predicated region
      $region69: #{tpu_custom_call.1} parent=59 // pred_check
        %p1742 = pneg %p1741
      $region70: #{tpu_custom_call.1} parent=59 // pred_check_branch
        %1744 = sbr.rel (%p1742) target = $region72
      $region71: #{tpu_custom_call.1} parent=59 // pred_region
        %v1745 = vld [vmem:[%s6] sm:$0xff]
        %v1746 = vld [vmem:[%s6 + $0x8] sm:$0xff]
        %v1747 = vld [vmem:[%s6 + $0x10] sm:$0xff]
        %v1748 = vld [vmem:[%s6 + $0x18] sm:$0xff]
        %v1749 = vld [vmem:[%s7] sm:$0xff]
        %v1750 = vld [vmem:[%s7 + $0x8] sm:$0xff]
        %v1751 = vld [vmem:[%s7 + $0x10] sm:$0xff]
        %v1752 = vld [vmem:[%s7 + $0x18] sm:$0xff]
        %v1753 = vld [vmem:[#allocation4] sm:$0xff]
        %v1754 = vld [vmem:[#allocation5] sm:$0xff]
        %v1755 = vld [vmem:[#allocation4 + $0x8] sm:$0xff]
        %v1756 = vld [vmem:[#allocation5 + $0x8] sm:$0xff]
        %vm1757 = vcmask 261120
        %v1759 = vsel %vm1757, %v1753, 0
        %1761 = vmatprep.subr.mxu0 0.0
        %1762 = vmatpush1.msra.mxu0 %v1745
        %1763 = vmatprep.subr.mxu0 0.0
        %1764 = vmatpush1.msra.mxu0 %v1746
        %1765 = vmatprep.subr.mxu0 0.0
        %1766 = vmatpush1.msra.mxu0 %v1747
        %1767 = vmatprep.subr.mxu0 0.0
        %1768 = vmatpush1.msra.mxu0 %v1748
        %1769 = vmatprep.subr.mxu0 0.0
        %1770 = vmatpush1.msra.mxu0 0.0
        %1771 = vmatprep.subr.mxu0 0.0
        %1772 = vmatpush1.msra.mxu0 0.0
        %1773 = vmatprep.subr.mxu0 0.0
        %1774 = vmatpush1.msra.mxu0 0.0
        %1775 = vmatprep.subr.mxu0 0.0
        %1776 = vmatpush1.msra.mxu0 0.0
        %1777 = vmatprep.subr.mxu0 0.0
        %1778 = vmatpush1.msra.mxu0 0.0
        %1779 = vmatprep.subr.mxu0 0.0
        %1780 = vmatpush1.msra.mxu0 0.0
        %1781 = vmatprep.subr.mxu0 0.0
        %1782 = vmatpush1.msra.mxu0 0.0
        %1783 = vmatprep.subr.mxu0 0.0
        %1784 = vmatpush1.msra.mxu0 0.0
        %1785 = vmatprep.subr.mxu0 0.0
        %1786 = vmatpush1.msra.mxu0 0.0
        %1787 = vmatprep.subr.mxu0 0.0
        %1788 = vmatpush1.msra.mxu0 0.0
        %1789 = vmatprep.subr.mxu0 0.0
        %1790 = vmatpush1.msra.mxu0 0.0
        %1791 = vmatprep.subr.mxu0 0.0
        %1792 = vmatpush1.msra.mxu0 0.0
        %1793 = vmatprep.subr.mxu0 0.0
        %1794 = vmatpush1.msra.mxu0 0.0
        %1795 = vmatprep.subr.mxu0 0.0
        %1796 = vmatpush1.msra.mxu0 0.0
        %1797 = vmatprep.subr.mxu0 0.0
        %1798 = vmatpush1.msra.mxu0 0.0
        %1799 = vmatprep.subr.mxu0 0.0
        %1800 = vmatpush1.msra.mxu0 0.0
        %1801 = vmatprep.subr.mxu0 0.0
        %1802 = vmatpush1.msra.mxu0 0.0
        %1803 = vmatprep.subr.mxu0 0.0
        %1804 = vmatpush1.msra.mxu0 0.0
        %1805 = vmatprep.subr.mxu0 0.0
        %1806 = vmatpush1.msra.mxu0 0.0
        %1807 = vmatprep.subr.mxu0 0.0
        %1808 = vmatpush1.msra.mxu0 0.0
        %1809 = vmatprep.subr.mxu0 0.0
        %1810 = vmatpush1.msra.mxu0 0.0
        %1811 = vmatprep.subr.mxu0 0.0
        %1812 = vmatpush1.msra.mxu0 0.0
        %1813 = vmatprep.subr.mxu0 0.0
        %1814 = vmatpush1.msra.mxu0 0.0
        %1815 = vmatprep.subr.mxu0 0.0
        %1816 = vmatpush1.msra.mxu0 0.0
        %1817 = vmatprep.subr.mxu0 0.0
        %1818 = vmatpush1.msra.mxu0 0.0
        %1819 = vmatprep.subr.mxu0 0.0
        %1820 = vmatpush1.msra.mxu0 0.0
        %1821 = vmatprep.subr.mxu0 0.0
        %1822 = vmatpush1.msra.mxu0 0.0
        %1823 = vmatprep.subr.mxu0 0.0
        %1824 = vmatpush1.msra.mxu0 0.0
        %1825 = vmatprep.mubr.f32.mxu0 0.0
        %1826 = vmatmul.mubr.f32.gmra.mrb[0].mxu0 %v1759
        %v1827 = vpop.f32.mrb[0].mxu0
        %v1828 = vadd.f32 0.0, %v1827
        %v1829 = vpop.f32.mrb[0].mxu0
        %1830 = vdwg.mxu0
        %v1832 = vsel %vm1757, %v1755, 0
        %1834 = vmatprep.subr.mxu0 0.0
        %1835 = vmatpush1.msra.mxu0 %v1749
        %1836 = vmatprep.subr.mxu0 0.0
        %1837 = vmatpush1.msra.mxu0 %v1750
        %1838 = vmatprep.subr.mxu0 0.0
        %1839 = vmatpush1.msra.mxu0 %v1751
        %1840 = vmatprep.subr.mxu0 0.0
        %1841 = vmatpush1.msra.mxu0 %v1752
        %1842 = vmatprep.subr.mxu0 0.0
        %1843 = vmatpush1.msra.mxu0 0.0
        %1844 = vmatprep.subr.mxu0 0.0
        %1845 = vmatpush1.msra.mxu0 0.0
        %1846 = vmatprep.subr.mxu0 0.0
        %1847 = vmatpush1.msra.mxu0 0.0
        %1848 = vmatprep.subr.mxu0 0.0
        %1849 = vmatpush1.msra.mxu0 0.0
        %1850 = vmatprep.subr.mxu0 0.0
        %1851 = vmatpush1.msra.mxu0 0.0
        %1852 = vmatprep.subr.mxu0 0.0
        %1853 = vmatpush1.msra.mxu0 0.0
        %1854 = vmatprep.subr.mxu0 0.0
        %1855 = vmatpush1.msra.mxu0 0.0
        %1856 = vmatprep.subr.mxu0 0.0
        %1857 = vmatpush1.msra.mxu0 0.0
        %1858 = vmatprep.subr.mxu0 0.0
        %1859 = vmatpush1.msra.mxu0 0.0
        %1860 = vmatprep.subr.mxu0 0.0
        %1861 = vmatpush1.msra.mxu0 0.0
        %1862 = vmatprep.subr.mxu0 0.0
        %1863 = vmatpush1.msra.mxu0 0.0
        %1864 = vmatprep.subr.mxu0 0.0
        %1865 = vmatpush1.msra.mxu0 0.0
        %1866 = vmatprep.subr.mxu0 0.0
        %1867 = vmatpush1.msra.mxu0 0.0
        %1868 = vmatprep.subr.mxu0 0.0
        %1869 = vmatpush1.msra.mxu0 0.0
        %1870 = vmatprep.subr.mxu0 0.0
        %1871 = vmatpush1.msra.mxu0 0.0
        %1872 = vmatprep.subr.mxu0 0.0
        %1873 = vmatpush1.msra.mxu0 0.0
        %1874 = vmatprep.subr.mxu0 0.0
        %1875 = vmatpush1.msra.mxu0 0.0
        %1876 = vmatprep.subr.mxu0 0.0
        %1877 = vmatpush1.msra.mxu0 0.0
        %1878 = vmatprep.subr.mxu0 0.0
        %1879 = vmatpush1.msra.mxu0 0.0
        %1880 = vmatprep.subr.mxu0 0.0
        %1881 = vmatpush1.msra.mxu0 0.0
        %1882 = vmatprep.subr.mxu0 0.0
        %1883 = vmatpush1.msra.mxu0 0.0
        %1884 = vmatprep.subr.mxu0 0.0
        %1885 = vmatpush1.msra.mxu0 0.0
        %1886 = vmatprep.subr.mxu0 0.0
        %1887 = vmatpush1.msra.mxu0 0.0
        %1888 = vmatprep.subr.mxu0 0.0
        %1889 = vmatpush1.msra.mxu0 0.0
        %1890 = vmatprep.subr.mxu0 0.0
        %1891 = vmatpush1.msra.mxu0 0.0
        %1892 = vmatprep.subr.mxu0 0.0
        %1893 = vmatpush1.msra.mxu0 0.0
        %1894 = vmatprep.subr.mxu0 0.0
        %1895 = vmatpush1.msra.mxu0 0.0
        %1896 = vmatprep.subr.mxu0 0.0
        %1897 = vmatpush1.msra.mxu0 0.0
        %1898 = vmatprep.mubr.f32.mxu0 0.0
        %1899 = vmatmul.mubr.f32.gmra.mrb[0].mxu0 %v1832
        %v1900 = vpop.f32.mrb[0].mxu0
        %v1901 = vadd.f32 0.0, %v1900
        %v1902 = vpop.f32.mrb[0].mxu0
        %1903 = vdwg.mxu0
        %s1904 = sadd.s32 0, 32
        %s1905 = scalar_lea.vmem [#allocation2], %s1904
        %v1906 = vld [vmem:[%s1905] sm:$0xff]
        %v1907 = vadd.f32 %v1906, %v1828
        %s1908 = sadd.s32 24, 32
        %s1909 = scalar_lea.vmem [#allocation3], %s1908
        %v1910 = vld [vmem:[%s1909] sm:$0xff]
        %v1911 = vadd.f32 %v1910, %v1901
        %v1912 = vxor.u32 %v1907, 2147483648
        %v1913 = vmul.f32 %v1912, 1.442695
        %v1914 = vpow.pop %v1913
        %v1915 = vadd.f32 %v1914, 1.0
        %v1916 = vrcp.pop %v1915
        %v1917 = vmul.f32 1.0, %v1916
        %v1918 = vtanh.pop %v1907
        %1920 = vrot.lane.b32.xlu0 %v1754, 32
        %v1921 = vpop.permute.xlu0 %1920
        %v1923 = vmul.f32 %v1917, %v1921
        %1925 = vrot.lane.b32.xlu0 %v1918, 32
        %v1926 = vpop.permute.xlu0 %1925
        %v1928 = vmul.f32 %v1917, %v1926
        %1930 = vrot.lane.b32.xlu0 %v1928, 32
        %v1931 = vpop.permute.xlu0 %1930
        %v1933 = vadd.f32 %v1923, %v1931
        %v1934 = vtanh.pop %v1933
        %1936 = vrot.lane.b32.xlu0 %v1934, 32
        %v1937 = vpop.permute.xlu0 %1936
        %v1939 = vmul.f32 %v1917, %v1937
        %v1940 = vxor.u32 %v1911, 2147483648
        %v1941 = vmul.f32 %v1940, 1.442695
        %v1942 = vpow.pop %v1941
        %v1943 = vadd.f32 %v1942, 1.0
        %v1944 = vrcp.pop %v1943
        %v1945 = vmul.f32 1.0, %v1944
        %v1946 = vtanh.pop %v1911
        %1948 = vrot.lane.b32.xlu0 %v1756, 32
        %v1949 = vpop.permute.xlu0 %1948
        %v1951 = vmul.f32 %v1945, %v1949
        %1953 = vrot.lane.b32.xlu0 %v1946, 32
        %v1954 = vpop.permute.xlu0 %1953
        %v1956 = vmul.f32 %v1945, %v1954
        %1958 = vrot.lane.b32.xlu0 %v1956, 32
        %v1959 = vpop.permute.xlu0 %1958
        %v1961 = vadd.f32 %v1951, %v1959
        %v1962 = vtanh.pop %v1961
        %1964 = vrot.lane.b32.xlu0 %v1962, 32
        %v1965 = vpop.permute.xlu0 %1964
        %v1967 = vmul.f32 %v1945, %v1965
        %1969 = vrot.lane.b32.xlu0 %v1939, 64
        %v1970 = vpop.permute.xlu0 %1969
        %v1971 = vsel %vm1757, %v1970, 0
        %1973 = vmatprep.subr.mxu0 0.0
        %1974 = vmatpush1.msra.mxu0 %v1745
        %1975 = vmatprep.subr.mxu0 0.0
        %1976 = vmatpush1.msra.mxu0 %v1746
        %1977 = vmatprep.subr.mxu0 0.0
        %1978 = vmatpush1.msra.mxu0 %v1747
        %1979 = vmatprep.subr.mxu0 0.0
        %1980 = vmatpush1.msra.mxu0 %v1748
        %1981 = vmatprep.subr.mxu0 0.0
        %1982 = vmatpush1.msra.mxu0 0.0
        %1983 = vmatprep.subr.mxu0 0.0
        %1984 = vmatpush1.msra.mxu0 0.0
        %1985 = vmatprep.subr.mxu0 0.0
        %1986 = vmatpush1.msra.mxu0 0.0
        %1987 = vmatprep.subr.mxu0 0.0
        %1988 = vmatpush1.msra.mxu0 0.0
        %1989 = vmatprep.subr.mxu0 0.0
        %1990 = vmatpush1.msra.mxu0 0.0
        %1991 = vmatprep.subr.mxu0 0.0
        %1992 = vmatpush1.msra.mxu0 0.0
        %1993 = vmatprep.subr.mxu0 0.0
        %1994 = vmatpush1.msra.mxu0 0.0
        %1995 = vmatprep.subr.mxu0 0.0
        %1996 = vmatpush1.msra.mxu0 0.0
        %1997 = vmatprep.subr.mxu0 0.0
        %1998 = vmatpush1.msra.mxu0 0.0
        %1999 = vmatprep.subr.mxu0 0.0
        %2000 = vmatpush1.msra.mxu0 0.0
        %2001 = vmatprep.subr.mxu0 0.0
        %2002 = vmatpush1.msra.mxu0 0.0
        %2003 = vmatprep.subr.mxu0 0.0
        %2004 = vmatpush1.msra.mxu0 0.0
        %2005 = vmatprep.subr.mxu0 0.0
        %2006 = vmatpush1.msra.mxu0 0.0
        %2007 = vmatprep.subr.mxu0 0.0
        %2008 = vmatpush1.msra.mxu0 0.0
        %2009 = vmatprep.subr.mxu0 0.0
        %2010 = vmatpush1.msra.mxu0 0.0
        %2011 = vmatprep.subr.mxu0 0.0
        %2012 = vmatpush1.msra.mxu0 0.0
        %2013 = vmatprep.subr.mxu0 0.0
        %2014 = vmatpush1.msra.mxu0 0.0
        %2015 = vmatprep.subr.mxu0 0.0
        %2016 = vmatpush1.msra.mxu0 0.0
        %2017 = vmatprep.subr.mxu0 0.0
        %2018 = vmatpush1.msra.mxu0 0.0
        %2019 = vmatprep.subr.mxu0 0.0
        %2020 = vmatpush1.msra.mxu0 0.0
        %2021 = vmatprep.subr.mxu0 0.0
        %2022 = vmatpush1.msra.mxu0 0.0
        %2023 = vmatprep.subr.mxu0 0.0
        %2024 = vmatpush1.msra.mxu0 0.0
        %2025 = vmatprep.subr.mxu0 0.0
        %2026 = vmatpush1.msra.mxu0 0.0
        %2027 = vmatprep.subr.mxu0 0.0
        %2028 = vmatpush1.msra.mxu0 0.0
        %2029 = vmatprep.subr.mxu0 0.0
        %2030 = vmatpush1.msra.mxu0 0.0
        %2031 = vmatprep.subr.mxu0 0.0
        %2032 = vmatpush1.msra.mxu0 0.0
        %2033 = vmatprep.subr.mxu0 0.0
        %2034 = vmatpush1.msra.mxu0 0.0
        %2035 = vmatprep.subr.mxu0 0.0
        %2036 = vmatpush1.msra.mxu0 0.0
        %2037 = vmatprep.mubr.f32.mxu0 0.0
        %2038 = vmatmul.mubr.f32.gmra.mrb[0].mxu0 %v1971
        %v2039 = vpop.f32.mrb[0].mxu0
        %v2040 = vadd.f32 0.0, %v2039
        %v2041 = vpop.f32.mrb[0].mxu0
        %2042 = vdwg.mxu0
        %2044 = vrot.lane.b32.xlu0 %v1967, 64
        %v2045 = vpop.permute.xlu0 %2044
        %v2046 = vsel %vm1757, %v2045, 0
        %2048 = vmatprep.subr.mxu0 0.0
        %2049 = vmatpush1.msra.mxu0 %v1749
        %2050 = vmatprep.subr.mxu0 0.0
        %2051 = vmatpush1.msra.mxu0 %v1750
        %2052 = vmatprep.subr.mxu0 0.0
        %2053 = vmatpush1.msra.mxu0 %v1751
        %2054 = vmatprep.subr.mxu0 0.0
        %2055 = vmatpush1.msra.mxu0 %v1752
        %2056 = vmatprep.subr.mxu0 0.0
        %2057 = vmatpush1.msra.mxu0 0.0
        %2058 = vmatprep.subr.mxu0 0.0
        %2059 = vmatpush1.msra.mxu0 0.0
        %2060 = vmatprep.subr.mxu0 0.0
        %2061 = vmatpush1.msra.mxu0 0.0
        %2062 = vmatprep.subr.mxu0 0.0
        %2063 = vmatpush1.msra.mxu0 0.0
        %2064 = vmatprep.subr.mxu0 0.0
        %2065 = vmatpush1.msra.mxu0 0.0
        %2066 = vmatprep.subr.mxu0 0.0
        %2067 = vmatpush1.msra.mxu0 0.0
        %2068 = vmatprep.subr.mxu0 0.0
        %2069 = vmatpush1.msra.mxu0 0.0
        %2070 = vmatprep.subr.mxu0 0.0
        %2071 = vmatpush1.msra.mxu0 0.0
        %2072 = vmatprep.subr.mxu0 0.0
        %2073 = vmatpush1.msra.mxu0 0.0
        %2074 = vmatprep.subr.mxu0 0.0
        %2075 = vmatpush1.msra.mxu0 0.0
        %2076 = vmatprep.subr.mxu0 0.0
        %2077 = vmatpush1.msra.mxu0 0.0
        %2078 = vmatprep.subr.mxu0 0.0
        %2079 = vmatpush1.msra.mxu0 0.0
        %2080 = vmatprep.subr.mxu0 0.0
        %2081 = vmatpush1.msra.mxu0 0.0
        %2082 = vmatprep.subr.mxu0 0.0
        %2083 = vmatpush1.msra.mxu0 0.0
        %2084 = vmatprep.subr.mxu0 0.0
        %2085 = vmatpush1.msra.mxu0 0.0
        %2086 = vmatprep.subr.mxu0 0.0
        %2087 = vmatpush1.msra.mxu0 0.0
        %2088 = vmatprep.subr.mxu0 0.0
        %2089 = vmatpush1.msra.mxu0 0.0
        %2090 = vmatprep.subr.mxu0 0.0
        %2091 = vmatpush1.msra.mxu0 0.0
        %2092 = vmatprep.subr.mxu0 0.0
        %2093 = vmatpush1.msra.mxu0 0.0
        %2094 = vmatprep.subr.mxu0 0.0
        %2095 = vmatpush1.msra.mxu0 0.0
        %2096 = vmatprep.subr.mxu0 0.0
        %2097 = vmatpush1.msra.mxu0 0.0
        %2098 = vmatprep.subr.mxu0 0.0
        %2099 = vmatpush1.msra.mxu0 0.0
        %2100 = vmatprep.subr.mxu0 0.0
        %2101 = vmatpush1.msra.mxu0 0.0
        %2102 = vmatprep.subr.mxu0 0.0
        %2103 = vmatpush1.msra.mxu0 0.0
        %2104 = vmatprep.subr.mxu0 0.0
        %2105 = vmatpush1.msra.mxu0 0.0
        %2106 = vmatprep.subr.mxu0 0.0
        %2107 = vmatpush1.msra.mxu0 0.0
        %2108 = vmatprep.subr.mxu0 0.0
        %2109 = vmatpush1.msra.mxu0 0.0
        %2110 = vmatprep.subr.mxu0 0.0
        %2111 = vmatpush1.msra.mxu0 0.0
        %2112 = vmatprep.mubr.f32.mxu0 0.0
        %2113 = vmatmul.mubr.f32.gmra.mrb[0].mxu0 %v2046
        %v2114 = vpop.f32.mrb[0].mxu0
        %v2115 = vadd.f32 0.0, %v2114
        %v2116 = vpop.f32.mrb[0].mxu0
        %2117 = vdwg.mxu0
        %s2118 = sadd.s32 8, 32
        %s2119 = scalar_lea.vmem [#allocation2], %s2118
        %v2120 = vld [vmem:[%s2119] sm:$0xff]
        %v2121 = vadd.f32 %v2120, %v2040
        %s2122 = sadd.s32 16, 32
        %s2123 = scalar_lea.vmem [#allocation3], %s2122
        %v2124 = vld [vmem:[%s2123] sm:$0xff]
        %v2125 = vadd.f32 %v2124, %v2115
        %v2126 = vxor.u32 %v2121, 2147483648
        %v2127 = vmul.f32 %v2126, 1.442695
        %v2128 = vpow.pop %v2127
        %v2129 = vadd.f32 %v2128, 1.0
        %v2130 = vrcp.pop %v2129
        %v2131 = vmul.f32 1.0, %v2130
        %v2132 = vtanh.pop %v2121
        %v2133 = vmul.f32 %v2131, %v1933
        %2135 = vrot.lane.b32.xlu0 %v2132, 32
        %v2136 = vpop.permute.xlu0 %2135
        %v2138 = vmul.f32 %v2131, %v2136
        %2140 = vrot.lane.b32.xlu0 %v2138, 32
        %v2141 = vpop.permute.xlu0 %2140
        %v2143 = vadd.f32 %v2133, %v2141
        %v2144 = vtanh.pop %v2143
        %2146 = vrot.lane.b32.xlu0 %v2144, 32
        %v2147 = vpop.permute.xlu0 %2146
        %v2149 = vmul.f32 %v2131, %v2147
        %v2150 = vxor.u32 %v2125, 2147483648
        %v2151 = vmul.f32 %v2150, 1.442695
        %v2152 = vpow.pop %v2151
        %v2153 = vadd.f32 %v2152, 1.0
        %v2154 = vrcp.pop %v2153
        %v2155 = vmul.f32 1.0, %v2154
        %v2156 = vtanh.pop %v2125
        %v2157 = vmul.f32 %v2155, %v1961
        %2159 = vrot.lane.b32.xlu0 %v2156, 32
        %v2160 = vpop.permute.xlu0 %2159
        %v2162 = vmul.f32 %v2155, %v2160
        %2164 = vrot.lane.b32.xlu0 %v2162, 32
        %v2165 = vpop.permute.xlu0 %2164
        %v2167 = vadd.f32 %v2157, %v2165
        %v2168 = vtanh.pop %v2167
        %2170 = vrot.lane.b32.xlu0 %v2168, 32
        %v2171 = vpop.permute.xlu0 %2170
        %v2173 = vmul.f32 %v2155, %v2171
        %2175 = vrot.lane.b32.xlu0 %v2149, 64
        %v2176 = vpop.permute.xlu0 %2175
        %v2177 = vsel %vm1757, %v2176, 0
        %2179 = vmatprep.subr.mxu0 0.0
        %2180 = vmatpush1.msra.mxu0 %v1745
        %2181 = vmatprep.subr.mxu0 0.0
        %2182 = vmatpush1.msra.mxu0 %v1746
        %2183 = vmatprep.subr.mxu0 0.0
        %2184 = vmatpush1.msra.mxu0 %v1747
        %2185 = vmatprep.subr.mxu0 0.0
        %2186 = vmatpush1.msra.mxu0 %v1748
        %2187 = vmatprep.subr.mxu0 0.0
        %2188 = vmatpush1.msra.mxu0 0.0
        %2189 = vmatprep.subr.mxu0 0.0
        %2190 = vmatpush1.msra.mxu0 0.0
        %2191 = vmatprep.subr.mxu0 0.0
        %2192 = vmatpush1.msra.mxu0 0.0
        %2193 = vmatprep.subr.mxu0 0.0
        %2194 = vmatpush1.msra.mxu0 0.0
        %2195 = vmatprep.subr.mxu0 0.0
        %2196 = vmatpush1.msra.mxu0 0.0
        %2197 = vmatprep.subr.mxu0 0.0
        %2198 = vmatpush1.msra.mxu0 0.0
        %2199 = vmatprep.subr.mxu0 0.0
        %2200 = vmatpush1.msra.mxu0 0.0
        %2201 = vmatprep.subr.mxu0 0.0
        %2202 = vmatpush1.msra.mxu0 0.0
        %2203 = vmatprep.subr.mxu0 0.0
        %2204 = vmatpush1.msra.mxu0 0.0
        %2205 = vmatprep.subr.mxu0 0.0
        %2206 = vmatpush1.msra.mxu0 0.0
        %2207 = vmatprep.subr.mxu0 0.0
        %2208 = vmatpush1.msra.mxu0 0.0
        %2209 = vmatprep.subr.mxu0 0.0
        %2210 = vmatpush1.msra.mxu0 0.0
        %2211 = vmatprep.subr.mxu0 0.0
        %2212 = vmatpush1.msra.mxu0 0.0
        %2213 = vmatprep.subr.mxu0 0.0
        %2214 = vmatpush1.msra.mxu0 0.0
        %2215 = vmatprep.subr.mxu0 0.0
        %2216 = vmatpush1.msra.mxu0 0.0
        %2217 = vmatprep.subr.mxu0 0.0
        %2218 = vmatpush1.msra.mxu0 0.0
        %2219 = vmatprep.subr.mxu0 0.0
        %2220 = vmatpush1.msra.mxu0 0.0
        %2221 = vmatprep.subr.mxu0 0.0
        %2222 = vmatpush1.msra.mxu0 0.0
        %2223 = vmatprep.subr.mxu0 0.0
        %2224 = vmatpush1.msra.mxu0 0.0
        %2225 = vmatprep.subr.mxu0 0.0
        %2226 = vmatpush1.msra.mxu0 0.0
        %2227 = vmatprep.subr.mxu0 0.0
        %2228 = vmatpush1.msra.mxu0 0.0
        %2229 = vmatprep.subr.mxu0 0.0
        %2230 = vmatpush1.msra.mxu0 0.0
        %2231 = vmatprep.subr.mxu0 0.0
        %2232 = vmatpush1.msra.mxu0 0.0
        %2233 = vmatprep.subr.mxu0 0.0
        %2234 = vmatpush1.msra.mxu0 0.0
        %2235 = vmatprep.subr.mxu0 0.0
        %2236 = vmatpush1.msra.mxu0 0.0
        %2237 = vmatprep.subr.mxu0 0.0
        %2238 = vmatpush1.msra.mxu0 0.0
        %2239 = vmatprep.subr.mxu0 0.0
        %2240 = vmatpush1.msra.mxu0 0.0
        %2241 = vmatprep.subr.mxu0 0.0
        %2242 = vmatpush1.msra.mxu0 0.0
        %2243 = vmatprep.mubr.f32.mxu0 0.0
        %2244 = vmatmul.mubr.f32.gmra.mrb[0].mxu0 %v2177
        %v2245 = vpop.f32.mrb[0].mxu0
        %v2246 = vadd.f32 0.0, %v2245
        %v2247 = vpop.f32.mrb[0].mxu0
        %2248 = vdwg.mxu0
        %2250 = vrot.lane.b32.xlu0 %v2173, 64
        %v2251 = vpop.permute.xlu0 %2250
        %v2252 = vsel %vm1757, %v2251, 0
        %2254 = vmatprep.subr.mxu0 0.0
        %2255 = vmatpush1.msra.mxu0 %v1749
        %2256 = vmatprep.subr.mxu0 0.0
        %2257 = vmatpush1.msra.mxu0 %v1750
        %2258 = vmatprep.subr.mxu0 0.0
        %2259 = vmatpush1.msra.mxu0 %v1751
        %2260 = vmatprep.subr.mxu0 0.0
        %2261 = vmatpush1.msra.mxu0 %v1752
        %2262 = vmatprep.subr.mxu0 0.0
        %2263 = vmatpush1.msra.mxu0 0.0
        %2264 = vmatprep.subr.mxu0 0.0
        %2265 = vmatpush1.msra.mxu0 0.0
        %2266 = vmatprep.subr.mxu0 0.0
        %2267 = vmatpush1.msra.mxu0 0.0
        %2268 = vmatprep.subr.mxu0 0.0
        %2269 = vmatpush1.msra.mxu0 0.0
        %2270 = vmatprep.subr.mxu0 0.0
        %2271 = vmatpush1.msra.mxu0 0.0
        %2272 = vmatprep.subr.mxu0 0.0
        %2273 = vmatpush1.msra.mxu0 0.0
        %2274 = vmatprep.subr.mxu0 0.0
        %2275 = vmatpush1.msra.mxu0 0.0
        %2276 = vmatprep.subr.mxu0 0.0
        %2277 = vmatpush1.msra.mxu0 0.0
        %2278 = vmatprep.subr.mxu0 0.0
        %2279 = vmatpush1.msra.mxu0 0.0
        %2280 = vmatprep.subr.mxu0 0.0
        %2281 = vmatpush1.msra.mxu0 0.0
        %2282 = vmatprep.subr.mxu0 0.0
        %2283 = vmatpush1.msra.mxu0 0.0
        %2284 = vmatprep.subr.mxu0 0.0
        %2285 = vmatpush1.msra.mxu0 0.0
        %2286 = vmatprep.subr.mxu0 0.0
        %2287 = vmatpush1.msra.mxu0 0.0
        %2288 = vmatprep.subr.mxu0 0.0
        %2289 = vmatpush1.msra.mxu0 0.0
        %2290 = vmatprep.subr.mxu0 0.0
        %2291 = vmatpush1.msra.mxu0 0.0
        %2292 = vmatprep.subr.mxu0 0.0
        %2293 = vmatpush1.msra.mxu0 0.0
        %2294 = vmatprep.subr.mxu0 0.0
        %2295 = vmatpush1.msra.mxu0 0.0
        %2296 = vmatprep.subr.mxu0 0.0
        %2297 = vmatpush1.msra.mxu0 0.0
        %2298 = vmatprep.subr.mxu0 0.0
        %2299 = vmatpush1.msra.mxu0 0.0
        %2300 = vmatprep.subr.mxu0 0.0
        %2301 = vmatpush1.msra.mxu0 0.0
        %2302 = vmatprep.subr.mxu0 0.0
        %2303 = vmatpush1.msra.mxu0 0.0
        %2304 = vmatprep.subr.mxu0 0.0
        %2305 = vmatpush1.msra.mxu0 0.0
        %2306 = vmatprep.subr.mxu0 0.0
        %2307 = vmatpush1.msra.mxu0 0.0
        %2308 = vmatprep.subr.mxu0 0.0
        %2309 = vmatpush1.msra.mxu0 0.0
        %2310 = vmatprep.subr.mxu0 0.0
        %2311 = vmatpush1.msra.mxu0 0.0
        %2312 = vmatprep.subr.mxu0 0.0
        %2313 = vmatpush1.msra.mxu0 0.0
        %2314 = vmatprep.subr.mxu0 0.0
        %2315 = vmatpush1.msra.mxu0 0.0
        %2316 = vmatprep.subr.mxu0 0.0
        %2317 = vmatpush1.msra.mxu0 0.0
        %2318 = vmatprep.mubr.f32.mxu0 0.0
        %2319 = vmatmul.mubr.f32.gmra.mrb[0].mxu0 %v2252
        %v2320 = vpop.f32.mrb[0].mxu0
        %v2321 = vadd.f32 0.0, %v2320
        %v2322 = vpop.f32.mrb[0].mxu0
        %2323 = vdwg.mxu0
        %s2324 = scalar_lea.vmem [#allocation2], %s2122
        %v2325 = vld [vmem:[%s2324] sm:$0xff]
        %v2326 = vadd.f32 %v2325, %v2246
        %s2327 = scalar_lea.vmem [#allocation3], %s2118
        %v2328 = vld [vmem:[%s2327] sm:$0xff]
        %v2329 = vadd.f32 %v2328, %v2321
        %v2330 = vxor.u32 %v2326, 2147483648
        %v2331 = vmul.f32 %v2330, 1.442695
        %v2332 = vpow.pop %v2331
        %v2333 = vadd.f32 %v2332, 1.0
        %v2334 = vrcp.pop %v2333
        %v2335 = vmul.f32 1.0, %v2334
        %v2336 = vtanh.pop %v2326
        %v2337 = vmul.f32 %v2335, %v2143
        %2339 = vrot.lane.b32.xlu0 %v2336, 32
        %v2340 = vpop.permute.xlu0 %2339
        %v2342 = vmul.f32 %v2335, %v2340
        %2344 = vrot.lane.b32.xlu0 %v2342, 32
        %v2345 = vpop.permute.xlu0 %2344
        %v2347 = vadd.f32 %v2337, %v2345
        %v2348 = vtanh.pop %v2347
        %2350 = vrot.lane.b32.xlu0 %v2348, 32
        %v2351 = vpop.permute.xlu0 %2350
        %v2353 = vmul.f32 %v2335, %v2351
        %v2354 = vxor.u32 %v2329, 2147483648
        %v2355 = vmul.f32 %v2354, 1.442695
        %v2356 = vpow.pop %v2355
        %v2357 = vadd.f32 %v2356, 1.0
        %v2358 = vrcp.pop %v2357
        %v2359 = vmul.f32 1.0, %v2358
        %v2360 = vtanh.pop %v2329
        %v2361 = vmul.f32 %v2359, %v2167
        %2363 = vrot.lane.b32.xlu0 %v2360, 32
        %v2364 = vpop.permute.xlu0 %2363
        %v2366 = vmul.f32 %v2359, %v2364
        %2368 = vrot.lane.b32.xlu0 %v2366, 32
        %v2369 = vpop.permute.xlu0 %2368
        %v2371 = vadd.f32 %v2361, %v2369
        %v2372 = vtanh.pop %v2371
        %2374 = vrot.lane.b32.xlu0 %v2372, 32
        %v2375 = vpop.permute.xlu0 %2374
        %v2377 = vmul.f32 %v2359, %v2375
        %2379 = vrot.lane.b32.xlu0 %v2353, 64
        %v2380 = vpop.permute.xlu0 %2379
        %v2381 = vsel %vm1757, %v2380, 0
        %2383 = vmatprep.subr.mxu0 0.0
        %2384 = vmatpush1.msra.mxu0 %v1745
        %2385 = vmatprep.subr.mxu0 0.0
        %2386 = vmatpush1.msra.mxu0 %v1746
        %2387 = vmatprep.subr.mxu0 0.0
        %2388 = vmatpush1.msra.mxu0 %v1747
        %2389 = vmatprep.subr.mxu0 0.0
        %2390 = vmatpush1.msra.mxu0 %v1748
        %2391 = vmatprep.subr.mxu0 0.0
        %2392 = vmatpush1.msra.mxu0 0.0
        %2393 = vmatprep.subr.mxu0 0.0
        %2394 = vmatpush1.msra.mxu0 0.0
        %2395 = vmatprep.subr.mxu0 0.0
        %2396 = vmatpush1.msra.mxu0 0.0
        %2397 = vmatprep.subr.mxu0 0.0
        %2398 = vmatpush1.msra.mxu0 0.0
        %2399 = vmatprep.subr.mxu0 0.0
        %2400 = vmatpush1.msra.mxu0 0.0
        %2401 = vmatprep.subr.mxu0 0.0
        %2402 = vmatpush1.msra.mxu0 0.0
        %2403 = vmatprep.subr.mxu0 0.0
        %2404 = vmatpush1.msra.mxu0 0.0
        %2405 = vmatprep.subr.mxu0 0.0
        %2406 = vmatpush1.msra.mxu0 0.0
        %2407 = vmatprep.subr.mxu0 0.0
        %2408 = vmatpush1.msra.mxu0 0.0
        %2409 = vmatprep.subr.mxu0 0.0
        %2410 = vmatpush1.msra.mxu0 0.0
        %2411 = vmatprep.subr.mxu0 0.0
        %2412 = vmatpush1.msra.mxu0 0.0
        %2413 = vmatprep.subr.mxu0 0.0
        %2414 = vmatpush1.msra.mxu0 0.0
        %2415 = vmatprep.subr.mxu0 0.0
        %2416 = vmatpush1.msra.mxu0 0.0
        %2417 = vmatprep.subr.mxu0 0.0
        %2418 = vmatpush1.msra.mxu0 0.0
        %2419 = vmatprep.subr.mxu0 0.0
        %2420 = vmatpush1.msra.mxu0 0.0
        %2421 = vmatprep.subr.mxu0 0.0
        %2422 = vmatpush1.msra.mxu0 0.0
        %2423 = vmatprep.subr.mxu0 0.0
        %2424 = vmatpush1.msra.mxu0 0.0
        %2425 = vmatprep.subr.mxu0 0.0
        %2426 = vmatpush1.msra.mxu0 0.0
        %2427 = vmatprep.subr.mxu0 0.0
        %2428 = vmatpush1.msra.mxu0 0.0
        %2429 = vmatprep.subr.mxu0 0.0
        %2430 = vmatpush1.msra.mxu0 0.0
        %2431 = vmatprep.subr.mxu0 0.0
        %2432 = vmatpush1.msra.mxu0 0.0
        %2433 = vmatprep.subr.mxu0 0.0
        %2434 = vmatpush1.msra.mxu0 0.0
        %2435 = vmatprep.subr.mxu0 0.0
        %2436 = vmatpush1.msra.mxu0 0.0
        %2437 = vmatprep.subr.mxu0 0.0
        %2438 = vmatpush1.msra.mxu0 0.0
        %2439 = vmatprep.subr.mxu0 0.0
        %2440 = vmatpush1.msra.mxu0 0.0
        %2441 = vmatprep.subr.mxu0 0.0
        %2442 = vmatpush1.msra.mxu0 0.0
        %2443 = vmatprep.subr.mxu0 0.0
        %2444 = vmatpush1.msra.mxu0 0.0
        %2445 = vmatprep.subr.mxu0 0.0
        %2446 = vmatpush1.msra.mxu0 0.0
        %2447 = vmatprep.mubr.f32.mxu0 0.0
        %2448 = vmatmul.mubr.f32.gmra.mrb[0].mxu0 %v2381
        %v2449 = vpop.f32.mrb[0].mxu0
        %v2450 = vadd.f32 0.0, %v2449
        %v2451 = vpop.f32.mrb[0].mxu0
        %2452 = vdwg.mxu0
        %2454 = vrot.lane.b32.xlu0 %v2377, 64
        %v2455 = vpop.permute.xlu0 %2454
        %v2456 = vsel %vm1757, %v2455, 0
        %2458 = vmatprep.subr.mxu0 0.0
        %2459 = vmatpush1.msra.mxu0 %v1749
        %2460 = vmatprep.subr.mxu0 0.0
        %2461 = vmatpush1.msra.mxu0 %v1750
        %2462 = vmatprep.subr.mxu0 0.0
        %2463 = vmatpush1.msra.mxu0 %v1751
        %2464 = vmatprep.subr.mxu0 0.0
        %2465 = vmatpush1.msra.mxu0 %v1752
        %2466 = vmatprep.subr.mxu0 0.0
        %2467 = vmatpush1.msra.mxu0 0.0
        %2468 = vmatprep.subr.mxu0 0.0
        %2469 = vmatpush1.msra.mxu0 0.0
        %2470 = vmatprep.subr.mxu0 0.0
        %2471 = vmatpush1.msra.mxu0 0.0
        %2472 = vmatprep.subr.mxu0 0.0
        %2473 = vmatpush1.msra.mxu0 0.0
        %2474 = vmatprep.subr.mxu0 0.0
        %2475 = vmatpush1.msra.mxu0 0.0
        %2476 = vmatprep.subr.mxu0 0.0
        %2477 = vmatpush1.msra.mxu0 0.0
        %2478 = vmatprep.subr.mxu0 0.0
        %2479 = vmatpush1.msra.mxu0 0.0
        %2480 = vmatprep.subr.mxu0 0.0
        %2481 = vmatpush1.msra.mxu0 0.0
        %2482 = vmatprep.subr.mxu0 0.0
        %2483 = vmatpush1.msra.mxu0 0.0
        %2484 = vmatprep.subr.mxu0 0.0
        %2485 = vmatpush1.msra.mxu0 0.0
        %2486 = vmatprep.subr.mxu0 0.0
        %2487 = vmatpush1.msra.mxu0 0.0
        %2488 = vmatprep.subr.mxu0 0.0
        %2489 = vmatpush1.msra.mxu0 0.0
        %2490 = vmatprep.subr.mxu0 0.0
        %2491 = vmatpush1.msra.mxu0 0.0
        %2492 = vmatprep.subr.mxu0 0.0
        %2493 = vmatpush1.msra.mxu0 0.0
        %2494 = vmatprep.subr.mxu0 0.0
        %2495 = vmatpush1.msra.mxu0 0.0
        %2496 = vmatprep.subr.mxu0 0.0
        %2497 = vmatpush1.msra.mxu0 0.0
        %2498 = vmatprep.subr.mxu0 0.0
        %2499 = vmatpush1.msra.mxu0 0.0
        %2500 = vmatprep.subr.mxu0 0.0
        %2501 = vmatpush1.msra.mxu0 0.0
        %2502 = vmatprep.subr.mxu0 0.0
        %2503 = vmatpush1.msra.mxu0 0.0
        %2504 = vmatprep.subr.mxu0 0.0
        %2505 = vmatpush1.msra.mxu0 0.0
        %2506 = vmatprep.subr.mxu0 0.0
        %2507 = vmatpush1.msra.mxu0 0.0
        %2508 = vmatprep.subr.mxu0 0.0
        %2509 = vmatpush1.msra.mxu0 0.0
        %2510 = vmatprep.subr.mxu0 0.0
        %2511 = vmatpush1.msra.mxu0 0.0
        %2512 = vmatprep.subr.mxu0 0.0
        %2513 = vmatpush1.msra.mxu0 0.0
        %2514 = vmatprep.subr.mxu0 0.0
        %2515 = vmatpush1.msra.mxu0 0.0
        %2516 = vmatprep.subr.mxu0 0.0
        %2517 = vmatpush1.msra.mxu0 0.0
        %2518 = vmatprep.subr.mxu0 0.0
        %2519 = vmatpush1.msra.mxu0 0.0
        %2520 = vmatprep.subr.mxu0 0.0
        %2521 = vmatpush1.msra.mxu0 0.0
        %2522 = vmatprep.mubr.f32.mxu0 0.0
        %2523 = vmatmul.mubr.f32.gmra.mrb[0].mxu0 %v2456
        %v2524 = vpop.f32.mrb[0].mxu0
        %v2525 = vadd.f32 0.0, %v2524
        %v2526 = vpop.f32.mrb[0].mxu0
        %2527 = vdwg.mxu0
        %s2528 = scalar_lea.vmem [#allocation2], %s1908
        %v2529 = vld [vmem:[%s2528] sm:$0xff]
        %v2530 = vadd.f32 %v2529, %v2450
        %s2531 = scalar_lea.vmem [#allocation3], %s1904
        %v2532 = vld [vmem:[%s2531] sm:$0xff]
        %v2533 = vadd.f32 %v2532, %v2525
        %v2534 = vxor.u32 %v2530, 2147483648
        %v2535 = vmul.f32 %v2534, 1.442695
        %v2536 = vpow.pop %v2535
        %v2537 = vadd.f32 %v2536, 1.0
        %v2538 = vrcp.pop %v2537
        %v2539 = vmul.f32 1.0, %v2538
        %v2540 = vtanh.pop %v2530
        %v2541 = vmul.f32 %v2539, %v2347
        %2543 = vrot.lane.b32.xlu0 %v2540, 32
        %v2544 = vpop.permute.xlu0 %2543
        %v2546 = vmul.f32 %v2539, %v2544
        %2548 = vrot.lane.b32.xlu0 %v2546, 32
        %v2549 = vpop.permute.xlu0 %2548
        %v2551 = vadd.f32 %v2541, %v2549
        %v2552 = vtanh.pop %v2551
        %2554 = vrot.lane.b32.xlu0 %v2552, 32
        %v2555 = vpop.permute.xlu0 %2554
        %v2557 = vmul.f32 %v2539, %v2555
        %v2558 = vxor.u32 %v2533, 2147483648
        %v2559 = vmul.f32 %v2558, 1.442695
        %v2560 = vpow.pop %v2559
        %v2561 = vadd.f32 %v2560, 1.0
        %v2562 = vrcp.pop %v2561
        %v2563 = vmul.f32 1.0, %v2562
        %v2564 = vtanh.pop %v2533
        %v2565 = vmul.f32 %v2563, %v2371
        %2567 = vrot.lane.b32.xlu0 %v2564, 32
        %v2568 = vpop.permute.xlu0 %2567
        %v2570 = vmul.f32 %v2563, %v2568
        %2572 = vrot.lane.b32.xlu0 %v2570, 32
        %v2573 = vpop.permute.xlu0 %2572
        %v2575 = vadd.f32 %v2565, %v2573
        %v2576 = vtanh.pop %v2575
        %2578 = vrot.lane.b32.xlu0 %v2576, 32
        %v2579 = vpop.permute.xlu0 %2578
        %v2581 = vmul.f32 %v2563, %v2579
        %2583 = vrot.lane.b32.xlu0 %v2557, 64
        %v2584 = vpop.permute.xlu0 %2583
        %2586 = vst.msk [vmem:[#allocation4] sm:$0xff] %vm1757, %v2584
        %2588 = vrot.lane.b32.xlu0 %v2551, 96
        %v2589 = vpop.permute.xlu0 %2588
        %2591 = vst.msk [vmem:[#allocation5] sm:$0xff] %vm1757, %v2589
        %2593 = vrot.lane.b32.xlu0 %v2581, 64
        %v2594 = vpop.permute.xlu0 %2593
        %2596 = vst.msk [vmem:[#allocation4 + $0x8] sm:$0xff] %vm1757, %v2594
        %2598 = vrot.lane.b32.xlu0 %v2575, 96
        %v2599 = vpop.permute.xlu0 %2598
        %2601 = vst.msk [vmem:[#allocation5 + $0x8] sm:$0xff] %vm1757, %v2599
        %2602 = vrot.lane.b32.xlu0 %v2581, 96
        %v2603 = vpop.permute.xlu0 %2602
        %v2605 = vsel %vm1757, %v2584, %v2603
        %v2606 = vld [vmem:[%s8] sm:$0xff]
        %v2607 = vld [vmem:[%s8 + $0x8] sm:$0xff]
        %v2608 = vld [vmem:[%s8 + $0x10] sm:$0xff]
        %v2609 = vld [vmem:[%s8 + $0x18] sm:$0xff]
        %v2610 = vld [vmem:[%s8 + $0x20] sm:$0xff]
        %v2611 = vld [vmem:[%s8 + $0x28] sm:$0xff]
        %v2612 = vld [vmem:[%s8 + $0x30] sm:$0xff]
        %v2613 = vld [vmem:[%s8 + $0x38] sm:$0xff]
        %v2614 = vld [vmem:[%s9] sm:$0x1]
        %v2616 = vlaneseq
        %v2617 = vshrl.u32 %v2616, 7
        %v2618 = vsub.s32 0, %v2617
        %v2619 = vrot.slane %v2614, %v2618
        %vm2621 = vcmask 523264
        %v2623 = vsel %vm2621, %v2605, 0
        %2625 = vmatprep.subr.mxu0 0.0
        %2626 = vmatpush1.msra.mxu0 %v2606
        %2627 = vmatprep.subr.mxu0 0.0
        %2628 = vmatpush1.msra.mxu0 %v2607
        %2629 = vmatprep.subr.mxu0 0.0
        %2630 = vmatpush1.msra.mxu0 %v2608
        %2631 = vmatprep.subr.mxu0 0.0
        %2632 = vmatpush1.msra.mxu0 %v2609
        %2633 = vmatprep.subr.mxu0 0.0
        %2634 = vmatpush1.msra.mxu0 %v2610
        %2635 = vmatprep.subr.mxu0 0.0
        %2636 = vmatpush1.msra.mxu0 %v2611
        %2637 = vmatprep.subr.mxu0 0.0
        %2638 = vmatpush1.msra.mxu0 %v2612
        %2639 = vmatprep.subr.mxu0 0.0
        %2640 = vmatpush1.msra.mxu0 %v2613
        %2641 = vmatprep.subr.mxu0 0.0
        %2642 = vmatpush1.msra.mxu0 0.0
        %2643 = vmatprep.subr.mxu0 0.0
        %2644 = vmatpush1.msra.mxu0 0.0
        %2645 = vmatprep.subr.mxu0 0.0
        %2646 = vmatpush1.msra.mxu0 0.0
        %2647 = vmatprep.subr.mxu0 0.0
        %2648 = vmatpush1.msra.mxu0 0.0
        %2649 = vmatprep.subr.mxu0 0.0
        %2650 = vmatpush1.msra.mxu0 0.0
        %2651 = vmatprep.subr.mxu0 0.0
        %2652 = vmatpush1.msra.mxu0 0.0
        %2653 = vmatprep.subr.mxu0 0.0
        %2654 = vmatpush1.msra.mxu0 0.0
        %2655 = vmatprep.subr.mxu0 0.0
        %2656 = vmatpush1.msra.mxu0 0.0
        %2657 = vmatprep.subr.mxu0 0.0
        %2658 = vmatpush1.msra.mxu0 0.0
        %2659 = vmatprep.subr.mxu0 0.0
        %2660 = vmatpush1.msra.mxu0 0.0
        %2661 = vmatprep.subr.mxu0 0.0
        %2662 = vmatpush1.msra.mxu0 0.0
        %2663 = vmatprep.subr.mxu0 0.0
        %2664 = vmatpush1.msra.mxu0 0.0
        %2665 = vmatprep.subr.mxu0 0.0
        %2666 = vmatpush1.msra.mxu0 0.0
        %2667 = vmatprep.subr.mxu0 0.0
        %2668 = vmatpush1.msra.mxu0 0.0
        %2669 = vmatprep.subr.mxu0 0.0
        %2670 = vmatpush1.msra.mxu0 0.0
        %2671 = vmatprep.subr.mxu0 0.0
        %2672 = vmatpush1.msra.mxu0 0.0
        %2673 = vmatprep.subr.mxu0 0.0
        %2674 = vmatpush1.msra.mxu0 0.0
        %2675 = vmatprep.subr.mxu0 0.0
        %2676 = vmatpush1.msra.mxu0 0.0
        %2677 = vmatprep.subr.mxu0 0.0
        %2678 = vmatpush1.msra.mxu0 0.0
        %2679 = vmatprep.subr.mxu0 0.0
        %2680 = vmatpush1.msra.mxu0 0.0
        %2681 = vmatprep.subr.mxu0 0.0
        %2682 = vmatpush1.msra.mxu0 0.0
        %2683 = vmatprep.subr.mxu0 0.0
        %2684 = vmatpush1.msra.mxu0 0.0
        %2685 = vmatprep.subr.mxu0 0.0
        %2686 = vmatpush1.msra.mxu0 0.0
        %2687 = vmatprep.subr.mxu0 0.0
        %2688 = vmatpush1.msra.mxu0 0.0
        %2689 = vmatprep.mubr.f32.mxu0 0.0
        %2690 = vmatmul.mubr.f32.gmra.mrb[0].mxu0 %v2623
        %v2691 = vpop.f32.mrb[0].mxu0
        %v2692 = vadd.f32 %v2619, %v2691
        %v2693 = vpop.f32.mrb[0].mxu0
        %2694 = vdwg.mxu0
        %vm2695 = vcmask 31744
        %2696 = vst.msk [vmem:[%s10] sm:$0xff] %vm2695, %v2692
      $region72: #{tpu_custom_call.1} parent=59 // pred_fallthru
        _
      // Predicated region
      $region73: #{tpu_custom_call.1} parent=59 // pred_check
        %p2697 = pneg %p264
      $region74: #{tpu_custom_call.1} parent=59 // pred_check_branch
        %2699 = sbr.rel (%p2697) target = $region76
      $region75: #{tpu_custom_call.1} parent=59 // pred_region
        _
      $region76: #{tpu_custom_call.1} parent=59 // pred_fallthru
        _
      // Predicated region
      $region77: #{tpu_custom_call.1} parent=59 // pred_check
        %p2700 = pneg %p264
      $region78: #{tpu_custom_call.1} parent=59 // pred_check_branch
        %2702 = sbr.rel (%p2700) target = $region80
      $region79: #{tpu_custom_call.1} parent=59 // pred_region
        _
      $region80: #{tpu_custom_call.1} parent=59 // pred_fallthru
        _
    $region60: #{tpu_custom_call.1} parent=5 // pred_fallthru
      _
    %p2703 = scmp.le.s32.totalorder 2, %s16
    // Predicated region
    $region81: #{tpu_custom_call.1} parent=5 // pred_check
      %p2704 = pneg %p2703
    $region82: #{tpu_custom_call.1} parent=5 // pred_check_branch
      %2706 = sbr.rel (%p2704) target = $region84
    $region83: #{tpu_custom_call.1} parent=5 // pred_region
      %s2707 = ssub.s32 %s16, 2
    $region84: #{tpu_custom_call.1} parent=5 // pred_fallthru
      _
  $region6: #{tpu_custom_call.1} parent=0 // loop_footer
    %s20 = sadd.s32 1, %s16
  $region7: #{tpu_custom_call.1} parent=0 // loop_footer_branch
    %15 = sbr.rel target = $region3
  $region8: #{tpu_custom_call.1} parent=0 // loop_exit
    _

</llo_original>
